<compile_context>
chip_gen: v7x
topology: tpu7x:2x2x1
jax: 0.10.0
libtpu: 0.0.40
codegen_flags: <defaults>
</compile_context>

<pallas_src>
import functools
import math
import numpy as np
import jax
import jax.numpy as jnp
from jax.experimental import pallas as pl
from jax.experimental.pallas import tpu as pltpu

# ---- model hyper-parameters (small, consistent with the module) ----
D_MODEL = 32            # d_model
NHEAD = 4               # nhead
HEAD_DIM = D_MODEL // NHEAD
DIM_FF = 64             # dim_feedforward (shrunk from 2048 for the demo)
EPS = 1e-5              # nn.LayerNorm default eps

# weight slab: (7, W_ROWS, W_LANES) f32, each panel zero-padded, indexed on the leading dim
W_SA_IN, W_SA_OUT, W_CA_Q, W_CA_KV, W_CA_OUT, W_L1, W_L2 = range(7)
W_ROWS = max(2 * D_MODEL, DIM_FF)     # 64
W_LANES = 128

# bias / LayerNorm slab rows (each zero-padded to 128 lanes)
(V_SA_IN_B, V_SA_OUT_B, V_CA_Q_B, V_CA_KV_B, V_CA_OUT_B, V_L1_B, V_L2_B,
 V_N1G, V_N1B, V_N2G, V_N2B, V_N3G, V_N3B) = range(13)
V_ROWS = 16


# ---------------- in-kernel math ----------------
def _layer_norm(x, gamma, beta):
    mu = jnp.mean(x, axis=-1, keepdims=True)
    xc = x - mu
    var = jnp.mean(xc * xc, axis=-1, keepdims=True)
    return xc * jax.lax.rsqrt(var + EPS) * gamma + beta


def _split_heads(x, batch):
    """(batch*seq, E) -> (NHEAD*batch, seq, D); group index g = h*batch + b."""
    n = x.shape[0]
    seq = n // batch
    x3 = pltpu.einshape("nhd->hnd", x.reshape(n, NHEAD, HEAD_DIM))   # (H, batch*seq, D)
    return x3.reshape(NHEAD * batch, seq, HEAD_DIM)


def _merge_heads(x, batch):
    """(NHEAD*batch, seq, D) -> (batch*seq, E)."""
    _, seq, d = x.shape
    n = batch * seq
    x3 = pltpu.einshape("hnd->nhd", x.reshape(NHEAD, n, d))          # (batch*seq, H, D)
    return x3.reshape(n, NHEAD * d)


def _attention(q, k, v, w_out, b_out, batch):
    """Head- and batch-batched attention on batch-major tokens (no cross-batch mask needed).
    q: (batch*Lq, E) with 1/sqrt(D) already folded into the Q projection.
    k, v: (batch*Lk, E). w_out: (E, E) pre-transposed out-projection; b_out: (1, E)."""
    q3 = _split_heads(q, batch)                                      # (B*H, Lq, D)
    k3 = _split_heads(k, batch)
    v3 = _split_heads(v, batch)
    s = jnp.einsum("gnd,gmd->gnm", q3, k3, preferred_element_type=jnp.float32)
    s = s - jnp.max(s, axis=-1, keepdims=True)
    p = jnp.exp(s)
    p = p * pl.reciprocal(jnp.sum(p, axis=-1, keepdims=True), approx=False)
    o3 = jnp.einsum("gnm,gmd->gnd", p, v3, preferred_element_type=jnp.float32)
    o = _merge_heads(o3, batch)                                      # (batch*Lq, E)
    return jnp.dot(o, w_out, preferred_element_type=jnp.float32) + b_out


# ---------------- Pallas kernel: whole decoder layer, whole batch, one program ----------------
def decoder_layer_kernel(act_ref, w_ref, vec_ref, out_ref, *, n_tgt, batch):
    E, F = D_MODEL, DIM_FF
    N = n_tgt
    act = act_ref[...].astype(jnp.float32)         # (2N+M, E): [tgt ; query ; memory]
    tgt = act[0:N]
    qry = act[N:2 * N]
    mem = act[2 * N:]

    vec = vec_ref[...]
    b_sa_in = vec[V_SA_IN_B:V_SA_IN_B + 1, 0:3 * E]
    b_sa_o = vec[V_SA_OUT_B:V_SA_OUT_B + 1, 0:E]
    b_ca_q = vec[V_CA_Q_B:V_CA_Q_B + 1, 0:E]
    b_ca_kv = vec[V_CA_KV_B:V_CA_KV_B + 1, 0:2 * E]
    b_ca_o = vec[V_CA_OUT_B:V_CA_OUT_B + 1, 0:E]
    b_l1 = vec[V_L1_B:V_L1_B + 1, 0:F]
    b_l2 = vec[V_L2_B:V_L2_B + 1, 0:E]
    n1g = vec[V_N1G:V_N1G + 1, 0:E]
    n1b = vec[V_N1B:V_N1B + 1, 0:E]
    n2g = vec[V_N2G:V_N2G + 1, 0:E]
    n2b = vec[V_N2B:V_N2B + 1, 0:E]
    n3g = vec[V_N3G:V_N3G + 1, 0:E]
    n3b = vec[V_N3B:V_N3B + 1, 0:E]

    # ---- self-attention: q = k = tgt + query, value = tgt ----
    # single block-diagonal in-projection: [tgt+qry | tgt] (N,2E) @ (2E,3E) -> Q|K|V
    x_in = jnp.concatenate([tgt + qry, tgt], axis=-1)
    qkv = jnp.dot(x_in, w_ref[W_SA_IN][0:2 * E, 0:3 * E],
                  preferred_element_type=jnp.float32) + b_sa_in
    sa = _attention(qkv[:, 0:E], qkv[:, E:2 * E], qkv[:, 2 * E:3 * E],
                    w_ref[W_SA_OUT][0:E, 0:E], b_sa_o, batch)
    t = _layer_norm(tgt + sa, n1g, n1b)

    # ---- cross-attention: query = t, key = value = memory (pos=None) ----
    qc = jnp.dot(t, w_ref[W_CA_Q][0:E, 0:E],
                 preferred_element_type=jnp.float32) + b_ca_q
    kv = jnp.dot(mem, w_ref[W_CA_KV][0:E, 0:2 * E],
                 preferred_element_type=jnp.float32) + b_ca_kv          # fused K|V
    ca = _attention(qc, kv[:, 0:E], kv[:, E:2 * E],
                    w_ref[W_CA_OUT][0:E, 0:E], b_ca_o, batch)
    t = _layer_norm(t + ca, n2g, n2b)

    # ---- feed-forward: linear2(relu(linear1(x))) ----
    h = jnp.maximum(jnp.dot(t, w_ref[W_L1][0:E, 0:F],
                            preferred_element_type=jnp.float32) + b_l1, 0.0)
    ff = jnp.dot(h, w_ref[W_L2][0:F, 0:E],
                 preferred_element_type=jnp.float32) + b_l2
    t = _layer_norm(t + ff, n3g, n3b)

    out_ref[...] = t.astype(out_ref.dtype)


# ---------------- one-time, host-side (numpy) weight packing ----------------
def pack_params(params):
    p = [np.asarray(x, np.float32) for x in params]
    (sa_w, sa_b, sa_ow, sa_ob, ca_w, ca_b, ca_ow, ca_ob,
     l1_w, l1_b, l2_w, l2_b, n1_g, n1_b, n2_g, n2_b, n3_g, n3_b) = p
    E, F = D_MODEL, DIM_FF
    scale = 1.0 / math.sqrt(HEAD_DIM)

    wslab = np.zeros((7, W_ROWS, W_LANES), np.float32)
    # self-attn block-diagonal fused in-projection: [x_qk | tgt] @ W -> Q|K|V (scale folded in Q)
    wslab[W_SA_IN, 0:E, 0:E] = scale * sa_w[0:E].T
    wslab[W_SA_IN, 0:E, E:2 * E] = sa_w[E:2 * E].T
    wslab[W_SA_IN, E:2 * E, 2 * E:3 * E] = sa_w[2 * E:3 * E].T
    wslab[W_SA_OUT, 0:E, 0:E] = sa_ow.T
    wslab[W_CA_Q, 0:E, 0:E] = scale * ca_w[0:E].T           # scale folded in Q
    wslab[W_CA_KV, 0:E, 0:2 * E] = ca_w[E:3 * E].T          # fused K|V
    wslab[W_CA_OUT, 0:E, 0:E] = ca_ow.T
    wslab[W_L1, 0:E, 0:F] = l1_w.T
    wslab[W_L2, 0:F, 0:E] = l2_w.T

    vec = np.zeros((V_ROWS, W_LANES), np.float32)
    vec[V_SA_IN_B, 0:E] = scale * sa_b[0:E]
    vec[V_SA_IN_B, E:3 * E] = sa_b[E:3 * E]
    vec[V_SA_OUT_B, 0:E] = sa_ob
    vec[V_CA_Q_B, 0:E] = scale * ca_b[0:E]
    vec[V_CA_KV_B, 0:2 * E] = ca_b[E:3 * E]
    vec[V_CA_OUT_B, 0:E] = ca_ob
    vec[V_L1_B, 0:F] = l1_b
    vec[V_L2_B, 0:E] = l2_b
    vec[V_N1G, 0:E] = n1_g
    vec[V_N1B, 0:E] = n1_b
    vec[V_N2G, 0:E] = n2_g
    vec[V_N2B, 0:E] = n2_b
    vec[V_N3G, 0:E] = n3_g
    vec[V_N3B, 0:E] = n3_b
    return jnp.asarray(wslab), jnp.asarray(vec)


# ---------------- wrapper (jitted per-call path: only tiny reshapes + the kernel) ----------------
def transformer_decoder_layer(tgt, memory, query, wslab, vec):
    """tgt, query: (L, B, E); memory: (S, B, E)  (PyTorch nn.MultiheadAttention layout)."""
    L, B, E = tgt.shape
    S = memory.shape[0]
    N, M = B * L, B * S

    # batch-major flatten (removes any need for cross-batch attention masks)
    tgt_f = jnp.transpose(tgt, (1, 0, 2)).reshape(N, E)
    qry_f = jnp.transpose(query, (1, 0, 2)).reshape(N, E)
    mem_f = jnp.transpose(memory, (1, 0, 2)).reshape(M, E)
    act = jnp.concatenate([tgt_f, qry_f, mem_f], axis=0)    # one activation slab -> one DMA

    out_flat = pl.pallas_call(
        functools.partial(decoder_layer_kernel, n_tgt=N, batch=B),
        out_shape=jax.ShapeDtypeStruct((N, E), tgt.dtype),
    )(act, wslab, vec)

    return jnp.transpose(out_flat.reshape(B, L, E), (1, 0, 2))


# ---------------- pure-JAX reference (exact nn.MultiheadAttention / LayerNorm math) ----------------
def _mha_ref(q_in, k_in, v_in, w_in, b_in, w_out, b_out):
    E = D_MODEL
    q = q_in @ w_in[0:E].T + b_in[0:E]
    k = k_in @ w_in[E:2 * E].T + b_in[E:2 * E]
    v = v_in @ w_in[2 * E:3 * E].T + b_in[2 * E:3 * E]
    scale = 1.0 / math.sqrt(HEAD_DIM)
    outs = []
    for h in range(NHEAD):
        sl = slice(h * HEAD_DIM, (h + 1) * HEAD_DIM)
        s = (q[:, sl] * scale) @ k[:, sl].T
        p = jax.nn.softmax(s, axis=-1)
        outs.append(p @ v[:, sl])
    o = jnp.concatenate(outs, axis=-1)
    return o @ w_out.T + b_out


def _ln_ref(x, g, b):
    mu = jnp.mean(x, axis=-1, keepdims=True)
    var = jnp.mean((x - mu) ** 2, axis=-1, keepdims=True)
    return (x - mu) / jnp.sqrt(var + EPS) * g + b


def _ref_single(tgt, mem, qry, params):
    (sa_w, sa_b, sa_ow, sa_ob, ca_w, ca_b, ca_ow, ca_ob,
     l1_w, l1_b, l2_w, l2_b, n1_g, n1_b, n2_g, n2_b, n3_g, n3_b) = params
    qk = tgt + qry
    t2 = _mha_ref(qk, qk, tgt, sa_w, sa_b, sa_ow, sa_ob)
    t = _ln_ref(tgt + t2, n1_g, n1_b)
    t2 = _mha_ref(t, mem, mem, ca_w, ca_b, ca_ow, ca_ob)
    t = _ln_ref(t + t2, n2_g, n2_b)
    h = jnp.maximum(t @ l1_w.T + l1_b, 0.0)
    t2 = h @ l2_w.T + l2_b
    return _ln_ref(t + t2, n3_g, n3_b)


def reference(tgt, memory, query, params):
    tgt_b = jnp.transpose(tgt, (1, 0, 2))
    mem_b = jnp.transpose(memory, (1, 0, 2))
    qry_b = jnp.transpose(query, (1, 0, 2))
    out_b = jax.vmap(_ref_single, in_axes=(0, 0, 0, None))(tgt_b, mem_b, qry_b, params)
    return jnp.transpose(out_b, (1, 0, 2))


# ---------------- parameter init (PyTorch layouts) ----------------
def init_params(key):
    keys = jax.random.split(key, 12)
    E, F = D_MODEL, DIM_FF
    f32 = jnp.float32
    sa_w = 0.05 * jax.random.normal(keys[0], (3 * E, E), f32)
    sa_b = 0.05 * jax.random.normal(keys[1], (3 * E,), f32)
    sa_ow = 0.05 * jax.random.normal(keys[2], (E, E), f32)
    sa_ob = 0.05 * jax.random.normal(keys[3], (E,), f32)
    ca_w = 0.05 * jax.random.normal(keys[4], (3 * E, E), f32)
    ca_b = 0.05 * jax.random.normal(keys[5], (3 * E,), f32)
    ca_ow = 0.05 * jax.random.normal(keys[6], (E, E), f32)
    ca_ob = 0.05 * jax.random.normal(keys[7], (E,), f32)
    l1_w = 0.05 * jax.random.normal(keys[8], (F, E), f32)
    l1_b = 0.05 * jax.random.normal(keys[9], (F,), f32)
    l2_w = 0.05 * jax.random.normal(keys[10], (E, F), f32)
    l2_b = 0.05 * jax.random.normal(keys[11], (E,), f32)
    n1_g = jnp.ones((E,), f32); n1_b = jnp.zeros((E,), f32)
    n2_g = jnp.ones((E,), f32); n2_b = jnp.zeros((E,), f32)
    n3_g = jnp.ones((E,), f32); n3_b = jnp.zeros((E,), f32)
    return (sa_w, sa_b, sa_ow, sa_ob, ca_w, ca_b, ca_ow, ca_ob,
            l1_w, l1_b, l2_w, l2_b, n1_g, n1_b, n2_g, n2_b, n3_g, n3_b)


if __name__ == "__main__":
    key = jax.random.PRNGKey(0)
    k_p, k_t, k_m, k_q = jax.random.split(key, 4)

    L, S, B, E = 8, 8, 2, D_MODEL
    params = init_params(k_p)
    wslab, vec = pack_params(params)        # one-time host-side packing (outside the hot path)

    tgt = jax.random.normal(k_t, (L, B, E), jnp.float32)      # target sequence
    memory = jax.random.normal(k_m, (S, B, E), jnp.float32)   # memory sequence
    query = jax.random.normal(k_q, (L, B, E), jnp.float32)    # query embedding (pos for self-attn)

    run = jax.jit(transformer_decoder_layer)
    out = jax.block_until_ready(run(tgt, memory, query, wslab, vec))

    ref = jax.block_until_ready(reference(tgt, memory, query, params))
    np.testing.assert_allclose(np.asarray(out), np.asarray(ref), rtol=5e-3, atol=5e-3)

    print("KERNEL_OK")
</pallas_src>

<mosaic_0001>
module attributes {stable_mosaic.version = 11 : i64} {
  func.func @decoder_layer_kernel(%arg0: memref<48x32xf32, #tpu.memory_space<vmem>>, %arg1: memref<7x64x128xf32, #tpu.memory_space<vmem>>, %arg2: memref<16x128xf32, #tpu.memory_space<vmem>>, %arg3: memref<16x32xf32, #tpu.memory_space<vmem>>) attributes {dimension_semantics = [], scalar_prefetch = 0 : i64, scratch_operands = 0 : i64, tpu.core_type = #tpu.core_type<tc>} {
    %c0 = arith.constant 0 : index
    %c0_0 = arith.constant 0 : index
    %0 = vector.load %arg0[%c0, %c0_0] : memref<48x32xf32, #tpu.memory_space<vmem>>, vector<48x32xf32>
    %1 = vector.extract_strided_slice %0 {offsets = [0, 0], sizes = [16, 32], strides = [1, 1]} : vector<48x32xf32> to vector<16x32xf32>
    %2 = vector.extract_strided_slice %0 {offsets = [16, 0], sizes = [16, 32], strides = [1, 1]} : vector<48x32xf32> to vector<16x32xf32>
    %3 = vector.extract_strided_slice %0 {offsets = [32, 0], sizes = [16, 32], strides = [1, 1]} : vector<48x32xf32> to vector<16x32xf32>
    %c0_1 = arith.constant 0 : index
    %c0_2 = arith.constant 0 : index
    %4 = vector.load %arg2[%c0_1, %c0_2] : memref<16x128xf32, #tpu.memory_space<vmem>>, vector<16x128xf32>
    %5 = vector.extract_strided_slice %4 {offsets = [0, 0], sizes = [1, 96], strides = [1, 1]} : vector<16x128xf32> to vector<1x96xf32>
    %6 = vector.extract_strided_slice %4 {offsets = [1, 0], sizes = [1, 32], strides = [1, 1]} : vector<16x128xf32> to vector<1x32xf32>
    %7 = vector.extract_strided_slice %4 {offsets = [2, 0], sizes = [1, 32], strides = [1, 1]} : vector<16x128xf32> to vector<1x32xf32>
    %8 = vector.extract_strided_slice %4 {offsets = [3, 0], sizes = [1, 64], strides = [1, 1]} : vector<16x128xf32> to vector<1x64xf32>
    %9 = vector.extract_strided_slice %4 {offsets = [4, 0], sizes = [1, 32], strides = [1, 1]} : vector<16x128xf32> to vector<1x32xf32>
    %10 = vector.extract_strided_slice %4 {offsets = [5, 0], sizes = [1, 64], strides = [1, 1]} : vector<16x128xf32> to vector<1x64xf32>
    %11 = vector.extract_strided_slice %4 {offsets = [6, 0], sizes = [1, 32], strides = [1, 1]} : vector<16x128xf32> to vector<1x32xf32>
    %12 = vector.extract_strided_slice %4 {offsets = [7, 0], sizes = [1, 32], strides = [1, 1]} : vector<16x128xf32> to vector<1x32xf32>
    %13 = vector.extract_strided_slice %4 {offsets = [8, 0], sizes = [1, 32], strides = [1, 1]} : vector<16x128xf32> to vector<1x32xf32>
    %14 = vector.extract_strided_slice %4 {offsets = [9, 0], sizes = [1, 32], strides = [1, 1]} : vector<16x128xf32> to vector<1x32xf32>
    %15 = vector.extract_strided_slice %4 {offsets = [10, 0], sizes = [1, 32], strides = [1, 1]} : vector<16x128xf32> to vector<1x32xf32>
    %16 = vector.extract_strided_slice %4 {offsets = [11, 0], sizes = [1, 32], strides = [1, 1]} : vector<16x128xf32> to vector<1x32xf32>
    %17 = vector.extract_strided_slice %4 {offsets = [12, 0], sizes = [1, 32], strides = [1, 1]} : vector<16x128xf32> to vector<1x32xf32>
    %18 = arith.addf %1, %2 : vector<16x32xf32>
    %19 = tpu.concatenate %18, %1 in 1 : vector<16x32xf32>, vector<16x32xf32> -> vector<16x64xf32>
    %c0_3 = arith.constant 0 : index
    %c0_4 = arith.constant 0 : index
    %c0_5 = arith.constant 0 : index
    %20 = vector.load %arg1[%c0_3, %c0_4, %c0_5] : memref<7x64x128xf32, #tpu.memory_space<vmem>>, vector<1x64x128xf32>
    %21 = vector.shape_cast %20 : vector<1x64x128xf32> to vector<64x128xf32>
    %22 = vector.extract_strided_slice %21 {offsets = [0, 0], sizes = [64, 96], strides = [1, 1]} : vector<64x128xf32> to vector<64x96xf32>
    %cst = arith.constant dense<0.000000e+00> : vector<16x96xf32>
    %23 = tpu.matmul %19, %22, %cst {dimension_numbers = #tpu.dot_dimension_numbers<[1], [0], [0], [1], [0, 0, 1, 1], [], []>} : vector<16x64xf32>, vector<64x96xf32>, vector<16x96xf32> -> vector<16x96xf32>
    %24 = vector.broadcast %5 : vector<1x96xf32> to vector<16x96xf32>
    %25 = arith.addf %23, %24 : vector<16x96xf32>
    %26 = vector.extract_strided_slice %25 {offsets = [0, 0], sizes = [16, 32], strides = [1, 1]} : vector<16x96xf32> to vector<16x32xf32>
    %27 = vector.extract_strided_slice %25 {offsets = [0, 32], sizes = [16, 32], strides = [1, 1]} : vector<16x96xf32> to vector<16x32xf32>
    %28 = vector.extract_strided_slice %25 {offsets = [0, 64], sizes = [16, 32], strides = [1, 1]} : vector<16x96xf32> to vector<16x32xf32>
    %c1 = arith.constant 1 : index
    %c0_6 = arith.constant 0 : index
    %c0_7 = arith.constant 0 : index
    %29 = vector.load %arg1[%c1, %c0_6, %c0_7] : memref<7x64x128xf32, #tpu.memory_space<vmem>>, vector<1x64x128xf32>
    %30 = vector.shape_cast %29 : vector<1x64x128xf32> to vector<64x128xf32>
    %31 = vector.extract_strided_slice %30 {offsets = [0, 0], sizes = [32, 32], strides = [1, 1]} : vector<64x128xf32> to vector<32x32xf32>
    %32 = vector.shape_cast %26 : vector<16x32xf32> to vector<16x4x8xf32>
    %33 = tpu.transpose %32, [1, 0, 2] : vector<16x4x8xf32> -> vector<4x16x8xf32>
    %34 = vector.shape_cast %33 : vector<4x16x8xf32> to vector<8x8x8xf32>
    %35 = vector.shape_cast %27 : vector<16x32xf32> to vector<16x4x8xf32>
    %36 = tpu.transpose %35, [1, 0, 2] : vector<16x4x8xf32> -> vector<4x16x8xf32>
    %37 = vector.shape_cast %36 : vector<4x16x8xf32> to vector<8x8x8xf32>
    %38 = vector.shape_cast %28 : vector<16x32xf32> to vector<16x4x8xf32>
    %39 = tpu.transpose %38, [1, 0, 2] : vector<16x4x8xf32> -> vector<4x16x8xf32>
    %40 = vector.shape_cast %39 : vector<4x16x8xf32> to vector<8x8x8xf32>
    "tpu.trace_start"() <{level = 10 : i32, message = "gnd,gmd->gnm"}> : () -> ()
    %cst_8 = arith.constant dense<0.000000e+00> : vector<8x8x8xf32>
    %41 = tpu.matmul %34, %37, %cst_8 {dimension_numbers = #tpu.dot_dimension_numbers<[2], [2], [1], [1], [0, 0, 0, 1, 1, 1], [0], [0]>} : vector<8x8x8xf32>, vector<8x8x8xf32>, vector<8x8x8xf32> -> vector<8x8x8xf32>
    "tpu.trace_stop"() : () -> ()
    %cst_9 = arith.constant dense<0xFF800000> : vector<8x8xf32>
    %42 = vector.multi_reduction <maximumf>, %41, %cst_9 [2] : vector<8x8x8xf32> to vector<8x8xf32>
    %43 = vector.shape_cast %42 : vector<8x8xf32> to vector<8x8x1xf32>
    %44 = vector.broadcast %43 : vector<8x8x1xf32> to vector<8x8x8xf32>
    %45 = arith.subf %41, %44 : vector<8x8x8xf32>
    %46 = math.exp %45 : vector<8x8x8xf32>
    %cst_10 = arith.constant dense<0.000000e+00> : vector<8x8xf32>
    %47 = vector.multi_reduction <add>, %46, %cst_10 [2] : vector<8x8x8xf32> to vector<8x8xf32>
    %48 = vector.shape_cast %47 : vector<8x8xf32> to vector<8x8x1xf32>
    %49 = tpu.reciprocal %48 : vector<8x8x1xf32> -> vector<8x8x1xf32>
    %50 = vector.broadcast %49 : vector<8x8x1xf32> to vector<8x8x8xf32>
    %51 = arith.mulf %46, %50 : vector<8x8x8xf32>
    "tpu.trace_start"() <{level = 10 : i32, message = "gnm,gmd->gnd"}> : () -> ()
    %cst_11 = arith.constant dense<0.000000e+00> : vector<8x8x8xf32>
    %52 = tpu.matmul %51, %40, %cst_11 {dimension_numbers = #tpu.dot_dimension_numbers<[2], [1], [1], [2], [0, 0, 0, 1, 1, 2], [0], [0]>} : vector<8x8x8xf32>, vector<8x8x8xf32>, vector<8x8x8xf32> -> vector<8x8x8xf32>
    "tpu.trace_stop"() : () -> ()
    %53 = vector.shape_cast %52 : vector<8x8x8xf32> to vector<4x16x8xf32>
    %54 = tpu.transpose %53, [1, 0, 2] : vector<4x16x8xf32> -> vector<16x4x8xf32>
    %55 = vector.shape_cast %54 : vector<16x4x8xf32> to vector<16x32xf32>
    %cst_12 = arith.constant dense<0.000000e+00> : vector<16x32xf32>
    %56 = tpu.matmul %55, %31, %cst_12 {dimension_numbers = #tpu.dot_dimension_numbers<[1], [0], [0], [1], [0, 0, 1, 1], [], []>} : vector<16x32xf32>, vector<32x32xf32>, vector<16x32xf32> -> vector<16x32xf32>
    %57 = vector.broadcast %6 : vector<1x32xf32> to vector<16x32xf32>
    %58 = arith.addf %56, %57 : vector<16x32xf32>
    %59 = arith.addf %1, %58 : vector<16x32xf32>
    %cst_13 = arith.constant dense<0.000000e+00> : vector<16xf32>
    %60 = vector.multi_reduction <add>, %59, %cst_13 [1] : vector<16x32xf32> to vector<16xf32>
    %61 = vector.shape_cast %60 : vector<16xf32> to vector<16x1xf32>
    %cst_14 = arith.constant 3.200000e+01 : f32
    %62 = vector.broadcast %cst_14 : f32 to vector<16x1xf32>
    %63 = arith.divf %61, %62 : vector<16x1xf32>
    %64 = vector.broadcast %63 : vector<16x1xf32> to vector<16x32xf32>
    %65 = arith.subf %59, %64 : vector<16x32xf32>
    %66 = arith.mulf %65, %65 : vector<16x32xf32>
    %cst_15 = arith.constant dense<0.000000e+00> : vector<16xf32>
    %67 = vector.multi_reduction <add>, %66, %cst_15 [1] : vector<16x32xf32> to vector<16xf32>
    %68 = vector.shape_cast %67 : vector<16xf32> to vector<16x1xf32>
    %cst_16 = arith.constant 3.200000e+01 : f32
    %69 = vector.broadcast %cst_16 : f32 to vector<16x1xf32>
    %70 = arith.divf %68, %69 : vector<16x1xf32>
    %cst_17 = arith.constant 9.99999974E-6 : f32
    %71 = vector.broadcast %cst_17 : f32 to vector<16x1xf32>
    %72 = arith.addf %70, %71 : vector<16x1xf32>
    %73 = math.rsqrt %72 : vector<16x1xf32>
    %74 = vector.broadcast %73 : vector<16x1xf32> to vector<16x32xf32>
    %75 = arith.mulf %65, %74 : vector<16x32xf32>
    %76 = vector.broadcast %12 : vector<1x32xf32> to vector<16x32xf32>
    %77 = arith.mulf %75, %76 : vector<16x32xf32>
    %78 = vector.broadcast %13 : vector<1x32xf32> to vector<16x32xf32>
    %79 = arith.addf %77, %78 : vector<16x32xf32>
    %c2 = arith.constant 2 : index
    %c0_18 = arith.constant 0 : index
    %c0_19 = arith.constant 0 : index
    %80 = vector.load %arg1[%c2, %c0_18, %c0_19] : memref<7x64x128xf32, #tpu.memory_space<vmem>>, vector<1x64x128xf32>
    %81 = vector.shape_cast %80 : vector<1x64x128xf32> to vector<64x128xf32>
    %82 = vector.extract_strided_slice %81 {offsets = [0, 0], sizes = [32, 32], strides = [1, 1]} : vector<64x128xf32> to vector<32x32xf32>
    %cst_20 = arith.constant dense<0.000000e+00> : vector<16x32xf32>
    %83 = tpu.matmul %79, %82, %cst_20 {dimension_numbers = #tpu.dot_dimension_numbers<[1], [0], [0], [1], [0, 0, 1, 1], [], []>} : vector<16x32xf32>, vector<32x32xf32>, vector<16x32xf32> -> vector<16x32xf32>
    %84 = vector.broadcast %7 : vector<1x32xf32> to vector<16x32xf32>
    %85 = arith.addf %83, %84 : vector<16x32xf32>
    %c3 = arith.constant 3 : index
    %c0_21 = arith.constant 0 : index
    %c0_22 = arith.constant 0 : index
    %86 = vector.load %arg1[%c3, %c0_21, %c0_22] : memref<7x64x128xf32, #tpu.memory_space<vmem>>, vector<1x64x128xf32>
    %87 = vector.shape_cast %86 : vector<1x64x128xf32> to vector<64x128xf32>
    %88 = vector.extract_strided_slice %87 {offsets = [0, 0], sizes = [32, 64], strides = [1, 1]} : vector<64x128xf32> to vector<32x64xf32>
    %cst_23 = arith.constant dense<0.000000e+00> : vector<16x64xf32>
    %89 = tpu.matmul %3, %88, %cst_23 {dimension_numbers = #tpu.dot_dimension_numbers<[1], [0], [0], [1], [0, 0, 1, 1], [], []>} : vector<16x32xf32>, vector<32x64xf32>, vector<16x64xf32> -> vector<16x64xf32>
    %90 = vector.broadcast %8 : vector<1x64xf32> to vector<16x64xf32>
    %91 = arith.addf %89, %90 : vector<16x64xf32>
    %92 = vector.extract_strided_slice %91 {offsets = [0, 0], sizes = [16, 32], strides = [1, 1]} : vector<16x64xf32> to vector<16x32xf32>
    %93 = vector.extract_strided_slice %91 {offsets = [0, 32], sizes = [16, 32], strides = [1, 1]} : vector<16x64xf32> to vector<16x32xf32>
    %c4 = arith.constant 4 : index
    %c0_24 = arith.constant 0 : index
    %c0_25 = arith.constant 0 : index
    %94 = vector.load %arg1[%c4, %c0_24, %c0_25] : memref<7x64x128xf32, #tpu.memory_space<vmem>>, vector<1x64x128xf32>
    %95 = vector.shape_cast %94 : vector<1x64x128xf32> to vector<64x128xf32>
    %96 = vector.extract_strided_slice %95 {offsets = [0, 0], sizes = [32, 32], strides = [1, 1]} : vector<64x128xf32> to vector<32x32xf32>
    %97 = vector.shape_cast %85 : vector<16x32xf32> to vector<16x4x8xf32>
    %98 = tpu.transpose %97, [1, 0, 2] : vector<16x4x8xf32> -> vector<4x16x8xf32>
    %99 = vector.shape_cast %98 : vector<4x16x8xf32> to vector<8x8x8xf32>
    %100 = vector.shape_cast %92 : vector<16x32xf32> to vector<16x4x8xf32>
    %101 = tpu.transpose %100, [1, 0, 2] : vector<16x4x8xf32> -> vector<4x16x8xf32>
    %102 = vector.shape_cast %101 : vector<4x16x8xf32> to vector<8x8x8xf32>
    %103 = vector.shape_cast %93 : vector<16x32xf32> to vector<16x4x8xf32>
    %104 = tpu.transpose %103, [1, 0, 2] : vector<16x4x8xf32> -> vector<4x16x8xf32>
    %105 = vector.shape_cast %104 : vector<4x16x8xf32> to vector<8x8x8xf32>
    "tpu.trace_start"() <{level = 10 : i32, message = "gnd,gmd->gnm"}> : () -> ()
    %cst_26 = arith.constant dense<0.000000e+00> : vector<8x8x8xf32>
    %106 = tpu.matmul %99, %102, %cst_26 {dimension_numbers = #tpu.dot_dimension_numbers<[2], [2], [1], [1], [0, 0, 0, 1, 1, 1], [0], [0]>} : vector<8x8x8xf32>, vector<8x8x8xf32>, vector<8x8x8xf32> -> vector<8x8x8xf32>
    "tpu.trace_stop"() : () -> ()
    %cst_27 = arith.constant dense<0xFF800000> : vector<8x8xf32>
    %107 = vector.multi_reduction <maximumf>, %106, %cst_27 [2] : vector<8x8x8xf32> to vector<8x8xf32>
    %108 = vector.shape_cast %107 : vector<8x8xf32> to vector<8x8x1xf32>
    %109 = vector.broadcast %108 : vector<8x8x1xf32> to vector<8x8x8xf32>
    %110 = arith.subf %106, %109 : vector<8x8x8xf32>
    %111 = math.exp %110 : vector<8x8x8xf32>
    %cst_28 = arith.constant dense<0.000000e+00> : vector<8x8xf32>
    %112 = vector.multi_reduction <add>, %111, %cst_28 [2] : vector<8x8x8xf32> to vector<8x8xf32>
    %113 = vector.shape_cast %112 : vector<8x8xf32> to vector<8x8x1xf32>
    %114 = tpu.reciprocal %113 : vector<8x8x1xf32> -> vector<8x8x1xf32>
    %115 = vector.broadcast %114 : vector<8x8x1xf32> to vector<8x8x8xf32>
    %116 = arith.mulf %111, %115 : vector<8x8x8xf32>
    "tpu.trace_start"() <{level = 10 : i32, message = "gnm,gmd->gnd"}> : () -> ()
    %cst_29 = arith.constant dense<0.000000e+00> : vector<8x8x8xf32>
    %117 = tpu.matmul %116, %105, %cst_29 {dimension_numbers = #tpu.dot_dimension_numbers<[2], [1], [1], [2], [0, 0, 0, 1, 1, 2], [0], [0]>} : vector<8x8x8xf32>, vector<8x8x8xf32>, vector<8x8x8xf32> -> vector<8x8x8xf32>
    "tpu.trace_stop"() : () -> ()
    %118 = vector.shape_cast %117 : vector<8x8x8xf32> to vector<4x16x8xf32>
    %119 = tpu.transpose %118, [1, 0, 2] : vector<4x16x8xf32> -> vector<16x4x8xf32>
    %120 = vector.shape_cast %119 : vector<16x4x8xf32> to vector<16x32xf32>
    %cst_30 = arith.constant dense<0.000000e+00> : vector<16x32xf32>
    %121 = tpu.matmul %120, %96, %cst_30 {dimension_numbers = #tpu.dot_dimension_numbers<[1], [0], [0], [1], [0, 0, 1, 1], [], []>} : vector<16x32xf32>, vector<32x32xf32>, vector<16x32xf32> -> vector<16x32xf32>
    %122 = vector.broadcast %9 : vector<1x32xf32> to vector<16x32xf32>
    %123 = arith.addf %121, %122 : vector<16x32xf32>
    %124 = arith.addf %79, %123 : vector<16x32xf32>
    %cst_31 = arith.constant dense<0.000000e+00> : vector<16xf32>
    %125 = vector.multi_reduction <add>, %124, %cst_31 [1] : vector<16x32xf32> to vector<16xf32>
    %126 = vector.shape_cast %125 : vector<16xf32> to vector<16x1xf32>
    %cst_32 = arith.constant 3.200000e+01 : f32
    %127 = vector.broadcast %cst_32 : f32 to vector<16x1xf32>
    %128 = arith.divf %126, %127 : vector<16x1xf32>
    %129 = vector.broadcast %128 : vector<16x1xf32> to vector<16x32xf32>
    %130 = arith.subf %124, %129 : vector<16x32xf32>
    %131 = arith.mulf %130, %130 : vector<16x32xf32>
    %cst_33 = arith.constant dense<0.000000e+00> : vector<16xf32>
    %132 = vector.multi_reduction <add>, %131, %cst_33 [1] : vector<16x32xf32> to vector<16xf32>
    %133 = vector.shape_cast %132 : vector<16xf32> to vector<16x1xf32>
    %cst_34 = arith.constant 3.200000e+01 : f32
    %134 = vector.broadcast %cst_34 : f32 to vector<16x1xf32>
    %135 = arith.divf %133, %134 : vector<16x1xf32>
    %cst_35 = arith.constant 9.99999974E-6 : f32
    %136 = vector.broadcast %cst_35 : f32 to vector<16x1xf32>
    %137 = arith.addf %135, %136 : vector<16x1xf32>
    %138 = math.rsqrt %137 : vector<16x1xf32>
    %139 = vector.broadcast %138 : vector<16x1xf32> to vector<16x32xf32>
    %140 = arith.mulf %130, %139 : vector<16x32xf32>
    %141 = vector.broadcast %14 : vector<1x32xf32> to vector<16x32xf32>
    %142 = arith.mulf %140, %141 : vector<16x32xf32>
    %143 = vector.broadcast %15 : vector<1x32xf32> to vector<16x32xf32>
    %144 = arith.addf %142, %143 : vector<16x32xf32>
    %c5 = arith.constant 5 : index
    %c0_36 = arith.constant 0 : index
    %c0_37 = arith.constant 0 : index
    %145 = vector.load %arg1[%c5, %c0_36, %c0_37] : memref<7x64x128xf32, #tpu.memory_space<vmem>>, vector<1x64x128xf32>
    %146 = vector.shape_cast %145 : vector<1x64x128xf32> to vector<64x128xf32>
    %147 = vector.extract_strided_slice %146 {offsets = [0, 0], sizes = [32, 64], strides = [1, 1]} : vector<64x128xf32> to vector<32x64xf32>
    %cst_38 = arith.constant dense<0.000000e+00> : vector<16x64xf32>
    %148 = tpu.matmul %144, %147, %cst_38 {dimension_numbers = #tpu.dot_dimension_numbers<[1], [0], [0], [1], [0, 0, 1, 1], [], []>} : vector<16x32xf32>, vector<32x64xf32>, vector<16x64xf32> -> vector<16x64xf32>
    %149 = vector.broadcast %10 : vector<1x64xf32> to vector<16x64xf32>
    %150 = arith.addf %148, %149 : vector<16x64xf32>
    %cst_39 = arith.constant 0.000000e+00 : f32
    %151 = vector.broadcast %cst_39 : f32 to vector<16x64xf32>
    %152 = arith.maximumf %150, %151 : vector<16x64xf32>
    %c6 = arith.constant 6 : index
    %c0_40 = arith.constant 0 : index
    %c0_41 = arith.constant 0 : index
    %153 = vector.load %arg1[%c6, %c0_40, %c0_41] : memref<7x64x128xf32, #tpu.memory_space<vmem>>, vector<1x64x128xf32>
    %154 = vector.shape_cast %153 : vector<1x64x128xf32> to vector<64x128xf32>
    %155 = vector.extract_strided_slice %154 {offsets = [0, 0], sizes = [64, 32], strides = [1, 1]} : vector<64x128xf32> to vector<64x32xf32>
    %cst_42 = arith.constant dense<0.000000e+00> : vector<16x32xf32>
    %156 = tpu.matmul %152, %155, %cst_42 {dimension_numbers = #tpu.dot_dimension_numbers<[1], [0], [0], [1], [0, 0, 1, 1], [], []>} : vector<16x64xf32>, vector<64x32xf32>, vector<16x32xf32> -> vector<16x32xf32>
    %157 = vector.broadcast %11 : vector<1x32xf32> to vector<16x32xf32>
    %158 = arith.addf %156, %157 : vector<16x32xf32>
    %159 = arith.addf %144, %158 : vector<16x32xf32>
    %cst_43 = arith.constant dense<0.000000e+00> : vector<16xf32>
    %160 = vector.multi_reduction <add>, %159, %cst_43 [1] : vector<16x32xf32> to vector<16xf32>
    %161 = vector.shape_cast %160 : vector<16xf32> to vector<16x1xf32>
    %cst_44 = arith.constant 3.200000e+01 : f32
    %162 = vector.broadcast %cst_44 : f32 to vector<16x1xf32>
    %163 = arith.divf %161, %162 : vector<16x1xf32>
    %164 = vector.broadcast %163 : vector<16x1xf32> to vector<16x32xf32>
    %165 = arith.subf %159, %164 : vector<16x32xf32>
    %166 = arith.mulf %165, %165 : vector<16x32xf32>
    %cst_45 = arith.constant dense<0.000000e+00> : vector<16xf32>
    %167 = vector.multi_reduction <add>, %166, %cst_45 [1] : vector<16x32xf32> to vector<16xf32>
    %168 = vector.shape_cast %167 : vector<16xf32> to vector<16x1xf32>
    %cst_46 = arith.constant 3.200000e+01 : f32
    %169 = vector.broadcast %cst_46 : f32 to vector<16x1xf32>
    %170 = arith.divf %168, %169 : vector<16x1xf32>
    %cst_47 = arith.constant 9.99999974E-6 : f32
    %171 = vector.broadcast %cst_47 : f32 to vector<16x1xf32>
    %172 = arith.addf %170, %171 : vector<16x1xf32>
    %173 = math.rsqrt %172 : vector<16x1xf32>
    %174 = vector.broadcast %173 : vector<16x1xf32> to vector<16x32xf32>
    %175 = arith.mulf %165, %174 : vector<16x32xf32>
    %176 = vector.broadcast %16 : vector<1x32xf32> to vector<16x32xf32>
    %177 = arith.mulf %175, %176 : vector<16x32xf32>
    %178 = vector.broadcast %17 : vector<1x32xf32> to vector<16x32xf32>
    %179 = arith.addf %177, %178 : vector<16x32xf32>
    %c0_48 = arith.constant 0 : index
    %c0_49 = arith.constant 0 : index
    %180 = vector.load %arg3[%c0_48, %c0_49] : memref<16x32xf32, #tpu.memory_space<vmem>>, vector<16x32xf32>
    tpu.vector_store %arg3[%c0_48, %c0_49], %179 {strides = array<i32>} : memref<16x32xf32, #tpu.memory_space<vmem>>, vector<16x32xf32>,
    return
  }
}

</mosaic_0001>

<llo_original>
// kernel: transformer_decoder_layer.1
$region0: #{transformer_decoder_layer.1}
  #allocation0 [shape = 'u32[]', space=smem, size = 0x4, offset = 0x4, fixed_abs, tag = 'smem constant byte address 0x4 - core index']
  #allocation1 [shape = 'u32[144,128]{1,0:T(1,128)}', space=vmem, size = 0x12000, scoped, tag = 'internal scratch']
  %s0 = inlined_call_operand.vmem [shape: f32[48,32], index: 0, kind: input, shape index: {}]
  %s1 = inlined_call_operand.hbm [shape: f32[7,64,128], index: 1, kind: input, shape index: {}]
  %s2 = inlined_call_operand.vmem [shape: f32[16,128], index: 2, kind: input, shape index: {}]
  %s3 = inlined_call_operand.vmem [shape: f32[16,32], index: 3, kind: output, shape index: {}]
  %s4 = sld [smem:[#allocation0]]
  $region26: #{transformer_decoder_layer.1} parent=0
    _
  %s6 = ssub.s32 1, %s4
  %s7 = scalar_select 0, %s6, %s4
  $region1: #{transformer_decoder_layer.1} parent=0
    #allocation2 [shape = 'u8[229376]{0}', space=vmem, size = 0x38000, scoped, tag = 'input window, operand 1, single buffered']
    #allocation3 [shape = 's32[1]{0}', space=sflag, size = 0x4, scoped, tag = 'scoped memory for transformer_decoder_layer.1']
    %8 = vsyncpa [#allocation3], 0
    // Predicated region
    $region2: #{transformer_decoder_layer.1} parent=1 // pred_check
      _
    $region3: #{transformer_decoder_layer.1} parent=1 // pred_check_branch
      %10 = sbr.rel (0) target = $region5
    $region4: #{transformer_decoder_layer.1} parent=1 // pred_region
      _
    $region5: #{transformer_decoder_layer.1} parent=1 // pred_fallthru
      _
    // Predicated region
    $region6: #{transformer_decoder_layer.1} parent=1 // pred_check
      _
    $region7: #{transformer_decoder_layer.1} parent=1 // pred_check_branch
      %12 = sbr.rel (0) target = $region9
    $region8: #{transformer_decoder_layer.1} parent=1 // pred_region
      %s14 = ssub.s32 7168, 7168
      %15 = vsyncadd [#allocation3], %s14
      %s16 = sshll.u32 [#allocation2], 4
      %s17 = int_to_ptr.vmem [resolvable:$true] %s16
      %22 = dma.hbm_to_vmem [thread:$0]  %s1, 7168, %s17, [#allocation3], 128, 128, 8
    $region9: #{transformer_decoder_layer.1} parent=1 // pred_fallthru
      _
    // Predicated region
    $region10: #{transformer_decoder_layer.1} parent=1 // pred_check
      _
    $region11: #{transformer_decoder_layer.1} parent=1 // pred_check_branch
      %24 = sbr.rel (0) target = $region13
    $region12: #{transformer_decoder_layer.1} parent=1 // pred_region
      _
    $region13: #{transformer_decoder_layer.1} parent=1 // pred_fallthru
      _
    // Predicated region
    $region14: #{transformer_decoder_layer.1} parent=1 // pred_check
      _
    $region15: #{transformer_decoder_layer.1} parent=1 // pred_check_branch
      %26 = sbr.rel (0) target = $region17
    $region16: #{transformer_decoder_layer.1} parent=1 // pred_region
      %27 = dma.done [#allocation3], 7168
    $region17: #{transformer_decoder_layer.1} parent=1 // pred_fallthru
      _
    %v28 = vld [vmem:[%s0] sm:$0xff]
    %v29 = vld [vmem:[%s0 + $0x8] sm:$0xff]
    %v30 = vld [vmem:[%s0 + $0x10] sm:$0xff]
    %v31 = vld [vmem:[%s0 + $0x18] sm:$0xff]
    %v32 = vld [vmem:[%s0 + $0x20] sm:$0xff]
    %v33 = vld [vmem:[%s0 + $0x28] sm:$0xff]
    %v34 = vld [vmem:[%s2] sm:$0xff]
    %v35 = vld [vmem:[%s2 + $0x8] sm:$0xff]
    %v36 = vadd.f32 %v28, %v30
    %v37 = vadd.f32 %v29, %v31
    %40 = vrot.lane.b32.xlu0 %v28, 32
    %v41 = vpop.permute.xlu0 %40
    %42 = vrot.lane.b32.xlu0 %v29, 32
    %v43 = vpop.permute.xlu0 %42
    %vm46 = vcmask 261120
    %v47 = vsel %vm46, %v36, %v41
    %v48 = vsel %vm46, %v37, %v43
    %v49 = vld [vmem:[#allocation2] sm:$0xff]
    %v50 = vld [vmem:[#allocation2 + $0x8] sm:$0xff]
    %v51 = vld [vmem:[#allocation2 + $0x10] sm:$0xff]
    %v52 = vld [vmem:[#allocation2 + $0x18] sm:$0xff]
    %v53 = vld [vmem:[#allocation2 + $0x20] sm:$0xff]
    %v54 = vld [vmem:[#allocation2 + $0x28] sm:$0xff]
    %v55 = vld [vmem:[#allocation2 + $0x30] sm:$0xff]
    %v56 = vld [vmem:[#allocation2 + $0x38] sm:$0xff]
    %v57 = vlaneseq
    %v58 = vshrl.u32 %v57, 7
    %v59 = vsub.s32 0, %v58
    %v60 = vrot.slane %v34, %v59
    %vm61 = vcmask 523264
    %v63 = vsel %vm61, %v47, 0
    %v66 = vsel %vm61, %v48, 0
    %68 = vmatprep.subr.mxu0 0.0
    %69 = vmatpush1.msra.mxu0 %v49
    %70 = vmatprep.subr.mxu0 0.0
    %71 = vmatpush1.msra.mxu0 %v50
    %72 = vmatprep.subr.mxu0 0.0
    %73 = vmatpush1.msra.mxu0 %v51
    %74 = vmatprep.subr.mxu0 0.0
    %75 = vmatpush1.msra.mxu0 %v52
    %76 = vmatprep.subr.mxu0 0.0
    %77 = vmatpush1.msra.mxu0 %v53
    %78 = vmatprep.subr.mxu0 0.0
    %79 = vmatpush1.msra.mxu0 %v54
    %80 = vmatprep.subr.mxu0 0.0
    %81 = vmatpush1.msra.mxu0 %v55
    %82 = vmatprep.subr.mxu0 0.0
    %83 = vmatpush1.msra.mxu0 %v56
    %84 = vmatprep.subr.mxu0 0.0
    %85 = vmatpush1.msra.mxu0 0.0
    %86 = vmatprep.subr.mxu0 0.0
    %87 = vmatpush1.msra.mxu0 0.0
    %88 = vmatprep.subr.mxu0 0.0
    %89 = vmatpush1.msra.mxu0 0.0
    %90 = vmatprep.subr.mxu0 0.0
    %91 = vmatpush1.msra.mxu0 0.0
    %92 = vmatprep.subr.mxu0 0.0
    %93 = vmatpush1.msra.mxu0 0.0
    %94 = vmatprep.subr.mxu0 0.0
    %95 = vmatpush1.msra.mxu0 0.0
    %96 = vmatprep.subr.mxu0 0.0
    %97 = vmatpush1.msra.mxu0 0.0
    %98 = vmatprep.subr.mxu0 0.0
    %99 = vmatpush1.msra.mxu0 0.0
    %100 = vmatprep.subr.mxu0 0.0
    %101 = vmatpush1.msra.mxu0 0.0
    %102 = vmatprep.subr.mxu0 0.0
    %103 = vmatpush1.msra.mxu0 0.0
    %104 = vmatprep.subr.mxu0 0.0
    %105 = vmatpush1.msra.mxu0 0.0
    %106 = vmatprep.subr.mxu0 0.0
    %107 = vmatpush1.msra.mxu0 0.0
    %108 = vmatprep.subr.mxu0 0.0
    %109 = vmatpush1.msra.mxu0 0.0
    %110 = vmatprep.subr.mxu0 0.0
    %111 = vmatpush1.msra.mxu0 0.0
    %112 = vmatprep.subr.mxu0 0.0
    %113 = vmatpush1.msra.mxu0 0.0
    %114 = vmatprep.subr.mxu0 0.0
    %115 = vmatpush1.msra.mxu0 0.0
    %116 = vmatprep.subr.mxu0 0.0
    %117 = vmatpush1.msra.mxu0 0.0
    %118 = vmatprep.subr.mxu0 0.0
    %119 = vmatpush1.msra.mxu0 0.0
    %120 = vmatprep.subr.mxu0 0.0
    %121 = vmatpush1.msra.mxu0 0.0
    %122 = vmatprep.subr.mxu0 0.0
    %123 = vmatpush1.msra.mxu0 0.0
    %124 = vmatprep.subr.mxu0 0.0
    %125 = vmatpush1.msra.mxu0 0.0
    %126 = vmatprep.subr.mxu0 0.0
    %127 = vmatpush1.msra.mxu0 0.0
    %128 = vmatprep.subr.mxu0 0.0
    %129 = vmatpush1.msra.mxu0 0.0
    %130 = vmatprep.subr.mxu0 0.0
    %131 = vmatpush1.msra.mxu0 0.0
    %132 = vmatprep.mubr.f32.mxu0 0.0
    %133 = vmatmul.mubr.f32.gmra.mrb[0].mxu0 %v63
    %v134 = vpop.f32.mrb[0].mxu0
    %v135 = vadd.f32 %v60, %v134
    %v136 = vpop.f32.mrb[0].mxu0
    %137 = vmatprep.mubr.f32.mxu0 0.0
    %138 = vmatmul.mubr.f32.gmra.mrb[0].mxu0 %v66
    %v139 = vpop.f32.mrb[0].mxu0
    %v140 = vadd.f32 %v60, %v139
    %v141 = vpop.f32.mrb[0].mxu0
    %142 = vdwg.mxu0
    %s143 = scalar_lea.vmem [#allocation2], 64
    %v144 = vld [vmem:[%s143] sm:$0xff]
    %v145 = vld [vmem:[%s143 + $0x8] sm:$0xff]
    %v146 = vld [vmem:[%s143 + $0x10] sm:$0xff]
    %v147 = vld [vmem:[%s143 + $0x18] sm:$0xff]
    %150 = vrot.lane.b32.xlu0 %v135, 120
    %v151 = vpop.permute.xlu0 %150
    %152 = vrot.lane.b32.xlu0 %v140, 120
    %v153 = vpop.permute.xlu0 %152
    %156 = vrot.lane.b32.xlu0 %v135, 112
    %v157 = vpop.permute.xlu0 %156
    %158 = vrot.lane.b32.xlu0 %v140, 112
    %v159 = vpop.permute.xlu0 %158
    %162 = vrot.lane.b32.xlu0 %v135, 104
    %v163 = vpop.permute.xlu0 %162
    %164 = vrot.lane.b32.xlu0 %v140, 104
    %v165 = vpop.permute.xlu0 %164
    %v168 = vcombine.low %v135, %v157
    %v169 = vcombine.high %v135, %v157
    %v171 = vunpack.c.l.s4 1983009808
    %v172 = vunpack.c.0.s8 %v171
    %v173 = vlaneseq
    %v174 = vshrl.u32 %v173, 7
    %v175 = vsub.s32 %v172, %v174
    %v176 = vrot.slane %v168, %v175
    %v178 = vunpack.c.l.s4 1983009808
    %v179 = vunpack.c.0.s8 %v178
    %v180 = vlaneseq
    %v181 = vshrl.u32 %v180, 7
    %v182 = vsub.s32 %v179, %v181
    %v183 = vrot.slane %v169, %v182
    %v184 = vcombine.low %v151, %v163
    %v185 = vcombine.high %v151, %v163
    %v187 = vunpack.c.l.s4 1983009808
    %v188 = vunpack.c.0.s8 %v187
    %v189 = vlaneseq
    %v190 = vshrl.u32 %v189, 7
    %v191 = vsub.s32 %v188, %v190
    %v192 = vrot.slane %v184, %v191
    %v194 = vunpack.c.l.s4 1983009808
    %v195 = vunpack.c.0.s8 %v194
    %v196 = vlaneseq
    %v197 = vshrl.u32 %v196, 7
    %v198 = vsub.s32 %v195, %v197
    %v199 = vrot.slane %v185, %v198
    %v200 = vcombine.low %v176, %v192
    %v201 = vcombine.high %v176, %v192
    %v203 = vunpack.c.l.s4 1934713408
    %v204 = vunpack.c.0.s8 %v203
    %v205 = vlaneseq
    %v206 = vshrl.u32 %v205, 7
    %v207 = vsub.s32 %v204, %v206
    %v208 = vrot.slane %v200, %v207
    %v210 = vunpack.c.l.s4 1934713408
    %v211 = vunpack.c.0.s8 %v210
    %v212 = vlaneseq
    %v213 = vshrl.u32 %v212, 7
    %v214 = vsub.s32 %v211, %v213
    %v215 = vrot.slane %v201, %v214
    %v216 = vcombine.low %v183, %v199
    %v217 = vcombine.high %v183, %v199
    %v219 = vunpack.c.l.s4 1934713408
    %v220 = vunpack.c.0.s8 %v219
    %v221 = vlaneseq
    %v222 = vshrl.u32 %v221, 7
    %v223 = vsub.s32 %v220, %v222
    %v224 = vrot.slane %v216, %v223
    %v226 = vunpack.c.l.s4 1934713408
    %v227 = vunpack.c.0.s8 %v226
    %v228 = vlaneseq
    %v229 = vshrl.u32 %v228, 7
    %v230 = vsub.s32 %v227, %v229
    %v231 = vrot.slane %v217, %v230
    %v232 = vcombine.high %v208, 0.0
    %v233 = vcombine.high %v215, 0.0
    %v234 = vcombine.high %v224, 0.0
    %v235 = vcombine.high %v231, 0.0
    %v236 = vcombine.low %v140, %v159
    %v237 = vcombine.high %v140, %v159
    %v239 = vunpack.c.l.s4 1983009808
    %v240 = vunpack.c.0.s8 %v239
    %v241 = vlaneseq
    %v242 = vshrl.u32 %v241, 7
    %v243 = vsub.s32 %v240, %v242
    %v244 = vrot.slane %v236, %v243
    %v246 = vunpack.c.l.s4 1983009808
    %v247 = vunpack.c.0.s8 %v246
    %v248 = vlaneseq
    %v249 = vshrl.u32 %v248, 7
    %v250 = vsub.s32 %v247, %v249
    %v251 = vrot.slane %v237, %v250
    %v252 = vcombine.low %v153, %v165
    %v253 = vcombine.high %v153, %v165
    %v255 = vunpack.c.l.s4 1983009808
    %v256 = vunpack.c.0.s8 %v255
    %v257 = vlaneseq
    %v258 = vshrl.u32 %v257, 7
    %v259 = vsub.s32 %v256, %v258
    %v260 = vrot.slane %v252, %v259
    %v262 = vunpack.c.l.s4 1983009808
    %v263 = vunpack.c.0.s8 %v262
    %v264 = vlaneseq
    %v265 = vshrl.u32 %v264, 7
    %v266 = vsub.s32 %v263, %v265
    %v267 = vrot.slane %v253, %v266
    %v268 = vcombine.low %v244, %v260
    %v269 = vcombine.high %v244, %v260
    %v271 = vunpack.c.l.s4 1934713408
    %v272 = vunpack.c.0.s8 %v271
    %v273 = vlaneseq
    %v274 = vshrl.u32 %v273, 7
    %v275 = vsub.s32 %v272, %v274
    %v276 = vrot.slane %v268, %v275
    %v278 = vunpack.c.l.s4 1934713408
    %v279 = vunpack.c.0.s8 %v278
    %v280 = vlaneseq
    %v281 = vshrl.u32 %v280, 7
    %v282 = vsub.s32 %v279, %v281
    %v283 = vrot.slane %v269, %v282
    %v284 = vcombine.low %v251, %v267
    %v285 = vcombine.high %v251, %v267
    %v287 = vunpack.c.l.s4 1934713408
    %v288 = vunpack.c.0.s8 %v287
    %v289 = vlaneseq
    %v290 = vshrl.u32 %v289, 7
    %v291 = vsub.s32 %v288, %v290
    %v292 = vrot.slane %v284, %v291
    %v294 = vunpack.c.l.s4 1934713408
    %v295 = vunpack.c.0.s8 %v294
    %v296 = vlaneseq
    %v297 = vshrl.u32 %v296, 7
    %v298 = vsub.s32 %v295, %v297
    %v299 = vrot.slane %v285, %v298
    %v300 = vcombine.high %v276, 0.0
    %v301 = vcombine.high %v283, 0.0
    %v302 = vcombine.high %v292, 0.0
    %v303 = vcombine.high %v299, 0.0
    %v304 = vcombine.low %v208, %v215
    %v306 = vunpack.c.l.s4 1983009808
    %v307 = vunpack.c.0.s8 %v306
    %v308 = vlaneseq
    %v309 = vshrl.u32 %v308, 7
    %v310 = vsub.s32 %v307, %v309
    %v311 = vrot.slane %v304, %v310
    %v312 = vcombine.low %v232, %v233
    %v314 = vunpack.c.l.s4 1983009808
    %v315 = vunpack.c.0.s8 %v314
    %v316 = vlaneseq
    %v317 = vshrl.u32 %v316, 7
    %v318 = vsub.s32 %v315, %v317
    %v319 = vrot.slane %v312, %v318
    %v320 = vcombine.low %v224, %v231
    %v322 = vunpack.c.l.s4 1983009808
    %v323 = vunpack.c.0.s8 %v322
    %v324 = vlaneseq
    %v325 = vshrl.u32 %v324, 7
    %v326 = vsub.s32 %v323, %v325
    %v327 = vrot.slane %v320, %v326
    %v328 = vcombine.low %v234, %v235
    %v330 = vunpack.c.l.s4 1983009808
    %v331 = vunpack.c.0.s8 %v330
    %v332 = vlaneseq
    %v333 = vshrl.u32 %v332, 7
    %v334 = vsub.s32 %v331, %v333
    %v335 = vrot.slane %v328, %v334
    %v336 = vcombine.low %v311, %v319
    %v337 = vcombine.high %v311, %v319
    %v339 = vunpack.c.l.s4 1934713408
    %v340 = vunpack.c.0.s8 %v339
    %v341 = vlaneseq
    %v342 = vshrl.u32 %v341, 7
    %v343 = vsub.s32 %v340, %v342
    %v344 = vrot.slane %v336, %v343
    %v346 = vunpack.c.l.s4 1934713408
    %v347 = vunpack.c.0.s8 %v346
    %v348 = vlaneseq
    %v349 = vshrl.u32 %v348, 7
    %v350 = vsub.s32 %v347, %v349
    %v351 = vrot.slane %v337, %v350
    %v352 = vcombine.low %v327, %v335
    %v353 = vcombine.high %v327, %v335
    %v355 = vunpack.c.l.s4 1934713408
    %v356 = vunpack.c.0.s8 %v355
    %v357 = vlaneseq
    %v358 = vshrl.u32 %v357, 7
    %v359 = vsub.s32 %v356, %v358
    %v360 = vrot.slane %v352, %v359
    %v362 = vunpack.c.l.s4 1934713408
    %v363 = vunpack.c.0.s8 %v362
    %v364 = vlaneseq
    %v365 = vshrl.u32 %v364, 7
    %v366 = vsub.s32 %v363, %v365
    %v367 = vrot.slane %v353, %v366
    %v368 = vcombine.low %v344, %v360
    %v369 = vcombine.high %v344, %v360
    %v370 = vcombine.low %v351, %v367
    %v371 = vcombine.high %v351, %v367
    %v372 = vcombine.low %v276, %v283
    %v374 = vunpack.c.l.s4 1983009808
    %v375 = vunpack.c.0.s8 %v374
    %v376 = vlaneseq
    %v377 = vshrl.u32 %v376, 7
    %v378 = vsub.s32 %v375, %v377
    %v379 = vrot.slane %v372, %v378
    %v380 = vcombine.low %v300, %v301
    %v382 = vunpack.c.l.s4 1983009808
    %v383 = vunpack.c.0.s8 %v382
    %v384 = vlaneseq
    %v385 = vshrl.u32 %v384, 7
    %v386 = vsub.s32 %v383, %v385
    %v387 = vrot.slane %v380, %v386
    %v388 = vcombine.low %v292, %v299
    %v390 = vunpack.c.l.s4 1983009808
    %v391 = vunpack.c.0.s8 %v390
    %v392 = vlaneseq
    %v393 = vshrl.u32 %v392, 7
    %v394 = vsub.s32 %v391, %v393
    %v395 = vrot.slane %v388, %v394
    %v396 = vcombine.low %v302, %v303
    %v398 = vunpack.c.l.s4 1983009808
    %v399 = vunpack.c.0.s8 %v398
    %v400 = vlaneseq
    %v401 = vshrl.u32 %v400, 7
    %v402 = vsub.s32 %v399, %v401
    %v403 = vrot.slane %v396, %v402
    %v404 = vcombine.low %v379, %v387
    %v405 = vcombine.high %v379, %v387
    %v407 = vunpack.c.l.s4 1934713408
    %v408 = vunpack.c.0.s8 %v407
    %v409 = vlaneseq
    %v410 = vshrl.u32 %v409, 7
    %v411 = vsub.s32 %v408, %v410
    %v412 = vrot.slane %v404, %v411
    %v414 = vunpack.c.l.s4 1934713408
    %v415 = vunpack.c.0.s8 %v414
    %v416 = vlaneseq
    %v417 = vshrl.u32 %v416, 7
    %v418 = vsub.s32 %v415, %v417
    %v419 = vrot.slane %v405, %v418
    %v420 = vcombine.low %v395, %v403
    %v421 = vcombine.high %v395, %v403
    %v423 = vunpack.c.l.s4 1934713408
    %v424 = vunpack.c.0.s8 %v423
    %v425 = vlaneseq
    %v426 = vshrl.u32 %v425, 7
    %v427 = vsub.s32 %v424, %v426
    %v428 = vrot.slane %v420, %v427
    %v430 = vunpack.c.l.s4 1934713408
    %v431 = vunpack.c.0.s8 %v430
    %v432 = vlaneseq
    %v433 = vshrl.u32 %v432, 7
    %v434 = vsub.s32 %v431, %v433
    %v435 = vrot.slane %v421, %v434
    %v436 = vcombine.low %v412, %v428
    %v437 = vcombine.high %v412, %v428
    %v438 = vcombine.low %v419, %v435
    %v439 = vcombine.high %v419, %v435
    %440 = vrot.lane.b32.xlu0 %v135, 96
    %v441 = vpop.permute.xlu0 %440
    %442 = vrot.lane.b32.xlu0 %v140, 96
    %v443 = vpop.permute.xlu0 %442
    %444 = vrot.lane.b32.xlu0 %v151, 96
    %v445 = vpop.permute.xlu0 %444
    %446 = vrot.lane.b32.xlu0 %v153, 96
    %v447 = vpop.permute.xlu0 %446
    %448 = vrot.lane.b32.xlu0 %v157, 96
    %v449 = vpop.permute.xlu0 %448
    %450 = vrot.lane.b32.xlu0 %v159, 96
    %v451 = vpop.permute.xlu0 %450
    %452 = vrot.lane.b32.xlu0 %v163, 96
    %v453 = vpop.permute.xlu0 %452
    %454 = vrot.lane.b32.xlu0 %v165, 96
    %v455 = vpop.permute.xlu0 %454
    %v464 = vcombine.low %v441, %v449
    %v465 = vcombine.high %v441, %v449
    %v467 = vunpack.c.l.s4 1983009808
    %v468 = vunpack.c.0.s8 %v467
    %v469 = vlaneseq
    %v470 = vshrl.u32 %v469, 7
    %v471 = vsub.s32 %v468, %v470
    %v472 = vrot.slane %v464, %v471
    %v474 = vunpack.c.l.s4 1983009808
    %v475 = vunpack.c.0.s8 %v474
    %v476 = vlaneseq
    %v477 = vshrl.u32 %v476, 7
    %v478 = vsub.s32 %v475, %v477
    %v479 = vrot.slane %v465, %v478
    %v480 = vcombine.low %v445, %v453
    %v481 = vcombine.high %v445, %v453
    %v483 = vunpack.c.l.s4 1983009808
    %v484 = vunpack.c.0.s8 %v483
    %v485 = vlaneseq
    %v486 = vshrl.u32 %v485, 7
    %v487 = vsub.s32 %v484, %v486
    %v488 = vrot.slane %v480, %v487
    %v490 = vunpack.c.l.s4 1983009808
    %v491 = vunpack.c.0.s8 %v490
    %v492 = vlaneseq
    %v493 = vshrl.u32 %v492, 7
    %v494 = vsub.s32 %v491, %v493
    %v495 = vrot.slane %v481, %v494
    %v496 = vcombine.low %v472, %v488
    %v497 = vcombine.high %v472, %v488
    %v499 = vunpack.c.l.s4 1934713408
    %v500 = vunpack.c.0.s8 %v499
    %v501 = vlaneseq
    %v502 = vshrl.u32 %v501, 7
    %v503 = vsub.s32 %v500, %v502
    %v504 = vrot.slane %v496, %v503
    %v506 = vunpack.c.l.s4 1934713408
    %v507 = vunpack.c.0.s8 %v506
    %v508 = vlaneseq
    %v509 = vshrl.u32 %v508, 7
    %v510 = vsub.s32 %v507, %v509
    %v511 = vrot.slane %v497, %v510
    %v512 = vcombine.low %v479, %v495
    %v513 = vcombine.high %v479, %v495
    %v515 = vunpack.c.l.s4 1934713408
    %v516 = vunpack.c.0.s8 %v515
    %v517 = vlaneseq
    %v518 = vshrl.u32 %v517, 7
    %v519 = vsub.s32 %v516, %v518
    %v520 = vrot.slane %v512, %v519
    %v522 = vunpack.c.l.s4 1934713408
    %v523 = vunpack.c.0.s8 %v522
    %v524 = vlaneseq
    %v525 = vshrl.u32 %v524, 7
    %v526 = vsub.s32 %v523, %v525
    %v527 = vrot.slane %v513, %v526
    %v528 = vcombine.high %v504, 0.0
    %v529 = vcombine.high %v511, 0.0
    %v530 = vcombine.high %v520, 0.0
    %v531 = vcombine.high %v527, 0.0
    %v532 = vcombine.low %v443, %v451
    %v533 = vcombine.high %v443, %v451
    %v535 = vunpack.c.l.s4 1983009808
    %v536 = vunpack.c.0.s8 %v535
    %v537 = vlaneseq
    %v538 = vshrl.u32 %v537, 7
    %v539 = vsub.s32 %v536, %v538
    %v540 = vrot.slane %v532, %v539
    %v542 = vunpack.c.l.s4 1983009808
    %v543 = vunpack.c.0.s8 %v542
    %v544 = vlaneseq
    %v545 = vshrl.u32 %v544, 7
    %v546 = vsub.s32 %v543, %v545
    %v547 = vrot.slane %v533, %v546
    %v548 = vcombine.low %v447, %v455
    %v549 = vcombine.high %v447, %v455
    %v551 = vunpack.c.l.s4 1983009808
    %v552 = vunpack.c.0.s8 %v551
    %v553 = vlaneseq
    %v554 = vshrl.u32 %v553, 7
    %v555 = vsub.s32 %v552, %v554
    %v556 = vrot.slane %v548, %v555
    %v558 = vunpack.c.l.s4 1983009808
    %v559 = vunpack.c.0.s8 %v558
    %v560 = vlaneseq
    %v561 = vshrl.u32 %v560, 7
    %v562 = vsub.s32 %v559, %v561
    %v563 = vrot.slane %v549, %v562
    %v564 = vcombine.low %v540, %v556
    %v565 = vcombine.high %v540, %v556
    %v567 = vunpack.c.l.s4 1934713408
    %v568 = vunpack.c.0.s8 %v567
    %v569 = vlaneseq
    %v570 = vshrl.u32 %v569, 7
    %v571 = vsub.s32 %v568, %v570
    %v572 = vrot.slane %v564, %v571
    %v574 = vunpack.c.l.s4 1934713408
    %v575 = vunpack.c.0.s8 %v574
    %v576 = vlaneseq
    %v577 = vshrl.u32 %v576, 7
    %v578 = vsub.s32 %v575, %v577
    %v579 = vrot.slane %v565, %v578
    %v580 = vcombine.low %v547, %v563
    %v581 = vcombine.high %v547, %v563
    %v583 = vunpack.c.l.s4 1934713408
    %v584 = vunpack.c.0.s8 %v583
    %v585 = vlaneseq
    %v586 = vshrl.u32 %v585, 7
    %v587 = vsub.s32 %v584, %v586
    %v588 = vrot.slane %v580, %v587
    %v590 = vunpack.c.l.s4 1934713408
    %v591 = vunpack.c.0.s8 %v590
    %v592 = vlaneseq
    %v593 = vshrl.u32 %v592, 7
    %v594 = vsub.s32 %v591, %v593
    %v595 = vrot.slane %v581, %v594
    %v596 = vcombine.high %v572, 0.0
    %v597 = vcombine.high %v579, 0.0
    %v598 = vcombine.high %v588, 0.0
    %v599 = vcombine.high %v595, 0.0
    %v600 = vcombine.low %v504, %v511
    %v602 = vunpack.c.l.s4 1983009808
    %v603 = vunpack.c.0.s8 %v602
    %v604 = vlaneseq
    %v605 = vshrl.u32 %v604, 7
    %v606 = vsub.s32 %v603, %v605
    %v607 = vrot.slane %v600, %v606
    %v608 = vcombine.low %v528, %v529
    %v610 = vunpack.c.l.s4 1983009808
    %v611 = vunpack.c.0.s8 %v610
    %v612 = vlaneseq
    %v613 = vshrl.u32 %v612, 7
    %v614 = vsub.s32 %v611, %v613
    %v615 = vrot.slane %v608, %v614
    %v616 = vcombine.low %v520, %v527
    %v618 = vunpack.c.l.s4 1983009808
    %v619 = vunpack.c.0.s8 %v618
    %v620 = vlaneseq
    %v621 = vshrl.u32 %v620, 7
    %v622 = vsub.s32 %v619, %v621
    %v623 = vrot.slane %v616, %v622
    %v624 = vcombine.low %v530, %v531
    %v626 = vunpack.c.l.s4 1983009808
    %v627 = vunpack.c.0.s8 %v626
    %v628 = vlaneseq
    %v629 = vshrl.u32 %v628, 7
    %v630 = vsub.s32 %v627, %v629
    %v631 = vrot.slane %v624, %v630
    %v632 = vcombine.low %v607, %v615
    %v633 = vcombine.high %v607, %v615
    %v635 = vunpack.c.l.s4 1934713408
    %v636 = vunpack.c.0.s8 %v635
    %v637 = vlaneseq
    %v638 = vshrl.u32 %v637, 7
    %v639 = vsub.s32 %v636, %v638
    %v640 = vrot.slane %v632, %v639
    %v642 = vunpack.c.l.s4 1934713408
    %v643 = vunpack.c.0.s8 %v642
    %v644 = vlaneseq
    %v645 = vshrl.u32 %v644, 7
    %v646 = vsub.s32 %v643, %v645
    %v647 = vrot.slane %v633, %v646
    %v648 = vcombine.low %v623, %v631
    %v649 = vcombine.high %v623, %v631
    %v651 = vunpack.c.l.s4 1934713408
    %v652 = vunpack.c.0.s8 %v651
    %v653 = vlaneseq
    %v654 = vshrl.u32 %v653, 7
    %v655 = vsub.s32 %v652, %v654
    %v656 = vrot.slane %v648, %v655
    %v658 = vunpack.c.l.s4 1934713408
    %v659 = vunpack.c.0.s8 %v658
    %v660 = vlaneseq
    %v661 = vshrl.u32 %v660, 7
    %v662 = vsub.s32 %v659, %v661
    %v663 = vrot.slane %v649, %v662
    %v664 = vcombine.low %v640, %v656
    %v665 = vcombine.high %v640, %v656
    %v666 = vcombine.low %v647, %v663
    %v667 = vcombine.high %v647, %v663
    %v668 = vcombine.low %v572, %v579
    %v670 = vunpack.c.l.s4 1983009808
    %v671 = vunpack.c.0.s8 %v670
    %v672 = vlaneseq
    %v673 = vshrl.u32 %v672, 7
    %v674 = vsub.s32 %v671, %v673
    %v675 = vrot.slane %v668, %v674
    %v676 = vcombine.low %v596, %v597
    %v678 = vunpack.c.l.s4 1983009808
    %v679 = vunpack.c.0.s8 %v678
    %v680 = vlaneseq
    %v681 = vshrl.u32 %v680, 7
    %v682 = vsub.s32 %v679, %v681
    %v683 = vrot.slane %v676, %v682
    %v684 = vcombine.low %v588, %v595
    %v686 = vunpack.c.l.s4 1983009808
    %v687 = vunpack.c.0.s8 %v686
    %v688 = vlaneseq
    %v689 = vshrl.u32 %v688, 7
    %v690 = vsub.s32 %v687, %v689
    %v691 = vrot.slane %v684, %v690
    %v692 = vcombine.low %v598, %v599
    %v694 = vunpack.c.l.s4 1983009808
    %v695 = vunpack.c.0.s8 %v694
    %v696 = vlaneseq
    %v697 = vshrl.u32 %v696, 7
    %v698 = vsub.s32 %v695, %v697
    %v699 = vrot.slane %v692, %v698
    %v700 = vcombine.low %v675, %v683
    %v701 = vcombine.high %v675, %v683
    %v703 = vunpack.c.l.s4 1934713408
    %v704 = vunpack.c.0.s8 %v703
    %v705 = vlaneseq
    %v706 = vshrl.u32 %v705, 7
    %v707 = vsub.s32 %v704, %v706
    %v708 = vrot.slane %v700, %v707
    %v710 = vunpack.c.l.s4 1934713408
    %v711 = vunpack.c.0.s8 %v710
    %v712 = vlaneseq
    %v713 = vshrl.u32 %v712, 7
    %v714 = vsub.s32 %v711, %v713
    %v715 = vrot.slane %v701, %v714
    %v716 = vcombine.low %v691, %v699
    %v717 = vcombine.high %v691, %v699
    %v719 = vunpack.c.l.s4 1934713408
    %v720 = vunpack.c.0.s8 %v719
    %v721 = vlaneseq
    %v722 = vshrl.u32 %v721, 7
    %v723 = vsub.s32 %v720, %v722
    %v724 = vrot.slane %v716, %v723
    %v726 = vunpack.c.l.s4 1934713408
    %v727 = vunpack.c.0.s8 %v726
    %v728 = vlaneseq
    %v729 = vshrl.u32 %v728, 7
    %v730 = vsub.s32 %v727, %v729
    %v731 = vrot.slane %v717, %v730
    %v732 = vcombine.low %v708, %v724
    %v733 = vcombine.high %v708, %v724
    %v734 = vcombine.low %v715, %v731
    %v735 = vcombine.high %v715, %v731
    %736 = vrot.lane.b32.xlu0 %v135, 64
    %v737 = vpop.permute.xlu0 %736
    %738 = vrot.lane.b32.xlu0 %v140, 64
    %v739 = vpop.permute.xlu0 %738
    %740 = vrot.lane.b32.xlu0 %v151, 64
    %v741 = vpop.permute.xlu0 %740
    %742 = vrot.lane.b32.xlu0 %v153, 64
    %v743 = vpop.permute.xlu0 %742
    %744 = vrot.lane.b32.xlu0 %v157, 64
    %v745 = vpop.permute.xlu0 %744
    %746 = vrot.lane.b32.xlu0 %v159, 64
    %v747 = vpop.permute.xlu0 %746
    %748 = vrot.lane.b32.xlu0 %v163, 64
    %v749 = vpop.permute.xlu0 %748
    %750 = vrot.lane.b32.xlu0 %v165, 64
    %v751 = vpop.permute.xlu0 %750
    %v760 = vcombine.low %v737, %v745
    %v761 = vcombine.high %v737, %v745
    %v763 = vunpack.c.l.s4 1983009808
    %v764 = vunpack.c.0.s8 %v763
    %v765 = vlaneseq
    %v766 = vshrl.u32 %v765, 7
    %v767 = vsub.s32 %v764, %v766
    %v768 = vrot.slane %v760, %v767
    %v770 = vunpack.c.l.s4 1983009808
    %v771 = vunpack.c.0.s8 %v770
    %v772 = vlaneseq
    %v773 = vshrl.u32 %v772, 7
    %v774 = vsub.s32 %v771, %v773
    %v775 = vrot.slane %v761, %v774
    %v776 = vcombine.low %v741, %v749
    %v777 = vcombine.high %v741, %v749
    %v779 = vunpack.c.l.s4 1983009808
    %v780 = vunpack.c.0.s8 %v779
    %v781 = vlaneseq
    %v782 = vshrl.u32 %v781, 7
    %v783 = vsub.s32 %v780, %v782
    %v784 = vrot.slane %v776, %v783
    %v786 = vunpack.c.l.s4 1983009808
    %v787 = vunpack.c.0.s8 %v786
    %v788 = vlaneseq
    %v789 = vshrl.u32 %v788, 7
    %v790 = vsub.s32 %v787, %v789
    %v791 = vrot.slane %v777, %v790
    %v792 = vcombine.low %v768, %v784
    %v793 = vcombine.high %v768, %v784
    %v795 = vunpack.c.l.s4 1934713408
    %v796 = vunpack.c.0.s8 %v795
    %v797 = vlaneseq
    %v798 = vshrl.u32 %v797, 7
    %v799 = vsub.s32 %v796, %v798
    %v800 = vrot.slane %v792, %v799
    %v802 = vunpack.c.l.s4 1934713408
    %v803 = vunpack.c.0.s8 %v802
    %v804 = vlaneseq
    %v805 = vshrl.u32 %v804, 7
    %v806 = vsub.s32 %v803, %v805
    %v807 = vrot.slane %v793, %v806
    %v808 = vcombine.low %v775, %v791
    %v809 = vcombine.high %v775, %v791
    %v811 = vunpack.c.l.s4 1934713408
    %v812 = vunpack.c.0.s8 %v811
    %v813 = vlaneseq
    %v814 = vshrl.u32 %v813, 7
    %v815 = vsub.s32 %v812, %v814
    %v816 = vrot.slane %v808, %v815
    %v818 = vunpack.c.l.s4 1934713408
    %v819 = vunpack.c.0.s8 %v818
    %v820 = vlaneseq
    %v821 = vshrl.u32 %v820, 7
    %v822 = vsub.s32 %v819, %v821
    %v823 = vrot.slane %v809, %v822
    %v824 = vcombine.high %v800, 0.0
    %v825 = vcombine.high %v807, 0.0
    %v826 = vcombine.high %v816, 0.0
    %v827 = vcombine.high %v823, 0.0
    %v828 = vcombine.low %v739, %v747
    %v829 = vcombine.high %v739, %v747
    %v831 = vunpack.c.l.s4 1983009808
    %v832 = vunpack.c.0.s8 %v831
    %v833 = vlaneseq
    %v834 = vshrl.u32 %v833, 7
    %v835 = vsub.s32 %v832, %v834
    %v836 = vrot.slane %v828, %v835
    %v838 = vunpack.c.l.s4 1983009808
    %v839 = vunpack.c.0.s8 %v838
    %v840 = vlaneseq
    %v841 = vshrl.u32 %v840, 7
    %v842 = vsub.s32 %v839, %v841
    %v843 = vrot.slane %v829, %v842
    %v844 = vcombine.low %v743, %v751
    %v845 = vcombine.high %v743, %v751
    %v847 = vunpack.c.l.s4 1983009808
    %v848 = vunpack.c.0.s8 %v847
    %v849 = vlaneseq
    %v850 = vshrl.u32 %v849, 7
    %v851 = vsub.s32 %v848, %v850
    %v852 = vrot.slane %v844, %v851
    %v854 = vunpack.c.l.s4 1983009808
    %v855 = vunpack.c.0.s8 %v854
    %v856 = vlaneseq
    %v857 = vshrl.u32 %v856, 7
    %v858 = vsub.s32 %v855, %v857
    %v859 = vrot.slane %v845, %v858
    %v860 = vcombine.low %v836, %v852
    %v861 = vcombine.high %v836, %v852
    %v863 = vunpack.c.l.s4 1934713408
    %v864 = vunpack.c.0.s8 %v863
    %v865 = vlaneseq
    %v866 = vshrl.u32 %v865, 7
    %v867 = vsub.s32 %v864, %v866
    %v868 = vrot.slane %v860, %v867
    %v870 = vunpack.c.l.s4 1934713408
    %v871 = vunpack.c.0.s8 %v870
    %v872 = vlaneseq
    %v873 = vshrl.u32 %v872, 7
    %v874 = vsub.s32 %v871, %v873
    %v875 = vrot.slane %v861, %v874
    %v876 = vcombine.low %v843, %v859
    %v877 = vcombine.high %v843, %v859
    %v879 = vunpack.c.l.s4 1934713408
    %v880 = vunpack.c.0.s8 %v879
    %v881 = vlaneseq
    %v882 = vshrl.u32 %v881, 7
    %v883 = vsub.s32 %v880, %v882
    %v884 = vrot.slane %v876, %v883
    %v886 = vunpack.c.l.s4 1934713408
    %v887 = vunpack.c.0.s8 %v886
    %v888 = vlaneseq
    %v889 = vshrl.u32 %v888, 7
    %v890 = vsub.s32 %v887, %v889
    %v891 = vrot.slane %v877, %v890
    %v892 = vcombine.high %v868, 0.0
    %v893 = vcombine.high %v875, 0.0
    %v894 = vcombine.high %v884, 0.0
    %v895 = vcombine.high %v891, 0.0
    %v896 = vcombine.low %v800, %v807
    %v898 = vunpack.c.l.s4 1983009808
    %v899 = vunpack.c.0.s8 %v898
    %v900 = vlaneseq
    %v901 = vshrl.u32 %v900, 7
    %v902 = vsub.s32 %v899, %v901
    %v903 = vrot.slane %v896, %v902
    %v904 = vcombine.low %v824, %v825
    %v906 = vunpack.c.l.s4 1983009808
    %v907 = vunpack.c.0.s8 %v906
    %v908 = vlaneseq
    %v909 = vshrl.u32 %v908, 7
    %v910 = vsub.s32 %v907, %v909
    %v911 = vrot.slane %v904, %v910
    %v912 = vcombine.low %v816, %v823
    %v914 = vunpack.c.l.s4 1983009808
    %v915 = vunpack.c.0.s8 %v914
    %v916 = vlaneseq
    %v917 = vshrl.u32 %v916, 7
    %v918 = vsub.s32 %v915, %v917
    %v919 = vrot.slane %v912, %v918
    %v920 = vcombine.low %v826, %v827
    %v922 = vunpack.c.l.s4 1983009808
    %v923 = vunpack.c.0.s8 %v922
    %v924 = vlaneseq
    %v925 = vshrl.u32 %v924, 7
    %v926 = vsub.s32 %v923, %v925
    %v927 = vrot.slane %v920, %v926
    %v928 = vcombine.low %v903, %v911
    %v929 = vcombine.high %v903, %v911
    %v931 = vunpack.c.l.s4 1934713408
    %v932 = vunpack.c.0.s8 %v931
    %v933 = vlaneseq
    %v934 = vshrl.u32 %v933, 7
    %v935 = vsub.s32 %v932, %v934
    %v936 = vrot.slane %v928, %v935
    %v938 = vunpack.c.l.s4 1934713408
    %v939 = vunpack.c.0.s8 %v938
    %v940 = vlaneseq
    %v941 = vshrl.u32 %v940, 7
    %v942 = vsub.s32 %v939, %v941
    %v943 = vrot.slane %v929, %v942
    %v944 = vcombine.low %v919, %v927
    %v945 = vcombine.high %v919, %v927
    %v947 = vunpack.c.l.s4 1934713408
    %v948 = vunpack.c.0.s8 %v947
    %v949 = vlaneseq
    %v950 = vshrl.u32 %v949, 7
    %v951 = vsub.s32 %v948, %v950
    %v952 = vrot.slane %v944, %v951
    %v954 = vunpack.c.l.s4 1934713408
    %v955 = vunpack.c.0.s8 %v954
    %v956 = vlaneseq
    %v957 = vshrl.u32 %v956, 7
    %v958 = vsub.s32 %v955, %v957
    %v959 = vrot.slane %v945, %v958
    %v960 = vcombine.low %v936, %v952
    %v961 = vcombine.high %v936, %v952
    %v962 = vcombine.low %v943, %v959
    %v963 = vcombine.high %v943, %v959
    %v964 = vcombine.low %v868, %v875
    %v966 = vunpack.c.l.s4 1983009808
    %v967 = vunpack.c.0.s8 %v966
    %v968 = vlaneseq
    %v969 = vshrl.u32 %v968, 7
    %v970 = vsub.s32 %v967, %v969
    %v971 = vrot.slane %v964, %v970
    %v972 = vcombine.low %v892, %v893
    %v974 = vunpack.c.l.s4 1983009808
    %v975 = vunpack.c.0.s8 %v974
    %v976 = vlaneseq
    %v977 = vshrl.u32 %v976, 7
    %v978 = vsub.s32 %v975, %v977
    %v979 = vrot.slane %v972, %v978
    %v980 = vcombine.low %v884, %v891
    %v982 = vunpack.c.l.s4 1983009808
    %v983 = vunpack.c.0.s8 %v982
    %v984 = vlaneseq
    %v985 = vshrl.u32 %v984, 7
    %v986 = vsub.s32 %v983, %v985
    %v987 = vrot.slane %v980, %v986
    %v988 = vcombine.low %v894, %v895
    %v990 = vunpack.c.l.s4 1983009808
    %v991 = vunpack.c.0.s8 %v990
    %v992 = vlaneseq
    %v993 = vshrl.u32 %v992, 7
    %v994 = vsub.s32 %v991, %v993
    %v995 = vrot.slane %v988, %v994
    %v996 = vcombine.low %v971, %v979
    %v997 = vcombine.high %v971, %v979
    %v999 = vunpack.c.l.s4 1934713408
    %v1000 = vunpack.c.0.s8 %v999
    %v1001 = vlaneseq
    %v1002 = vshrl.u32 %v1001, 7
    %v1003 = vsub.s32 %v1000, %v1002
    %v1004 = vrot.slane %v996, %v1003
    %v1006 = vunpack.c.l.s4 1934713408
    %v1007 = vunpack.c.0.s8 %v1006
    %v1008 = vlaneseq
    %v1009 = vshrl.u32 %v1008, 7
    %v1010 = vsub.s32 %v1007, %v1009
    %v1011 = vrot.slane %v997, %v1010
    %v1012 = vcombine.low %v987, %v995
    %v1013 = vcombine.high %v987, %v995
    %v1015 = vunpack.c.l.s4 1934713408
    %v1016 = vunpack.c.0.s8 %v1015
    %v1017 = vlaneseq
    %v1018 = vshrl.u32 %v1017, 7
    %v1019 = vsub.s32 %v1016, %v1018
    %v1020 = vrot.slane %v1012, %v1019
    %v1022 = vunpack.c.l.s4 1934713408
    %v1023 = vunpack.c.0.s8 %v1022
    %v1024 = vlaneseq
    %v1025 = vshrl.u32 %v1024, 7
    %v1026 = vsub.s32 %v1023, %v1025
    %v1027 = vrot.slane %v1013, %v1026
    %v1028 = vcombine.low %v1004, %v1020
    %v1029 = vcombine.high %v1004, %v1020
    %v1030 = vcombine.low %v1011, %v1027
    %v1031 = vcombine.high %v1011, %v1027
    %vm1032 = vcmask 64512
    %v1034 = vsel %vm1032, %v368, 0
    %v1037 = vsel %vm1032, %v664, 0
    %1039 = vmatprep.subr.mxu0 0.0
    %1040 = vmatpush1.xpose.msra.mxu0 %v1037
    %1041 = vmatprep.subr.mxu0 0.0
    %1042 = vmatpush1.xpose.msra.mxu0 0.0
    %1043 = vmatprep.subr.mxu0 0.0
    %1044 = vmatpush1.xpose.msra.mxu0 0.0
    %1045 = vmatprep.subr.mxu0 0.0
    %1046 = vmatpush1.xpose.msra.mxu0 0.0
    %1047 = vmatprep.subr.mxu0 0.0
    %1048 = vmatpush1.xpose.msra.mxu0 0.0
    %1049 = vmatprep.subr.mxu0 0.0
    %1050 = vmatpush1.xpose.msra.mxu0 0.0
    %1051 = vmatprep.subr.mxu0 0.0
    %1052 = vmatpush1.xpose.msra.mxu0 0.0
    %1053 = vmatprep.subr.mxu0 0.0
    %1054 = vmatpush1.xpose.msra.mxu0 0.0
    %1055 = vmatprep.subr.mxu0 0.0
    %1056 = vmatpush1.xpose.msra.mxu0 0.0
    %1057 = vmatprep.subr.mxu0 0.0
    %1058 = vmatpush1.xpose.msra.mxu0 0.0
    %1059 = vmatprep.subr.mxu0 0.0
    %1060 = vmatpush1.xpose.msra.mxu0 0.0
    %1061 = vmatprep.subr.mxu0 0.0
    %1062 = vmatpush1.xpose.msra.mxu0 0.0
    %1063 = vmatprep.subr.mxu0 0.0
    %1064 = vmatpush1.xpose.msra.mxu0 0.0
    %1065 = vmatprep.subr.mxu0 0.0
    %1066 = vmatpush1.xpose.msra.mxu0 0.0
    %1067 = vmatprep.subr.mxu0 0.0
    %1068 = vmatpush1.xpose.msra.mxu0 0.0
    %1069 = vmatprep.subr.mxu0 0.0
    %1070 = vmatpush1.xpose.msra.mxu0 0.0
    %1071 = vmatprep.subr.mxu0 0.0
    %1072 = vmatpush1.xpose.msra.mxu0 0.0
    %1073 = vmatprep.subr.mxu0 0.0
    %1074 = vmatpush1.xpose.msra.mxu0 0.0
    %1075 = vmatprep.subr.mxu0 0.0
    %1076 = vmatpush1.xpose.msra.mxu0 0.0
    %1077 = vmatprep.subr.mxu0 0.0
    %1078 = vmatpush1.xpose.msra.mxu0 0.0
    %1079 = vmatprep.subr.mxu0 0.0
    %1080 = vmatpush1.xpose.msra.mxu0 0.0
    %1081 = vmatprep.subr.mxu0 0.0
    %1082 = vmatpush1.xpose.msra.mxu0 0.0
    %1083 = vmatprep.subr.mxu0 0.0
    %1084 = vmatpush1.xpose.msra.mxu0 0.0
    %1085 = vmatprep.subr.mxu0 0.0
    %1086 = vmatpush1.xpose.msra.mxu0 0.0
    %1087 = vmatprep.subr.mxu0 0.0
    %1088 = vmatpush1.xpose.msra.mxu0 0.0
    %1089 = vmatprep.subr.mxu0 0.0
    %1090 = vmatpush1.xpose.msra.mxu0 0.0
    %1091 = vmatprep.subr.mxu0 0.0
    %1092 = vmatpush1.xpose.msra.mxu0 0.0
    %1093 = vmatprep.subr.mxu0 0.0
    %1094 = vmatpush1.xpose.msra.mxu0 0.0
    %1095 = vmatprep.subr.mxu0 0.0
    %1096 = vmatpush1.xpose.msra.mxu0 0.0
    %1097 = vmatprep.subr.mxu0 0.0
    %1098 = vmatpush1.xpose.msra.mxu0 0.0
    %1099 = vmatprep.subr.mxu0 0.0
    %1100 = vmatpush1.xpose.msra.mxu0 0.0
    %1101 = vmatprep.subr.mxu0 0.0
    %1102 = vmatpush1.xpose.msra.mxu0 0.0
    %1103 = vmatprep.mubr.f32.mxu0 0.0
    %1104 = vmatmul.mubr.f32.gmra.mrb[0].mxu0 %v1034
    %v1105 = vpop.f32.mrb[0].mxu0
    %v1106 = vadd.f32 0.0, %v1105
    %v1107 = vpop.f32.mrb[0].mxu0
    %1108 = vdwg.mxu0
    %v1110 = vsel %vm1032, %v436, 0
    %v1113 = vsel %vm1032, %v732, 0
    %1115 = vmatprep.subr.mxu0 0.0
    %1116 = vmatpush1.xpose.msra.mxu0 %v1113
    %1117 = vmatprep.subr.mxu0 0.0
    %1118 = vmatpush1.xpose.msra.mxu0 0.0
    %1119 = vmatprep.subr.mxu0 0.0
    %1120 = vmatpush1.xpose.msra.mxu0 0.0
    %1121 = vmatprep.subr.mxu0 0.0
    %1122 = vmatpush1.xpose.msra.mxu0 0.0
    %1123 = vmatprep.subr.mxu0 0.0
    %1124 = vmatpush1.xpose.msra.mxu0 0.0
    %1125 = vmatprep.subr.mxu0 0.0
    %1126 = vmatpush1.xpose.msra.mxu0 0.0
    %1127 = vmatprep.subr.mxu0 0.0
    %1128 = vmatpush1.xpose.msra.mxu0 0.0
    %1129 = vmatprep.subr.mxu0 0.0
    %1130 = vmatpush1.xpose.msra.mxu0 0.0
    %1131 = vmatprep.subr.mxu0 0.0
    %1132 = vmatpush1.xpose.msra.mxu0 0.0
    %1133 = vmatprep.subr.mxu0 0.0
    %1134 = vmatpush1.xpose.msra.mxu0 0.0
    %1135 = vmatprep.subr.mxu0 0.0
    %1136 = vmatpush1.xpose.msra.mxu0 0.0
    %1137 = vmatprep.subr.mxu0 0.0
    %1138 = vmatpush1.xpose.msra.mxu0 0.0
    %1139 = vmatprep.subr.mxu0 0.0
    %1140 = vmatpush1.xpose.msra.mxu0 0.0
    %1141 = vmatprep.subr.mxu0 0.0
    %1142 = vmatpush1.xpose.msra.mxu0 0.0
    %1143 = vmatprep.subr.mxu0 0.0
    %1144 = vmatpush1.xpose.msra.mxu0 0.0
    %1145 = vmatprep.subr.mxu0 0.0
    %1146 = vmatpush1.xpose.msra.mxu0 0.0
    %1147 = vmatprep.subr.mxu0 0.0
    %1148 = vmatpush1.xpose.msra.mxu0 0.0
    %1149 = vmatprep.subr.mxu0 0.0
    %1150 = vmatpush1.xpose.msra.mxu0 0.0
    %1151 = vmatprep.subr.mxu0 0.0
    %1152 = vmatpush1.xpose.msra.mxu0 0.0
    %1153 = vmatprep.subr.mxu0 0.0
    %1154 = vmatpush1.xpose.msra.mxu0 0.0
    %1155 = vmatprep.subr.mxu0 0.0
    %1156 = vmatpush1.xpose.msra.mxu0 0.0
    %1157 = vmatprep.subr.mxu0 0.0
    %1158 = vmatpush1.xpose.msra.mxu0 0.0
    %1159 = vmatprep.subr.mxu0 0.0
    %1160 = vmatpush1.xpose.msra.mxu0 0.0
    %1161 = vmatprep.subr.mxu0 0.0
    %1162 = vmatpush1.xpose.msra.mxu0 0.0
    %1163 = vmatprep.subr.mxu0 0.0
    %1164 = vmatpush1.xpose.msra.mxu0 0.0
    %1165 = vmatprep.subr.mxu0 0.0
    %1166 = vmatpush1.xpose.msra.mxu0 0.0
    %1167 = vmatprep.subr.mxu0 0.0
    %1168 = vmatpush1.xpose.msra.mxu0 0.0
    %1169 = vmatprep.subr.mxu0 0.0
    %1170 = vmatpush1.xpose.msra.mxu0 0.0
    %1171 = vmatprep.subr.mxu0 0.0
    %1172 = vmatpush1.xpose.msra.mxu0 0.0
    %1173 = vmatprep.subr.mxu0 0.0
    %1174 = vmatpush1.xpose.msra.mxu0 0.0
    %1175 = vmatprep.subr.mxu0 0.0
    %1176 = vmatpush1.xpose.msra.mxu0 0.0
    %1177 = vmatprep.subr.mxu0 0.0
    %1178 = vmatpush1.xpose.msra.mxu0 0.0
    %1179 = vmatprep.mubr.f32.mxu0 0.0
    %1180 = vmatmul.mubr.f32.gmra.mrb[0].mxu0 %v1110
    %v1181 = vpop.f32.mrb[0].mxu0
    %v1182 = vadd.f32 0.0, %v1181
    %v1183 = vpop.f32.mrb[0].mxu0
    %1184 = vdwg.mxu0
    %v1186 = vsel %vm1032, %v369, 0
    %v1189 = vsel %vm1032, %v665, 0
    %1191 = vmatprep.subr.mxu0 0.0
    %1192 = vmatpush1.xpose.msra.mxu0 %v1189
    %1193 = vmatprep.subr.mxu0 0.0
    %1194 = vmatpush1.xpose.msra.mxu0 0.0
    %1195 = vmatprep.subr.mxu0 0.0
    %1196 = vmatpush1.xpose.msra.mxu0 0.0
    %1197 = vmatprep.subr.mxu0 0.0
    %1198 = vmatpush1.xpose.msra.mxu0 0.0
    %1199 = vmatprep.subr.mxu0 0.0
    %1200 = vmatpush1.xpose.msra.mxu0 0.0
    %1201 = vmatprep.subr.mxu0 0.0
    %1202 = vmatpush1.xpose.msra.mxu0 0.0
    %1203 = vmatprep.subr.mxu0 0.0
    %1204 = vmatpush1.xpose.msra.mxu0 0.0
    %1205 = vmatprep.subr.mxu0 0.0
    %1206 = vmatpush1.xpose.msra.mxu0 0.0
    %1207 = vmatprep.subr.mxu0 0.0
    %1208 = vmatpush1.xpose.msra.mxu0 0.0
    %1209 = vmatprep.subr.mxu0 0.0
    %1210 = vmatpush1.xpose.msra.mxu0 0.0
    %1211 = vmatprep.subr.mxu0 0.0
    %1212 = vmatpush1.xpose.msra.mxu0 0.0
    %1213 = vmatprep.subr.mxu0 0.0
    %1214 = vmatpush1.xpose.msra.mxu0 0.0
    %1215 = vmatprep.subr.mxu0 0.0
    %1216 = vmatpush1.xpose.msra.mxu0 0.0
    %1217 = vmatprep.subr.mxu0 0.0
    %1218 = vmatpush1.xpose.msra.mxu0 0.0
    %1219 = vmatprep.subr.mxu0 0.0
    %1220 = vmatpush1.xpose.msra.mxu0 0.0
    %1221 = vmatprep.subr.mxu0 0.0
    %1222 = vmatpush1.xpose.msra.mxu0 0.0
    %1223 = vmatprep.subr.mxu0 0.0
    %1224 = vmatpush1.xpose.msra.mxu0 0.0
    %1225 = vmatprep.subr.mxu0 0.0
    %1226 = vmatpush1.xpose.msra.mxu0 0.0
    %1227 = vmatprep.subr.mxu0 0.0
    %1228 = vmatpush1.xpose.msra.mxu0 0.0
    %1229 = vmatprep.subr.mxu0 0.0
    %1230 = vmatpush1.xpose.msra.mxu0 0.0
    %1231 = vmatprep.subr.mxu0 0.0
    %1232 = vmatpush1.xpose.msra.mxu0 0.0
    %1233 = vmatprep.subr.mxu0 0.0
    %1234 = vmatpush1.xpose.msra.mxu0 0.0
    %1235 = vmatprep.subr.mxu0 0.0
    %1236 = vmatpush1.xpose.msra.mxu0 0.0
    %1237 = vmatprep.subr.mxu0 0.0
    %1238 = vmatpush1.xpose.msra.mxu0 0.0
    %1239 = vmatprep.subr.mxu0 0.0
    %1240 = vmatpush1.xpose.msra.mxu0 0.0
    %1241 = vmatprep.subr.mxu0 0.0
    %1242 = vmatpush1.xpose.msra.mxu0 0.0
    %1243 = vmatprep.subr.mxu0 0.0
    %1244 = vmatpush1.xpose.msra.mxu0 0.0
    %1245 = vmatprep.subr.mxu0 0.0
    %1246 = vmatpush1.xpose.msra.mxu0 0.0
    %1247 = vmatprep.subr.mxu0 0.0
    %1248 = vmatpush1.xpose.msra.mxu0 0.0
    %1249 = vmatprep.subr.mxu0 0.0
    %1250 = vmatpush1.xpose.msra.mxu0 0.0
    %1251 = vmatprep.subr.mxu0 0.0
    %1252 = vmatpush1.xpose.msra.mxu0 0.0
    %1253 = vmatprep.subr.mxu0 0.0
    %1254 = vmatpush1.xpose.msra.mxu0 0.0
    %1255 = vmatprep.mubr.f32.mxu0 0.0
    %1256 = vmatmul.mubr.f32.gmra.mrb[0].mxu0 %v1186
    %v1257 = vpop.f32.mrb[0].mxu0
    %v1258 = vadd.f32 0.0, %v1257
    %v1259 = vpop.f32.mrb[0].mxu0
    %1260 = vdwg.mxu0
    %v1262 = vsel %vm1032, %v437, 0
    %v1265 = vsel %vm1032, %v733, 0
    %1267 = vmatprep.subr.mxu0 0.0
    %1268 = vmatpush1.xpose.msra.mxu0 %v1265
    %1269 = vmatprep.subr.mxu0 0.0
    %1270 = vmatpush1.xpose.msra.mxu0 0.0
    %1271 = vmatprep.subr.mxu0 0.0
    %1272 = vmatpush1.xpose.msra.mxu0 0.0
    %1273 = vmatprep.subr.mxu0 0.0
    %1274 = vmatpush1.xpose.msra.mxu0 0.0
    %1275 = vmatprep.subr.mxu0 0.0
    %1276 = vmatpush1.xpose.msra.mxu0 0.0
    %1277 = vmatprep.subr.mxu0 0.0
    %1278 = vmatpush1.xpose.msra.mxu0 0.0
    %1279 = vmatprep.subr.mxu0 0.0
    %1280 = vmatpush1.xpose.msra.mxu0 0.0
    %1281 = vmatprep.subr.mxu0 0.0
    %1282 = vmatpush1.xpose.msra.mxu0 0.0
    %1283 = vmatprep.subr.mxu0 0.0
    %1284 = vmatpush1.xpose.msra.mxu0 0.0
    %1285 = vmatprep.subr.mxu0 0.0
    %1286 = vmatpush1.xpose.msra.mxu0 0.0
    %1287 = vmatprep.subr.mxu0 0.0
    %1288 = vmatpush1.xpose.msra.mxu0 0.0
    %1289 = vmatprep.subr.mxu0 0.0
    %1290 = vmatpush1.xpose.msra.mxu0 0.0
    %1291 = vmatprep.subr.mxu0 0.0
    %1292 = vmatpush1.xpose.msra.mxu0 0.0
    %1293 = vmatprep.subr.mxu0 0.0
    %1294 = vmatpush1.xpose.msra.mxu0 0.0
    %1295 = vmatprep.subr.mxu0 0.0
    %1296 = vmatpush1.xpose.msra.mxu0 0.0
    %1297 = vmatprep.subr.mxu0 0.0
    %1298 = vmatpush1.xpose.msra.mxu0 0.0
    %1299 = vmatprep.subr.mxu0 0.0
    %1300 = vmatpush1.xpose.msra.mxu0 0.0
    %1301 = vmatprep.subr.mxu0 0.0
    %1302 = vmatpush1.xpose.msra.mxu0 0.0
    %1303 = vmatprep.subr.mxu0 0.0
    %1304 = vmatpush1.xpose.msra.mxu0 0.0
    %1305 = vmatprep.subr.mxu0 0.0
    %1306 = vmatpush1.xpose.msra.mxu0 0.0
    %1307 = vmatprep.subr.mxu0 0.0
    %1308 = vmatpush1.xpose.msra.mxu0 0.0
    %1309 = vmatprep.subr.mxu0 0.0
    %1310 = vmatpush1.xpose.msra.mxu0 0.0
    %1311 = vmatprep.subr.mxu0 0.0
    %1312 = vmatpush1.xpose.msra.mxu0 0.0
    %1313 = vmatprep.subr.mxu0 0.0
    %1314 = vmatpush1.xpose.msra.mxu0 0.0
    %1315 = vmatprep.subr.mxu0 0.0
    %1316 = vmatpush1.xpose.msra.mxu0 0.0
    %1317 = vmatprep.subr.mxu0 0.0
    %1318 = vmatpush1.xpose.msra.mxu0 0.0
    %1319 = vmatprep.subr.mxu0 0.0
    %1320 = vmatpush1.xpose.msra.mxu0 0.0
    %1321 = vmatprep.subr.mxu0 0.0
    %1322 = vmatpush1.xpose.msra.mxu0 0.0
    %1323 = vmatprep.subr.mxu0 0.0
    %1324 = vmatpush1.xpose.msra.mxu0 0.0
    %1325 = vmatprep.subr.mxu0 0.0
    %1326 = vmatpush1.xpose.msra.mxu0 0.0
    %1327 = vmatprep.subr.mxu0 0.0
    %1328 = vmatpush1.xpose.msra.mxu0 0.0
    %1329 = vmatprep.subr.mxu0 0.0
    %1330 = vmatpush1.xpose.msra.mxu0 0.0
    %1331 = vmatprep.mubr.f32.mxu0 0.0
    %1332 = vmatmul.mubr.f32.gmra.mrb[0].mxu0 %v1262
    %v1333 = vpop.f32.mrb[0].mxu0
    %v1334 = vadd.f32 0.0, %v1333
    %v1335 = vpop.f32.mrb[0].mxu0
    %1336 = vdwg.mxu0
    %v1338 = vsel %vm1032, %v370, 0
    %v1341 = vsel %vm1032, %v666, 0
    %1343 = vmatprep.subr.mxu0 0.0
    %1344 = vmatpush1.xpose.msra.mxu0 %v1341
    %1345 = vmatprep.subr.mxu0 0.0
    %1346 = vmatpush1.xpose.msra.mxu0 0.0
    %1347 = vmatprep.subr.mxu0 0.0
    %1348 = vmatpush1.xpose.msra.mxu0 0.0
    %1349 = vmatprep.subr.mxu0 0.0
    %1350 = vmatpush1.xpose.msra.mxu0 0.0
    %1351 = vmatprep.subr.mxu0 0.0
    %1352 = vmatpush1.xpose.msra.mxu0 0.0
    %1353 = vmatprep.subr.mxu0 0.0
    %1354 = vmatpush1.xpose.msra.mxu0 0.0
    %1355 = vmatprep.subr.mxu0 0.0
    %1356 = vmatpush1.xpose.msra.mxu0 0.0
    %1357 = vmatprep.subr.mxu0 0.0
    %1358 = vmatpush1.xpose.msra.mxu0 0.0
    %1359 = vmatprep.subr.mxu0 0.0
    %1360 = vmatpush1.xpose.msra.mxu0 0.0
    %1361 = vmatprep.subr.mxu0 0.0
    %1362 = vmatpush1.xpose.msra.mxu0 0.0
    %1363 = vmatprep.subr.mxu0 0.0
    %1364 = vmatpush1.xpose.msra.mxu0 0.0
    %1365 = vmatprep.subr.mxu0 0.0
    %1366 = vmatpush1.xpose.msra.mxu0 0.0
    %1367 = vmatprep.subr.mxu0 0.0
    %1368 = vmatpush1.xpose.msra.mxu0 0.0
    %1369 = vmatprep.subr.mxu0 0.0
    %1370 = vmatpush1.xpose.msra.mxu0 0.0
    %1371 = vmatprep.subr.mxu0 0.0
    %1372 = vmatpush1.xpose.msra.mxu0 0.0
    %1373 = vmatprep.subr.mxu0 0.0
    %1374 = vmatpush1.xpose.msra.mxu0 0.0
    %1375 = vmatprep.subr.mxu0 0.0
    %1376 = vmatpush1.xpose.msra.mxu0 0.0
    %1377 = vmatprep.subr.mxu0 0.0
    %1378 = vmatpush1.xpose.msra.mxu0 0.0
    %1379 = vmatprep.subr.mxu0 0.0
    %1380 = vmatpush1.xpose.msra.mxu0 0.0
    %1381 = vmatprep.subr.mxu0 0.0
    %1382 = vmatpush1.xpose.msra.mxu0 0.0
    %1383 = vmatprep.subr.mxu0 0.0
    %1384 = vmatpush1.xpose.msra.mxu0 0.0
    %1385 = vmatprep.subr.mxu0 0.0
    %1386 = vmatpush1.xpose.msra.mxu0 0.0
    %1387 = vmatprep.subr.mxu0 0.0
    %1388 = vmatpush1.xpose.msra.mxu0 0.0
    %1389 = vmatprep.subr.mxu0 0.0
    %1390 = vmatpush1.xpose.msra.mxu0 0.0
    %1391 = vmatprep.subr.mxu0 0.0
    %1392 = vmatpush1.xpose.msra.mxu0 0.0
    %1393 = vmatprep.subr.mxu0 0.0
    %1394 = vmatpush1.xpose.msra.mxu0 0.0
    %1395 = vmatprep.subr.mxu0 0.0
    %1396 = vmatpush1.xpose.msra.mxu0 0.0
    %1397 = vmatprep.subr.mxu0 0.0
    %1398 = vmatpush1.xpose.msra.mxu0 0.0
    %1399 = vmatprep.subr.mxu0 0.0
    %1400 = vmatpush1.xpose.msra.mxu0 0.0
    %1401 = vmatprep.subr.mxu0 0.0
    %1402 = vmatpush1.xpose.msra.mxu0 0.0
    %1403 = vmatprep.subr.mxu0 0.0
    %1404 = vmatpush1.xpose.msra.mxu0 0.0
    %1405 = vmatprep.subr.mxu0 0.0
    %1406 = vmatpush1.xpose.msra.mxu0 0.0
    %1407 = vmatprep.mubr.f32.mxu0 0.0
    %1408 = vmatmul.mubr.f32.gmra.mrb[0].mxu0 %v1338
    %v1409 = vpop.f32.mrb[0].mxu0
    %v1410 = vadd.f32 0.0, %v1409
    %v1411 = vpop.f32.mrb[0].mxu0
    %1412 = vdwg.mxu0
    %v1414 = vsel %vm1032, %v438, 0
    %v1417 = vsel %vm1032, %v734, 0
    %1419 = vmatprep.subr.mxu0 0.0
    %1420 = vmatpush1.xpose.msra.mxu0 %v1417
    %1421 = vmatprep.subr.mxu0 0.0
    %1422 = vmatpush1.xpose.msra.mxu0 0.0
    %1423 = vmatprep.subr.mxu0 0.0
    %1424 = vmatpush1.xpose.msra.mxu0 0.0
    %1425 = vmatprep.subr.mxu0 0.0
    %1426 = vmatpush1.xpose.msra.mxu0 0.0
    %1427 = vmatprep.subr.mxu0 0.0
    %1428 = vmatpush1.xpose.msra.mxu0 0.0
    %1429 = vmatprep.subr.mxu0 0.0
    %1430 = vmatpush1.xpose.msra.mxu0 0.0
    %1431 = vmatprep.subr.mxu0 0.0
    %1432 = vmatpush1.xpose.msra.mxu0 0.0
    %1433 = vmatprep.subr.mxu0 0.0
    %1434 = vmatpush1.xpose.msra.mxu0 0.0
    %1435 = vmatprep.subr.mxu0 0.0
    %1436 = vmatpush1.xpose.msra.mxu0 0.0
    %1437 = vmatprep.subr.mxu0 0.0
    %1438 = vmatpush1.xpose.msra.mxu0 0.0
    %1439 = vmatprep.subr.mxu0 0.0
    %1440 = vmatpush1.xpose.msra.mxu0 0.0
    %1441 = vmatprep.subr.mxu0 0.0
    %1442 = vmatpush1.xpose.msra.mxu0 0.0
    %1443 = vmatprep.subr.mxu0 0.0
    %1444 = vmatpush1.xpose.msra.mxu0 0.0
    %1445 = vmatprep.subr.mxu0 0.0
    %1446 = vmatpush1.xpose.msra.mxu0 0.0
    %1447 = vmatprep.subr.mxu0 0.0
    %1448 = vmatpush1.xpose.msra.mxu0 0.0
    %1449 = vmatprep.subr.mxu0 0.0
    %1450 = vmatpush1.xpose.msra.mxu0 0.0
    %1451 = vmatprep.subr.mxu0 0.0
    %1452 = vmatpush1.xpose.msra.mxu0 0.0
    %1453 = vmatprep.subr.mxu0 0.0
    %1454 = vmatpush1.xpose.msra.mxu0 0.0
    %1455 = vmatprep.subr.mxu0 0.0
    %1456 = vmatpush1.xpose.msra.mxu0 0.0
    %1457 = vmatprep.subr.mxu0 0.0
    %1458 = vmatpush1.xpose.msra.mxu0 0.0
    %1459 = vmatprep.subr.mxu0 0.0
    %1460 = vmatpush1.xpose.msra.mxu0 0.0
    %1461 = vmatprep.subr.mxu0 0.0
    %1462 = vmatpush1.xpose.msra.mxu0 0.0
    %1463 = vmatprep.subr.mxu0 0.0
    %1464 = vmatpush1.xpose.msra.mxu0 0.0
    %1465 = vmatprep.subr.mxu0 0.0
    %1466 = vmatpush1.xpose.msra.mxu0 0.0
    %1467 = vmatprep.subr.mxu0 0.0
    %1468 = vmatpush1.xpose.msra.mxu0 0.0
    %1469 = vmatprep.subr.mxu0 0.0
    %1470 = vmatpush1.xpose.msra.mxu0 0.0
    %1471 = vmatprep.subr.mxu0 0.0
    %1472 = vmatpush1.xpose.msra.mxu0 0.0
    %1473 = vmatprep.subr.mxu0 0.0
    %1474 = vmatpush1.xpose.msra.mxu0 0.0
    %1475 = vmatprep.subr.mxu0 0.0
    %1476 = vmatpush1.xpose.msra.mxu0 0.0
    %1477 = vmatprep.subr.mxu0 0.0
    %1478 = vmatpush1.xpose.msra.mxu0 0.0
    %1479 = vmatprep.subr.mxu0 0.0
    %1480 = vmatpush1.xpose.msra.mxu0 0.0
    %1481 = vmatprep.subr.mxu0 0.0
    %1482 = vmatpush1.xpose.msra.mxu0 0.0
    %1483 = vmatprep.mubr.f32.mxu0 0.0
    %1484 = vmatmul.mubr.f32.gmra.mrb[0].mxu0 %v1414
    %v1485 = vpop.f32.mrb[0].mxu0
    %v1486 = vadd.f32 0.0, %v1485
    %v1487 = vpop.f32.mrb[0].mxu0
    %1488 = vdwg.mxu0
    %v1490 = vsel %vm1032, %v371, 0
    %v1493 = vsel %vm1032, %v667, 0
    %1495 = vmatprep.subr.mxu0 0.0
    %1496 = vmatpush1.xpose.msra.mxu0 %v1493
    %1497 = vmatprep.subr.mxu0 0.0
    %1498 = vmatpush1.xpose.msra.mxu0 0.0
    %1499 = vmatprep.subr.mxu0 0.0
    %1500 = vmatpush1.xpose.msra.mxu0 0.0
    %1501 = vmatprep.subr.mxu0 0.0
    %1502 = vmatpush1.xpose.msra.mxu0 0.0
    %1503 = vmatprep.subr.mxu0 0.0
    %1504 = vmatpush1.xpose.msra.mxu0 0.0
    %1505 = vmatprep.subr.mxu0 0.0
    %1506 = vmatpush1.xpose.msra.mxu0 0.0
    %1507 = vmatprep.subr.mxu0 0.0
    %1508 = vmatpush1.xpose.msra.mxu0 0.0
    %1509 = vmatprep.subr.mxu0 0.0
    %1510 = vmatpush1.xpose.msra.mxu0 0.0
    %1511 = vmatprep.subr.mxu0 0.0
    %1512 = vmatpush1.xpose.msra.mxu0 0.0
    %1513 = vmatprep.subr.mxu0 0.0
    %1514 = vmatpush1.xpose.msra.mxu0 0.0
    %1515 = vmatprep.subr.mxu0 0.0
    %1516 = vmatpush1.xpose.msra.mxu0 0.0
    %1517 = vmatprep.subr.mxu0 0.0
    %1518 = vmatpush1.xpose.msra.mxu0 0.0
    %1519 = vmatprep.subr.mxu0 0.0
    %1520 = vmatpush1.xpose.msra.mxu0 0.0
    %1521 = vmatprep.subr.mxu0 0.0
    %1522 = vmatpush1.xpose.msra.mxu0 0.0
    %1523 = vmatprep.subr.mxu0 0.0
    %1524 = vmatpush1.xpose.msra.mxu0 0.0
    %1525 = vmatprep.subr.mxu0 0.0
    %1526 = vmatpush1.xpose.msra.mxu0 0.0
    %1527 = vmatprep.subr.mxu0 0.0
    %1528 = vmatpush1.xpose.msra.mxu0 0.0
    %1529 = vmatprep.subr.mxu0 0.0
    %1530 = vmatpush1.xpose.msra.mxu0 0.0
    %1531 = vmatprep.subr.mxu0 0.0
    %1532 = vmatpush1.xpose.msra.mxu0 0.0
    %1533 = vmatprep.subr.mxu0 0.0
    %1534 = vmatpush1.xpose.msra.mxu0 0.0
    %1535 = vmatprep.subr.mxu0 0.0
    %1536 = vmatpush1.xpose.msra.mxu0 0.0
    %1537 = vmatprep.subr.mxu0 0.0
    %1538 = vmatpush1.xpose.msra.mxu0 0.0
    %1539 = vmatprep.subr.mxu0 0.0
    %1540 = vmatpush1.xpose.msra.mxu0 0.0
    %1541 = vmatprep.subr.mxu0 0.0
    %1542 = vmatpush1.xpose.msra.mxu0 0.0
    %1543 = vmatprep.subr.mxu0 0.0
    %1544 = vmatpush1.xpose.msra.mxu0 0.0
    %1545 = vmatprep.subr.mxu0 0.0
    %1546 = vmatpush1.xpose.msra.mxu0 0.0
    %1547 = vmatprep.subr.mxu0 0.0
    %1548 = vmatpush1.xpose.msra.mxu0 0.0
    %1549 = vmatprep.subr.mxu0 0.0
    %1550 = vmatpush1.xpose.msra.mxu0 0.0
    %1551 = vmatprep.subr.mxu0 0.0
    %1552 = vmatpush1.xpose.msra.mxu0 0.0
    %1553 = vmatprep.subr.mxu0 0.0
    %1554 = vmatpush1.xpose.msra.mxu0 0.0
    %1555 = vmatprep.subr.mxu0 0.0
    %1556 = vmatpush1.xpose.msra.mxu0 0.0
    %1557 = vmatprep.subr.mxu0 0.0
    %1558 = vmatpush1.xpose.msra.mxu0 0.0
    %1559 = vmatprep.mubr.f32.mxu0 0.0
    %1560 = vmatmul.mubr.f32.gmra.mrb[0].mxu0 %v1490
    %v1561 = vpop.f32.mrb[0].mxu0
    %v1562 = vadd.f32 0.0, %v1561
    %v1563 = vpop.f32.mrb[0].mxu0
    %1564 = vdwg.mxu0
    %v1566 = vsel %vm1032, %v439, 0
    %v1569 = vsel %vm1032, %v735, 0
    %1571 = vmatprep.subr.mxu0 0.0
    %1572 = vmatpush1.xpose.msra.mxu0 %v1569
    %1573 = vmatprep.subr.mxu0 0.0
    %1574 = vmatpush1.xpose.msra.mxu0 0.0
    %1575 = vmatprep.subr.mxu0 0.0
    %1576 = vmatpush1.xpose.msra.mxu0 0.0
    %1577 = vmatprep.subr.mxu0 0.0
    %1578 = vmatpush1.xpose.msra.mxu0 0.0
    %1579 = vmatprep.subr.mxu0 0.0
    %1580 = vmatpush1.xpose.msra.mxu0 0.0
    %1581 = vmatprep.subr.mxu0 0.0
    %1582 = vmatpush1.xpose.msra.mxu0 0.0
    %1583 = vmatprep.subr.mxu0 0.0
    %1584 = vmatpush1.xpose.msra.mxu0 0.0
    %1585 = vmatprep.subr.mxu0 0.0
    %1586 = vmatpush1.xpose.msra.mxu0 0.0
    %1587 = vmatprep.subr.mxu0 0.0
    %1588 = vmatpush1.xpose.msra.mxu0 0.0
    %1589 = vmatprep.subr.mxu0 0.0
    %1590 = vmatpush1.xpose.msra.mxu0 0.0
    %1591 = vmatprep.subr.mxu0 0.0
    %1592 = vmatpush1.xpose.msra.mxu0 0.0
    %1593 = vmatprep.subr.mxu0 0.0
    %1594 = vmatpush1.xpose.msra.mxu0 0.0
    %1595 = vmatprep.subr.mxu0 0.0
    %1596 = vmatpush1.xpose.msra.mxu0 0.0
    %1597 = vmatprep.subr.mxu0 0.0
    %1598 = vmatpush1.xpose.msra.mxu0 0.0
    %1599 = vmatprep.subr.mxu0 0.0
    %1600 = vmatpush1.xpose.msra.mxu0 0.0
    %1601 = vmatprep.subr.mxu0 0.0
    %1602 = vmatpush1.xpose.msra.mxu0 0.0
    %1603 = vmatprep.subr.mxu0 0.0
    %1604 = vmatpush1.xpose.msra.mxu0 0.0
    %1605 = vmatprep.subr.mxu0 0.0
    %1606 = vmatpush1.xpose.msra.mxu0 0.0
    %1607 = vmatprep.subr.mxu0 0.0
    %1608 = vmatpush1.xpose.msra.mxu0 0.0
    %1609 = vmatprep.subr.mxu0 0.0
    %1610 = vmatpush1.xpose.msra.mxu0 0.0
    %1611 = vmatprep.subr.mxu0 0.0
    %1612 = vmatpush1.xpose.msra.mxu0 0.0
    %1613 = vmatprep.subr.mxu0 0.0
    %1614 = vmatpush1.xpose.msra.mxu0 0.0
    %1615 = vmatprep.subr.mxu0 0.0
    %1616 = vmatpush1.xpose.msra.mxu0 0.0
    %1617 = vmatprep.subr.mxu0 0.0
    %1618 = vmatpush1.xpose.msra.mxu0 0.0
    %1619 = vmatprep.subr.mxu0 0.0
    %1620 = vmatpush1.xpose.msra.mxu0 0.0
    %1621 = vmatprep.subr.mxu0 0.0
    %1622 = vmatpush1.xpose.msra.mxu0 0.0
    %1623 = vmatprep.subr.mxu0 0.0
    %1624 = vmatpush1.xpose.msra.mxu0 0.0
    %1625 = vmatprep.subr.mxu0 0.0
    %1626 = vmatpush1.xpose.msra.mxu0 0.0
    %1627 = vmatprep.subr.mxu0 0.0
    %1628 = vmatpush1.xpose.msra.mxu0 0.0
    %1629 = vmatprep.subr.mxu0 0.0
    %1630 = vmatpush1.xpose.msra.mxu0 0.0
    %1631 = vmatprep.subr.mxu0 0.0
    %1632 = vmatpush1.xpose.msra.mxu0 0.0
    %1633 = vmatprep.subr.mxu0 0.0
    %1634 = vmatpush1.xpose.msra.mxu0 0.0
    %1635 = vmatprep.mubr.f32.mxu0 0.0
    %1636 = vmatmul.mubr.f32.gmra.mrb[0].mxu0 %v1566
    %v1637 = vpop.f32.mrb[0].mxu0
    %v1638 = vadd.f32 0.0, %v1637
    %v1639 = vpop.f32.mrb[0].mxu0
    %1640 = vdwg.mxu0
    %v1641 = vsel %vm1032, %v1106, -inf
    %1642 = vmax.xlane.f32.xlu0 %v1641
    %v1643 = vpop.xlane.xlu0 %1642
    %v1644 = vsel %vm1032, %v1182, -inf
    %1645 = vmax.xlane.f32.xlu0 %v1644
    %v1646 = vpop.xlane.xlu0 %1645
    %v1647 = vsel %vm1032, %v1258, -inf
    %1648 = vmax.xlane.f32.xlu0 %v1647
    %v1649 = vpop.xlane.xlu0 %1648
    %v1650 = vsel %vm1032, %v1334, -inf
    %1651 = vmax.xlane.f32.xlu0 %v1650
    %v1652 = vpop.xlane.xlu0 %1651
    %v1653 = vsel %vm1032, %v1410, -inf
    %1654 = vmax.xlane.f32.xlu0 %v1653
    %v1655 = vpop.xlane.xlu0 %1654
    %v1656 = vsel %vm1032, %v1486, -inf
    %1657 = vmax.xlane.f32.xlu0 %v1656
    %v1658 = vpop.xlane.xlu0 %1657
    %v1659 = vsel %vm1032, %v1562, -inf
    %1660 = vmax.xlane.f32.xlu0 %v1659
    %v1661 = vpop.xlane.xlu0 %1660
    %v1662 = vsel %vm1032, %v1638, -inf
    %1663 = vmax.xlane.f32.xlu0 %v1662
    %v1664 = vpop.xlane.xlu0 %1663
    %v1665 = vsub.f32 %v1106, %v1643
    %v1666 = vsub.f32 %v1182, %v1646
    %v1667 = vsub.f32 %v1258, %v1649
    %v1668 = vsub.f32 %v1334, %v1652
    %v1669 = vsub.f32 %v1410, %v1655
    %v1670 = vsub.f32 %v1486, %v1658
    %v1671 = vsub.f32 %v1562, %v1661
    %v1672 = vsub.f32 %v1638, %v1664
    %v1673 = vmul.f32 %v1665, 1.442695
    %v1674 = vpow.pop %v1673
    %v1675 = vmul.f32 %v1666, 1.442695
    %v1676 = vpow.pop %v1675
    %v1677 = vmul.f32 %v1667, 1.442695
    %v1678 = vpow.pop %v1677
    %v1679 = vmul.f32 %v1668, 1.442695
    %v1680 = vpow.pop %v1679
    %v1681 = vmul.f32 %v1669, 1.442695
    %v1682 = vpow.pop %v1681
    %v1683 = vmul.f32 %v1670, 1.442695
    %v1684 = vpow.pop %v1683
    %v1685 = vmul.f32 %v1671, 1.442695
    %v1686 = vpow.pop %v1685
    %v1687 = vmul.f32 %v1672, 1.442695
    %v1688 = vpow.pop %v1687
    %v1689 = vsel %vm1032, %v1674, 0.0
    %1690 = vadd.xlane.f32.xlu0 %v1689
    %v1691 = vpop.xlane.xlu0 %1690
    %v1692 = vsel %vm1032, %v1676, 0.0
    %1693 = vadd.xlane.f32.xlu0 %v1692
    %v1694 = vpop.xlane.xlu0 %1693
    %v1695 = vsel %vm1032, %v1678, 0.0
    %1696 = vadd.xlane.f32.xlu0 %v1695
    %v1697 = vpop.xlane.xlu0 %1696
    %v1698 = vsel %vm1032, %v1680, 0.0
    %1699 = vadd.xlane.f32.xlu0 %v1698
    %v1700 = vpop.xlane.xlu0 %1699
    %v1701 = vsel %vm1032, %v1682, 0.0
    %1702 = vadd.xlane.f32.xlu0 %v1701
    %v1703 = vpop.xlane.xlu0 %1702
    %v1704 = vsel %vm1032, %v1684, 0.0
    %1705 = vadd.xlane.f32.xlu0 %v1704
    %v1706 = vpop.xlane.xlu0 %1705
    %v1707 = vsel %vm1032, %v1686, 0.0
    %1708 = vadd.xlane.f32.xlu0 %v1707
    %v1709 = vpop.xlane.xlu0 %1708
    %v1710 = vsel %vm1032, %v1688, 0.0
    %1711 = vadd.xlane.f32.xlu0 %v1710
    %v1712 = vpop.xlane.xlu0 %1711
    %v1713 = vrcp.pop %v1691
    %v1714 = vrcp.pop %v1694
    %v1715 = vrcp.pop %v1697
    %v1716 = vrcp.pop %v1700
    %v1717 = vrcp.pop %v1703
    %v1718 = vrcp.pop %v1706
    %v1719 = vrcp.pop %v1709
    %v1720 = vrcp.pop %v1712
    %v1721 = vmul.f32 %v1674, %v1713
    %v1722 = vmul.f32 %v1676, %v1714
    %v1723 = vmul.f32 %v1678, %v1715
    %v1724 = vmul.f32 %v1680, %v1716
    %v1725 = vmul.f32 %v1682, %v1717
    %v1726 = vmul.f32 %v1684, %v1718
    %v1727 = vmul.f32 %v1686, %v1719
    %v1728 = vmul.f32 %v1688, %v1720
    %v1730 = vsel %vm1032, %v1721, 0
    %1732 = vmatprep.subr.mxu0 0.0
    %1733 = vmatpush1.msra.mxu0 %v960
    %1734 = vmatprep.subr.mxu0 0.0
    %1735 = vmatpush1.msra.mxu0 0.0
    %1736 = vmatprep.subr.mxu0 0.0
    %1737 = vmatpush1.msra.mxu0 0.0
    %1738 = vmatprep.subr.mxu0 0.0
    %1739 = vmatpush1.msra.mxu0 0.0
    %1740 = vmatprep.subr.mxu0 0.0
    %1741 = vmatpush1.msra.mxu0 0.0
    %1742 = vmatprep.subr.mxu0 0.0
    %1743 = vmatpush1.msra.mxu0 0.0
    %1744 = vmatprep.subr.mxu0 0.0
    %1745 = vmatpush1.msra.mxu0 0.0
    %1746 = vmatprep.subr.mxu0 0.0
    %1747 = vmatpush1.msra.mxu0 0.0
    %1748 = vmatprep.subr.mxu0 0.0
    %1749 = vmatpush1.msra.mxu0 0.0
    %1750 = vmatprep.subr.mxu0 0.0
    %1751 = vmatpush1.msra.mxu0 0.0
    %1752 = vmatprep.subr.mxu0 0.0
    %1753 = vmatpush1.msra.mxu0 0.0
    %1754 = vmatprep.subr.mxu0 0.0
    %1755 = vmatpush1.msra.mxu0 0.0
    %1756 = vmatprep.subr.mxu0 0.0
    %1757 = vmatpush1.msra.mxu0 0.0
    %1758 = vmatprep.subr.mxu0 0.0
    %1759 = vmatpush1.msra.mxu0 0.0
    %1760 = vmatprep.subr.mxu0 0.0
    %1761 = vmatpush1.msra.mxu0 0.0
    %1762 = vmatprep.subr.mxu0 0.0
    %1763 = vmatpush1.msra.mxu0 0.0
    %1764 = vmatprep.subr.mxu0 0.0
    %1765 = vmatpush1.msra.mxu0 0.0
    %1766 = vmatprep.subr.mxu0 0.0
    %1767 = vmatpush1.msra.mxu0 0.0
    %1768 = vmatprep.subr.mxu0 0.0
    %1769 = vmatpush1.msra.mxu0 0.0
    %1770 = vmatprep.subr.mxu0 0.0
    %1771 = vmatpush1.msra.mxu0 0.0
    %1772 = vmatprep.subr.mxu0 0.0
    %1773 = vmatpush1.msra.mxu0 0.0
    %1774 = vmatprep.subr.mxu0 0.0
    %1775 = vmatpush1.msra.mxu0 0.0
    %1776 = vmatprep.subr.mxu0 0.0
    %1777 = vmatpush1.msra.mxu0 0.0
    %1778 = vmatprep.subr.mxu0 0.0
    %1779 = vmatpush1.msra.mxu0 0.0
    %1780 = vmatprep.subr.mxu0 0.0
    %1781 = vmatpush1.msra.mxu0 0.0
    %1782 = vmatprep.subr.mxu0 0.0
    %1783 = vmatpush1.msra.mxu0 0.0
    %1784 = vmatprep.subr.mxu0 0.0
    %1785 = vmatpush1.msra.mxu0 0.0
    %1786 = vmatprep.subr.mxu0 0.0
    %1787 = vmatpush1.msra.mxu0 0.0
    %1788 = vmatprep.subr.mxu0 0.0
    %1789 = vmatpush1.msra.mxu0 0.0
    %1790 = vmatprep.subr.mxu0 0.0
    %1791 = vmatpush1.msra.mxu0 0.0
    %1792 = vmatprep.subr.mxu0 0.0
    %1793 = vmatpush1.msra.mxu0 0.0
    %1794 = vmatprep.subr.mxu0 0.0
    %1795 = vmatpush1.msra.mxu0 0.0
    %1796 = vmatprep.mubr.f32.mxu0 0.0
    %1797 = vmatmul.mubr.f32.gmra.mrb[0].mxu0 %v1730
    %v1798 = vpop.f32.mrb[0].mxu0
    %v1799 = vadd.f32 0.0, %v1798
    %v1800 = vpop.f32.mrb[0].mxu0
    %1801 = vdwg.mxu0
    %v1803 = vsel %vm1032, %v1722, 0
    %1805 = vmatprep.subr.mxu0 0.0
    %1806 = vmatpush1.msra.mxu0 %v1028
    %1807 = vmatprep.subr.mxu0 0.0
    %1808 = vmatpush1.msra.mxu0 0.0
    %1809 = vmatprep.subr.mxu0 0.0
    %1810 = vmatpush1.msra.mxu0 0.0
    %1811 = vmatprep.subr.mxu0 0.0
    %1812 = vmatpush1.msra.mxu0 0.0
    %1813 = vmatprep.subr.mxu0 0.0
    %1814 = vmatpush1.msra.mxu0 0.0
    %1815 = vmatprep.subr.mxu0 0.0
    %1816 = vmatpush1.msra.mxu0 0.0
    %1817 = vmatprep.subr.mxu0 0.0
    %1818 = vmatpush1.msra.mxu0 0.0
    %1819 = vmatprep.subr.mxu0 0.0
    %1820 = vmatpush1.msra.mxu0 0.0
    %1821 = vmatprep.subr.mxu0 0.0
    %1822 = vmatpush1.msra.mxu0 0.0
    %1823 = vmatprep.subr.mxu0 0.0
    %1824 = vmatpush1.msra.mxu0 0.0
    %1825 = vmatprep.subr.mxu0 0.0
    %1826 = vmatpush1.msra.mxu0 0.0
    %1827 = vmatprep.subr.mxu0 0.0
    %1828 = vmatpush1.msra.mxu0 0.0
    %1829 = vmatprep.subr.mxu0 0.0
    %1830 = vmatpush1.msra.mxu0 0.0
    %1831 = vmatprep.subr.mxu0 0.0
    %1832 = vmatpush1.msra.mxu0 0.0
    %1833 = vmatprep.subr.mxu0 0.0
    %1834 = vmatpush1.msra.mxu0 0.0
    %1835 = vmatprep.subr.mxu0 0.0
    %1836 = vmatpush1.msra.mxu0 0.0
    %1837 = vmatprep.subr.mxu0 0.0
    %1838 = vmatpush1.msra.mxu0 0.0
    %1839 = vmatprep.subr.mxu0 0.0
    %1840 = vmatpush1.msra.mxu0 0.0
    %1841 = vmatprep.subr.mxu0 0.0
    %1842 = vmatpush1.msra.mxu0 0.0
    %1843 = vmatprep.subr.mxu0 0.0
    %1844 = vmatpush1.msra.mxu0 0.0
    %1845 = vmatprep.subr.mxu0 0.0
    %1846 = vmatpush1.msra.mxu0 0.0
    %1847 = vmatprep.subr.mxu0 0.0
    %1848 = vmatpush1.msra.mxu0 0.0
    %1849 = vmatprep.subr.mxu0 0.0
    %1850 = vmatpush1.msra.mxu0 0.0
    %1851 = vmatprep.subr.mxu0 0.0
    %1852 = vmatpush1.msra.mxu0 0.0
    %1853 = vmatprep.subr.mxu0 0.0
    %1854 = vmatpush1.msra.mxu0 0.0
    %1855 = vmatprep.subr.mxu0 0.0
    %1856 = vmatpush1.msra.mxu0 0.0
    %1857 = vmatprep.subr.mxu0 0.0
    %1858 = vmatpush1.msra.mxu0 0.0
    %1859 = vmatprep.subr.mxu0 0.0
    %1860 = vmatpush1.msra.mxu0 0.0
    %1861 = vmatprep.subr.mxu0 0.0
    %1862 = vmatpush1.msra.mxu0 0.0
    %1863 = vmatprep.subr.mxu0 0.0
    %1864 = vmatpush1.msra.mxu0 0.0
    %1865 = vmatprep.subr.mxu0 0.0
    %1866 = vmatpush1.msra.mxu0 0.0
    %1867 = vmatprep.subr.mxu0 0.0
    %1868 = vmatpush1.msra.mxu0 0.0
    %1869 = vmatprep.mubr.f32.mxu0 0.0
    %1870 = vmatmul.mubr.f32.gmra.mrb[0].mxu0 %v1803
    %v1871 = vpop.f32.mrb[0].mxu0
    %v1872 = vadd.f32 0.0, %v1871
    %v1873 = vpop.f32.mrb[0].mxu0
    %1874 = vdwg.mxu0
    %v1876 = vsel %vm1032, %v1723, 0
    %1878 = vmatprep.subr.mxu0 0.0
    %1879 = vmatpush1.msra.mxu0 %v961
    %1880 = vmatprep.subr.mxu0 0.0
    %1881 = vmatpush1.msra.mxu0 0.0
    %1882 = vmatprep.subr.mxu0 0.0
    %1883 = vmatpush1.msra.mxu0 0.0
    %1884 = vmatprep.subr.mxu0 0.0
    %1885 = vmatpush1.msra.mxu0 0.0
    %1886 = vmatprep.subr.mxu0 0.0
    %1887 = vmatpush1.msra.mxu0 0.0
    %1888 = vmatprep.subr.mxu0 0.0
    %1889 = vmatpush1.msra.mxu0 0.0
    %1890 = vmatprep.subr.mxu0 0.0
    %1891 = vmatpush1.msra.mxu0 0.0
    %1892 = vmatprep.subr.mxu0 0.0
    %1893 = vmatpush1.msra.mxu0 0.0
    %1894 = vmatprep.subr.mxu0 0.0
    %1895 = vmatpush1.msra.mxu0 0.0
    %1896 = vmatprep.subr.mxu0 0.0
    %1897 = vmatpush1.msra.mxu0 0.0
    %1898 = vmatprep.subr.mxu0 0.0
    %1899 = vmatpush1.msra.mxu0 0.0
    %1900 = vmatprep.subr.mxu0 0.0
    %1901 = vmatpush1.msra.mxu0 0.0
    %1902 = vmatprep.subr.mxu0 0.0
    %1903 = vmatpush1.msra.mxu0 0.0
    %1904 = vmatprep.subr.mxu0 0.0
    %1905 = vmatpush1.msra.mxu0 0.0
    %1906 = vmatprep.subr.mxu0 0.0
    %1907 = vmatpush1.msra.mxu0 0.0
    %1908 = vmatprep.subr.mxu0 0.0
    %1909 = vmatpush1.msra.mxu0 0.0
    %1910 = vmatprep.subr.mxu0 0.0
    %1911 = vmatpush1.msra.mxu0 0.0
    %1912 = vmatprep.subr.mxu0 0.0
    %1913 = vmatpush1.msra.mxu0 0.0
    %1914 = vmatprep.subr.mxu0 0.0
    %1915 = vmatpush1.msra.mxu0 0.0
    %1916 = vmatprep.subr.mxu0 0.0
    %1917 = vmatpush1.msra.mxu0 0.0
    %1918 = vmatprep.subr.mxu0 0.0
    %1919 = vmatpush1.msra.mxu0 0.0
    %1920 = vmatprep.subr.mxu0 0.0
    %1921 = vmatpush1.msra.mxu0 0.0
    %1922 = vmatprep.subr.mxu0 0.0
    %1923 = vmatpush1.msra.mxu0 0.0
    %1924 = vmatprep.subr.mxu0 0.0
    %1925 = vmatpush1.msra.mxu0 0.0
    %1926 = vmatprep.subr.mxu0 0.0
    %1927 = vmatpush1.msra.mxu0 0.0
    %1928 = vmatprep.subr.mxu0 0.0
    %1929 = vmatpush1.msra.mxu0 0.0
    %1930 = vmatprep.subr.mxu0 0.0
    %1931 = vmatpush1.msra.mxu0 0.0
    %1932 = vmatprep.subr.mxu0 0.0
    %1933 = vmatpush1.msra.mxu0 0.0
    %1934 = vmatprep.subr.mxu0 0.0
    %1935 = vmatpush1.msra.mxu0 0.0
    %1936 = vmatprep.subr.mxu0 0.0
    %1937 = vmatpush1.msra.mxu0 0.0
    %1938 = vmatprep.subr.mxu0 0.0
    %1939 = vmatpush1.msra.mxu0 0.0
    %1940 = vmatprep.subr.mxu0 0.0
    %1941 = vmatpush1.msra.mxu0 0.0
    %1942 = vmatprep.mubr.f32.mxu0 0.0
    %1943 = vmatmul.mubr.f32.gmra.mrb[0].mxu0 %v1876
    %v1944 = vpop.f32.mrb[0].mxu0
    %v1945 = vadd.f32 0.0, %v1944
    %v1946 = vpop.f32.mrb[0].mxu0
    %1947 = vdwg.mxu0
    %v1949 = vsel %vm1032, %v1724, 0
    %1951 = vmatprep.subr.mxu0 0.0
    %1952 = vmatpush1.msra.mxu0 %v1029
    %1953 = vmatprep.subr.mxu0 0.0
    %1954 = vmatpush1.msra.mxu0 0.0
    %1955 = vmatprep.subr.mxu0 0.0
    %1956 = vmatpush1.msra.mxu0 0.0
    %1957 = vmatprep.subr.mxu0 0.0
    %1958 = vmatpush1.msra.mxu0 0.0
    %1959 = vmatprep.subr.mxu0 0.0
    %1960 = vmatpush1.msra.mxu0 0.0
    %1961 = vmatprep.subr.mxu0 0.0
    %1962 = vmatpush1.msra.mxu0 0.0
    %1963 = vmatprep.subr.mxu0 0.0
    %1964 = vmatpush1.msra.mxu0 0.0
    %1965 = vmatprep.subr.mxu0 0.0
    %1966 = vmatpush1.msra.mxu0 0.0
    %1967 = vmatprep.subr.mxu0 0.0
    %1968 = vmatpush1.msra.mxu0 0.0
    %1969 = vmatprep.subr.mxu0 0.0
    %1970 = vmatpush1.msra.mxu0 0.0
    %1971 = vmatprep.subr.mxu0 0.0
    %1972 = vmatpush1.msra.mxu0 0.0
    %1973 = vmatprep.subr.mxu0 0.0
    %1974 = vmatpush1.msra.mxu0 0.0
    %1975 = vmatprep.subr.mxu0 0.0
    %1976 = vmatpush1.msra.mxu0 0.0
    %1977 = vmatprep.subr.mxu0 0.0
    %1978 = vmatpush1.msra.mxu0 0.0
    %1979 = vmatprep.subr.mxu0 0.0
    %1980 = vmatpush1.msra.mxu0 0.0
    %1981 = vmatprep.subr.mxu0 0.0
    %1982 = vmatpush1.msra.mxu0 0.0
    %1983 = vmatprep.subr.mxu0 0.0
    %1984 = vmatpush1.msra.mxu0 0.0
    %1985 = vmatprep.subr.mxu0 0.0
    %1986 = vmatpush1.msra.mxu0 0.0
    %1987 = vmatprep.subr.mxu0 0.0
    %1988 = vmatpush1.msra.mxu0 0.0
    %1989 = vmatprep.subr.mxu0 0.0
    %1990 = vmatpush1.msra.mxu0 0.0
    %1991 = vmatprep.subr.mxu0 0.0
    %1992 = vmatpush1.msra.mxu0 0.0
    %1993 = vmatprep.subr.mxu0 0.0
    %1994 = vmatpush1.msra.mxu0 0.0
    %1995 = vmatprep.subr.mxu0 0.0
    %1996 = vmatpush1.msra.mxu0 0.0
    %1997 = vmatprep.subr.mxu0 0.0
    %1998 = vmatpush1.msra.mxu0 0.0
    %1999 = vmatprep.subr.mxu0 0.0
    %2000 = vmatpush1.msra.mxu0 0.0
    %2001 = vmatprep.subr.mxu0 0.0
    %2002 = vmatpush1.msra.mxu0 0.0
    %2003 = vmatprep.subr.mxu0 0.0
    %2004 = vmatpush1.msra.mxu0 0.0
    %2005 = vmatprep.subr.mxu0 0.0
    %2006 = vmatpush1.msra.mxu0 0.0
    %2007 = vmatprep.subr.mxu0 0.0
    %2008 = vmatpush1.msra.mxu0 0.0
    %2009 = vmatprep.subr.mxu0 0.0
    %2010 = vmatpush1.msra.mxu0 0.0
    %2011 = vmatprep.subr.mxu0 0.0
    %2012 = vmatpush1.msra.mxu0 0.0
    %2013 = vmatprep.subr.mxu0 0.0
    %2014 = vmatpush1.msra.mxu0 0.0
    %2015 = vmatprep.mubr.f32.mxu0 0.0
    %2016 = vmatmul.mubr.f32.gmra.mrb[0].mxu0 %v1949
    %v2017 = vpop.f32.mrb[0].mxu0
    %v2018 = vadd.f32 0.0, %v2017
    %v2019 = vpop.f32.mrb[0].mxu0
    %2020 = vdwg.mxu0
    %v2022 = vsel %vm1032, %v1725, 0
    %2024 = vmatprep.subr.mxu0 0.0
    %2025 = vmatpush1.msra.mxu0 %v962
    %2026 = vmatprep.subr.mxu0 0.0
    %2027 = vmatpush1.msra.mxu0 0.0
    %2028 = vmatprep.subr.mxu0 0.0
    %2029 = vmatpush1.msra.mxu0 0.0
    %2030 = vmatprep.subr.mxu0 0.0
    %2031 = vmatpush1.msra.mxu0 0.0
    %2032 = vmatprep.subr.mxu0 0.0
    %2033 = vmatpush1.msra.mxu0 0.0
    %2034 = vmatprep.subr.mxu0 0.0
    %2035 = vmatpush1.msra.mxu0 0.0
    %2036 = vmatprep.subr.mxu0 0.0
    %2037 = vmatpush1.msra.mxu0 0.0
    %2038 = vmatprep.subr.mxu0 0.0
    %2039 = vmatpush1.msra.mxu0 0.0
    %2040 = vmatprep.subr.mxu0 0.0
    %2041 = vmatpush1.msra.mxu0 0.0
    %2042 = vmatprep.subr.mxu0 0.0
    %2043 = vmatpush1.msra.mxu0 0.0
    %2044 = vmatprep.subr.mxu0 0.0
    %2045 = vmatpush1.msra.mxu0 0.0
    %2046 = vmatprep.subr.mxu0 0.0
    %2047 = vmatpush1.msra.mxu0 0.0
    %2048 = vmatprep.subr.mxu0 0.0
    %2049 = vmatpush1.msra.mxu0 0.0
    %2050 = vmatprep.subr.mxu0 0.0
    %2051 = vmatpush1.msra.mxu0 0.0
    %2052 = vmatprep.subr.mxu0 0.0
    %2053 = vmatpush1.msra.mxu0 0.0
    %2054 = vmatprep.subr.mxu0 0.0
    %2055 = vmatpush1.msra.mxu0 0.0
    %2056 = vmatprep.subr.mxu0 0.0
    %2057 = vmatpush1.msra.mxu0 0.0
    %2058 = vmatprep.subr.mxu0 0.0
    %2059 = vmatpush1.msra.mxu0 0.0
    %2060 = vmatprep.subr.mxu0 0.0
    %2061 = vmatpush1.msra.mxu0 0.0
    %2062 = vmatprep.subr.mxu0 0.0
    %2063 = vmatpush1.msra.mxu0 0.0
    %2064 = vmatprep.subr.mxu0 0.0
    %2065 = vmatpush1.msra.mxu0 0.0
    %2066 = vmatprep.subr.mxu0 0.0
    %2067 = vmatpush1.msra.mxu0 0.0
    %2068 = vmatprep.subr.mxu0 0.0
    %2069 = vmatpush1.msra.mxu0 0.0
    %2070 = vmatprep.subr.mxu0 0.0
    %2071 = vmatpush1.msra.mxu0 0.0
    %2072 = vmatprep.subr.mxu0 0.0
    %2073 = vmatpush1.msra.mxu0 0.0
    %2074 = vmatprep.subr.mxu0 0.0
    %2075 = vmatpush1.msra.mxu0 0.0
    %2076 = vmatprep.subr.mxu0 0.0
    %2077 = vmatpush1.msra.mxu0 0.0
    %2078 = vmatprep.subr.mxu0 0.0
    %2079 = vmatpush1.msra.mxu0 0.0
    %2080 = vmatprep.subr.mxu0 0.0
    %2081 = vmatpush1.msra.mxu0 0.0
    %2082 = vmatprep.subr.mxu0 0.0
    %2083 = vmatpush1.msra.mxu0 0.0
    %2084 = vmatprep.subr.mxu0 0.0
    %2085 = vmatpush1.msra.mxu0 0.0
    %2086 = vmatprep.subr.mxu0 0.0
    %2087 = vmatpush1.msra.mxu0 0.0
    %2088 = vmatprep.mubr.f32.mxu0 0.0
    %2089 = vmatmul.mubr.f32.gmra.mrb[0].mxu0 %v2022
    %v2090 = vpop.f32.mrb[0].mxu0
    %v2091 = vadd.f32 0.0, %v2090
    %v2092 = vpop.f32.mrb[0].mxu0
    %2093 = vdwg.mxu0
    %v2095 = vsel %vm1032, %v1726, 0
    %2097 = vmatprep.subr.mxu0 0.0
    %2098 = vmatpush1.msra.mxu0 %v1030
    %2099 = vmatprep.subr.mxu0 0.0
    %2100 = vmatpush1.msra.mxu0 0.0
    %2101 = vmatprep.subr.mxu0 0.0
    %2102 = vmatpush1.msra.mxu0 0.0
    %2103 = vmatprep.subr.mxu0 0.0
    %2104 = vmatpush1.msra.mxu0 0.0
    %2105 = vmatprep.subr.mxu0 0.0
    %2106 = vmatpush1.msra.mxu0 0.0
    %2107 = vmatprep.subr.mxu0 0.0
    %2108 = vmatpush1.msra.mxu0 0.0
    %2109 = vmatprep.subr.mxu0 0.0
    %2110 = vmatpush1.msra.mxu0 0.0
    %2111 = vmatprep.subr.mxu0 0.0
    %2112 = vmatpush1.msra.mxu0 0.0
    %2113 = vmatprep.subr.mxu0 0.0
    %2114 = vmatpush1.msra.mxu0 0.0
    %2115 = vmatprep.subr.mxu0 0.0
    %2116 = vmatpush1.msra.mxu0 0.0
    %2117 = vmatprep.subr.mxu0 0.0
    %2118 = vmatpush1.msra.mxu0 0.0
    %2119 = vmatprep.subr.mxu0 0.0
    %2120 = vmatpush1.msra.mxu0 0.0
    %2121 = vmatprep.subr.mxu0 0.0
    %2122 = vmatpush1.msra.mxu0 0.0
    %2123 = vmatprep.subr.mxu0 0.0
    %2124 = vmatpush1.msra.mxu0 0.0
    %2125 = vmatprep.subr.mxu0 0.0
    %2126 = vmatpush1.msra.mxu0 0.0
    %2127 = vmatprep.subr.mxu0 0.0
    %2128 = vmatpush1.msra.mxu0 0.0
    %2129 = vmatprep.subr.mxu0 0.0
    %2130 = vmatpush1.msra.mxu0 0.0
    %2131 = vmatprep.subr.mxu0 0.0
    %2132 = vmatpush1.msra.mxu0 0.0
    %2133 = vmatprep.subr.mxu0 0.0
    %2134 = vmatpush1.msra.mxu0 0.0
    %2135 = vmatprep.subr.mxu0 0.0
    %2136 = vmatpush1.msra.mxu0 0.0
    %2137 = vmatprep.subr.mxu0 0.0
    %2138 = vmatpush1.msra.mxu0 0.0
    %2139 = vmatprep.subr.mxu0 0.0
    %2140 = vmatpush1.msra.mxu0 0.0
    %2141 = vmatprep.subr.mxu0 0.0
    %2142 = vmatpush1.msra.mxu0 0.0
    %2143 = vmatprep.subr.mxu0 0.0
    %2144 = vmatpush1.msra.mxu0 0.0
    %2145 = vmatprep.subr.mxu0 0.0
    %2146 = vmatpush1.msra.mxu0 0.0
    %2147 = vmatprep.subr.mxu0 0.0
    %2148 = vmatpush1.msra.mxu0 0.0
    %2149 = vmatprep.subr.mxu0 0.0
    %2150 = vmatpush1.msra.mxu0 0.0
    %2151 = vmatprep.subr.mxu0 0.0
    %2152 = vmatpush1.msra.mxu0 0.0
    %2153 = vmatprep.subr.mxu0 0.0
    %2154 = vmatpush1.msra.mxu0 0.0
    %2155 = vmatprep.subr.mxu0 0.0
    %2156 = vmatpush1.msra.mxu0 0.0
    %2157 = vmatprep.subr.mxu0 0.0
    %2158 = vmatpush1.msra.mxu0 0.0
    %2159 = vmatprep.subr.mxu0 0.0
    %2160 = vmatpush1.msra.mxu0 0.0
    %2161 = vmatprep.mubr.f32.mxu0 0.0
    %2162 = vmatmul.mubr.f32.gmra.mrb[0].mxu0 %v2095
    %v2163 = vpop.f32.mrb[0].mxu0
    %v2164 = vadd.f32 0.0, %v2163
    %v2165 = vpop.f32.mrb[0].mxu0
    %2166 = vdwg.mxu0
    %v2168 = vsel %vm1032, %v1727, 0
    %2170 = vmatprep.subr.mxu0 0.0
    %2171 = vmatpush1.msra.mxu0 %v963
    %2172 = vmatprep.subr.mxu0 0.0
    %2173 = vmatpush1.msra.mxu0 0.0
    %2174 = vmatprep.subr.mxu0 0.0
    %2175 = vmatpush1.msra.mxu0 0.0
    %2176 = vmatprep.subr.mxu0 0.0
    %2177 = vmatpush1.msra.mxu0 0.0
    %2178 = vmatprep.subr.mxu0 0.0
    %2179 = vmatpush1.msra.mxu0 0.0
    %2180 = vmatprep.subr.mxu0 0.0
    %2181 = vmatpush1.msra.mxu0 0.0
    %2182 = vmatprep.subr.mxu0 0.0
    %2183 = vmatpush1.msra.mxu0 0.0
    %2184 = vmatprep.subr.mxu0 0.0
    %2185 = vmatpush1.msra.mxu0 0.0
    %2186 = vmatprep.subr.mxu0 0.0
    %2187 = vmatpush1.msra.mxu0 0.0
    %2188 = vmatprep.subr.mxu0 0.0
    %2189 = vmatpush1.msra.mxu0 0.0
    %2190 = vmatprep.subr.mxu0 0.0
    %2191 = vmatpush1.msra.mxu0 0.0
    %2192 = vmatprep.subr.mxu0 0.0
    %2193 = vmatpush1.msra.mxu0 0.0
    %2194 = vmatprep.subr.mxu0 0.0
    %2195 = vmatpush1.msra.mxu0 0.0
    %2196 = vmatprep.subr.mxu0 0.0
    %2197 = vmatpush1.msra.mxu0 0.0
    %2198 = vmatprep.subr.mxu0 0.0
    %2199 = vmatpush1.msra.mxu0 0.0
    %2200 = vmatprep.subr.mxu0 0.0
    %2201 = vmatpush1.msra.mxu0 0.0
    %2202 = vmatprep.subr.mxu0 0.0
    %2203 = vmatpush1.msra.mxu0 0.0
    %2204 = vmatprep.subr.mxu0 0.0
    %2205 = vmatpush1.msra.mxu0 0.0
    %2206 = vmatprep.subr.mxu0 0.0
    %2207 = vmatpush1.msra.mxu0 0.0
    %2208 = vmatprep.subr.mxu0 0.0
    %2209 = vmatpush1.msra.mxu0 0.0
    %2210 = vmatprep.subr.mxu0 0.0
    %2211 = vmatpush1.msra.mxu0 0.0
    %2212 = vmatprep.subr.mxu0 0.0
    %2213 = vmatpush1.msra.mxu0 0.0
    %2214 = vmatprep.subr.mxu0 0.0
    %2215 = vmatpush1.msra.mxu0 0.0
    %2216 = vmatprep.subr.mxu0 0.0
    %2217 = vmatpush1.msra.mxu0 0.0
    %2218 = vmatprep.subr.mxu0 0.0
    %2219 = vmatpush1.msra.mxu0 0.0
    %2220 = vmatprep.subr.mxu0 0.0
    %2221 = vmatpush1.msra.mxu0 0.0
    %2222 = vmatprep.subr.mxu0 0.0
    %2223 = vmatpush1.msra.mxu0 0.0
    %2224 = vmatprep.subr.mxu0 0.0
    %2225 = vmatpush1.msra.mxu0 0.0
    %2226 = vmatprep.subr.mxu0 0.0
    %2227 = vmatpush1.msra.mxu0 0.0
    %2228 = vmatprep.subr.mxu0 0.0
    %2229 = vmatpush1.msra.mxu0 0.0
    %2230 = vmatprep.subr.mxu0 0.0
    %2231 = vmatpush1.msra.mxu0 0.0
    %2232 = vmatprep.subr.mxu0 0.0
    %2233 = vmatpush1.msra.mxu0 0.0
    %2234 = vmatprep.mubr.f32.mxu0 0.0
    %2235 = vmatmul.mubr.f32.gmra.mrb[0].mxu0 %v2168
    %v2236 = vpop.f32.mrb[0].mxu0
    %v2237 = vadd.f32 0.0, %v2236
    %v2238 = vpop.f32.mrb[0].mxu0
    %2239 = vdwg.mxu0
    %v2241 = vsel %vm1032, %v1728, 0
    %2243 = vmatprep.subr.mxu0 0.0
    %2244 = vmatpush1.msra.mxu0 %v1031
    %2245 = vmatprep.subr.mxu0 0.0
    %2246 = vmatpush1.msra.mxu0 0.0
    %2247 = vmatprep.subr.mxu0 0.0
    %2248 = vmatpush1.msra.mxu0 0.0
    %2249 = vmatprep.subr.mxu0 0.0
    %2250 = vmatpush1.msra.mxu0 0.0
    %2251 = vmatprep.subr.mxu0 0.0
    %2252 = vmatpush1.msra.mxu0 0.0
    %2253 = vmatprep.subr.mxu0 0.0
    %2254 = vmatpush1.msra.mxu0 0.0
    %2255 = vmatprep.subr.mxu0 0.0
    %2256 = vmatpush1.msra.mxu0 0.0
    %2257 = vmatprep.subr.mxu0 0.0
    %2258 = vmatpush1.msra.mxu0 0.0
    %2259 = vmatprep.subr.mxu0 0.0
    %2260 = vmatpush1.msra.mxu0 0.0
    %2261 = vmatprep.subr.mxu0 0.0
    %2262 = vmatpush1.msra.mxu0 0.0
    %2263 = vmatprep.subr.mxu0 0.0
    %2264 = vmatpush1.msra.mxu0 0.0
    %2265 = vmatprep.subr.mxu0 0.0
    %2266 = vmatpush1.msra.mxu0 0.0
    %2267 = vmatprep.subr.mxu0 0.0
    %2268 = vmatpush1.msra.mxu0 0.0
    %2269 = vmatprep.subr.mxu0 0.0
    %2270 = vmatpush1.msra.mxu0 0.0
    %2271 = vmatprep.subr.mxu0 0.0
    %2272 = vmatpush1.msra.mxu0 0.0
    %2273 = vmatprep.subr.mxu0 0.0
    %2274 = vmatpush1.msra.mxu0 0.0
    %2275 = vmatprep.subr.mxu0 0.0
    %2276 = vmatpush1.msra.mxu0 0.0
    %2277 = vmatprep.subr.mxu0 0.0
    %2278 = vmatpush1.msra.mxu0 0.0
    %2279 = vmatprep.subr.mxu0 0.0
    %2280 = vmatpush1.msra.mxu0 0.0
    %2281 = vmatprep.subr.mxu0 0.0
    %2282 = vmatpush1.msra.mxu0 0.0
    %2283 = vmatprep.subr.mxu0 0.0
    %2284 = vmatpush1.msra.mxu0 0.0
    %2285 = vmatprep.subr.mxu0 0.0
    %2286 = vmatpush1.msra.mxu0 0.0
    %2287 = vmatprep.subr.mxu0 0.0
    %2288 = vmatpush1.msra.mxu0 0.0
    %2289 = vmatprep.subr.mxu0 0.0
    %2290 = vmatpush1.msra.mxu0 0.0
    %2291 = vmatprep.subr.mxu0 0.0
    %2292 = vmatpush1.msra.mxu0 0.0
    %2293 = vmatprep.subr.mxu0 0.0
    %2294 = vmatpush1.msra.mxu0 0.0
    %2295 = vmatprep.subr.mxu0 0.0
    %2296 = vmatpush1.msra.mxu0 0.0
    %2297 = vmatprep.subr.mxu0 0.0
    %2298 = vmatpush1.msra.mxu0 0.0
    %2299 = vmatprep.subr.mxu0 0.0
    %2300 = vmatpush1.msra.mxu0 0.0
    %2301 = vmatprep.subr.mxu0 0.0
    %2302 = vmatpush1.msra.mxu0 0.0
    %2303 = vmatprep.subr.mxu0 0.0
    %2304 = vmatpush1.msra.mxu0 0.0
    %2305 = vmatprep.subr.mxu0 0.0
    %2306 = vmatpush1.msra.mxu0 0.0
    %2307 = vmatprep.mubr.f32.mxu0 0.0
    %2308 = vmatmul.mubr.f32.gmra.mrb[0].mxu0 %v2241
    %v2309 = vpop.f32.mrb[0].mxu0
    %v2310 = vadd.f32 0.0, %v2309
    %v2311 = vpop.f32.mrb[0].mxu0
    %2312 = vdwg.mxu0
    %v2313 = vcombine.low %v1799, %v2091
    %v2314 = vcombine.high %v1799, %v2091
    %v2316 = vunpack.c.l.s4 1983009808
    %v2317 = vunpack.c.0.s8 %v2316
    %v2318 = vlaneseq
    %v2319 = vshrl.u32 %v2318, 7
    %v2320 = vsub.s32 %v2317, %v2319
    %v2321 = vrot.slane %v2313, %v2320
    %v2323 = vunpack.c.l.s4 1983009808
    %v2324 = vunpack.c.0.s8 %v2323
    %v2325 = vlaneseq
    %v2326 = vshrl.u32 %v2325, 7
    %v2327 = vsub.s32 %v2324, %v2326
    %v2328 = vrot.slane %v2314, %v2327
    %v2329 = vcombine.low %v1945, %v2237
    %v2330 = vcombine.high %v1945, %v2237
    %v2332 = vunpack.c.l.s4 1983009808
    %v2333 = vunpack.c.0.s8 %v2332
    %v2334 = vlaneseq
    %v2335 = vshrl.u32 %v2334, 7
    %v2336 = vsub.s32 %v2333, %v2335
    %v2337 = vrot.slane %v2329, %v2336
    %v2339 = vunpack.c.l.s4 1983009808
    %v2340 = vunpack.c.0.s8 %v2339
    %v2341 = vlaneseq
    %v2342 = vshrl.u32 %v2341, 7
    %v2343 = vsub.s32 %v2340, %v2342
    %v2344 = vrot.slane %v2330, %v2343
    %v2345 = vcombine.low %v2321, %v2337
    %v2346 = vcombine.high %v2321, %v2337
    %v2348 = vunpack.c.l.s4 1934713408
    %v2349 = vunpack.c.0.s8 %v2348
    %v2350 = vlaneseq
    %v2351 = vshrl.u32 %v2350, 7
    %v2352 = vsub.s32 %v2349, %v2351
    %v2353 = vrot.slane %v2345, %v2352
    %v2355 = vunpack.c.l.s4 1934713408
    %v2356 = vunpack.c.0.s8 %v2355
    %v2357 = vlaneseq
    %v2358 = vshrl.u32 %v2357, 7
    %v2359 = vsub.s32 %v2356, %v2358
    %v2360 = vrot.slane %v2346, %v2359
    %v2361 = vcombine.low %v2328, %v2344
    %v2362 = vcombine.high %v2328, %v2344
    %v2364 = vunpack.c.l.s4 1934713408
    %v2365 = vunpack.c.0.s8 %v2364
    %v2366 = vlaneseq
    %v2367 = vshrl.u32 %v2366, 7
    %v2368 = vsub.s32 %v2365, %v2367
    %v2369 = vrot.slane %v2361, %v2368
    %v2371 = vunpack.c.l.s4 1934713408
    %v2372 = vunpack.c.0.s8 %v2371
    %v2373 = vlaneseq
    %v2374 = vshrl.u32 %v2373, 7
    %v2375 = vsub.s32 %v2372, %v2374
    %v2376 = vrot.slane %v2362, %v2375
    %v2377 = vcombine.high %v2353, 0.0
    %v2378 = vcombine.high %v2360, 0.0
    %v2379 = vcombine.high %v2369, 0.0
    %v2380 = vcombine.high %v2376, 0.0
    %v2381 = vcombine.low %v1872, %v2164
    %v2382 = vcombine.high %v1872, %v2164
    %v2384 = vunpack.c.l.s4 1983009808
    %v2385 = vunpack.c.0.s8 %v2384
    %v2386 = vlaneseq
    %v2387 = vshrl.u32 %v2386, 7
    %v2388 = vsub.s32 %v2385, %v2387
    %v2389 = vrot.slane %v2381, %v2388
    %v2391 = vunpack.c.l.s4 1983009808
    %v2392 = vunpack.c.0.s8 %v2391
    %v2393 = vlaneseq
    %v2394 = vshrl.u32 %v2393, 7
    %v2395 = vsub.s32 %v2392, %v2394
    %v2396 = vrot.slane %v2382, %v2395
    %v2397 = vcombine.low %v2018, %v2310
    %v2398 = vcombine.high %v2018, %v2310
    %v2400 = vunpack.c.l.s4 1983009808
    %v2401 = vunpack.c.0.s8 %v2400
    %v2402 = vlaneseq
    %v2403 = vshrl.u32 %v2402, 7
    %v2404 = vsub.s32 %v2401, %v2403
    %v2405 = vrot.slane %v2397, %v2404
    %v2407 = vunpack.c.l.s4 1983009808
    %v2408 = vunpack.c.0.s8 %v2407
    %v2409 = vlaneseq
    %v2410 = vshrl.u32 %v2409, 7
    %v2411 = vsub.s32 %v2408, %v2410
    %v2412 = vrot.slane %v2398, %v2411
    %v2413 = vcombine.low %v2389, %v2405
    %v2414 = vcombine.high %v2389, %v2405
    %v2416 = vunpack.c.l.s4 1934713408
    %v2417 = vunpack.c.0.s8 %v2416
    %v2418 = vlaneseq
    %v2419 = vshrl.u32 %v2418, 7
    %v2420 = vsub.s32 %v2417, %v2419
    %v2421 = vrot.slane %v2413, %v2420
    %v2423 = vunpack.c.l.s4 1934713408
    %v2424 = vunpack.c.0.s8 %v2423
    %v2425 = vlaneseq
    %v2426 = vshrl.u32 %v2425, 7
    %v2427 = vsub.s32 %v2424, %v2426
    %v2428 = vrot.slane %v2414, %v2427
    %v2429 = vcombine.low %v2396, %v2412
    %v2430 = vcombine.high %v2396, %v2412
    %v2432 = vunpack.c.l.s4 1934713408
    %v2433 = vunpack.c.0.s8 %v2432
    %v2434 = vlaneseq
    %v2435 = vshrl.u32 %v2434, 7
    %v2436 = vsub.s32 %v2433, %v2435
    %v2437 = vrot.slane %v2429, %v2436
    %v2439 = vunpack.c.l.s4 1934713408
    %v2440 = vunpack.c.0.s8 %v2439
    %v2441 = vlaneseq
    %v2442 = vshrl.u32 %v2441, 7
    %v2443 = vsub.s32 %v2440, %v2442
    %v2444 = vrot.slane %v2430, %v2443
    %v2445 = vcombine.high %v2421, 0.0
    %v2446 = vcombine.high %v2428, 0.0
    %v2447 = vcombine.high %v2437, 0.0
    %v2448 = vcombine.high %v2444, 0.0
    %v2449 = vcombine.low %v2353, %v2360
    %v2451 = vunpack.c.l.s4 1983009808
    %v2452 = vunpack.c.0.s8 %v2451
    %v2453 = vlaneseq
    %v2454 = vshrl.u32 %v2453, 7
    %v2455 = vsub.s32 %v2452, %v2454
    %v2456 = vrot.slane %v2449, %v2455
    %v2457 = vcombine.low %v2377, %v2378
    %v2459 = vunpack.c.l.s4 1983009808
    %v2460 = vunpack.c.0.s8 %v2459
    %v2461 = vlaneseq
    %v2462 = vshrl.u32 %v2461, 7
    %v2463 = vsub.s32 %v2460, %v2462
    %v2464 = vrot.slane %v2457, %v2463
    %v2465 = vcombine.low %v2369, %v2376
    %v2467 = vunpack.c.l.s4 1983009808
    %v2468 = vunpack.c.0.s8 %v2467
    %v2469 = vlaneseq
    %v2470 = vshrl.u32 %v2469, 7
    %v2471 = vsub.s32 %v2468, %v2470
    %v2472 = vrot.slane %v2465, %v2471
    %v2473 = vcombine.low %v2379, %v2380
    %v2475 = vunpack.c.l.s4 1983009808
    %v2476 = vunpack.c.0.s8 %v2475
    %v2477 = vlaneseq
    %v2478 = vshrl.u32 %v2477, 7
    %v2479 = vsub.s32 %v2476, %v2478
    %v2480 = vrot.slane %v2473, %v2479
    %v2481 = vcombine.low %v2456, %v2464
    %v2482 = vcombine.high %v2456, %v2464
    %v2484 = vunpack.c.l.s4 1934713408
    %v2485 = vunpack.c.0.s8 %v2484
    %v2486 = vlaneseq
    %v2487 = vshrl.u32 %v2486, 7
    %v2488 = vsub.s32 %v2485, %v2487
    %v2489 = vrot.slane %v2481, %v2488
    %v2491 = vunpack.c.l.s4 1934713408
    %v2492 = vunpack.c.0.s8 %v2491
    %v2493 = vlaneseq
    %v2494 = vshrl.u32 %v2493, 7
    %v2495 = vsub.s32 %v2492, %v2494
    %v2496 = vrot.slane %v2482, %v2495
    %v2497 = vcombine.low %v2472, %v2480
    %v2498 = vcombine.high %v2472, %v2480
    %v2500 = vunpack.c.l.s4 1934713408
    %v2501 = vunpack.c.0.s8 %v2500
    %v2502 = vlaneseq
    %v2503 = vshrl.u32 %v2502, 7
    %v2504 = vsub.s32 %v2501, %v2503
    %v2505 = vrot.slane %v2497, %v2504
    %v2507 = vunpack.c.l.s4 1934713408
    %v2508 = vunpack.c.0.s8 %v2507
    %v2509 = vlaneseq
    %v2510 = vshrl.u32 %v2509, 7
    %v2511 = vsub.s32 %v2508, %v2510
    %v2512 = vrot.slane %v2498, %v2511
    %v2513 = vcombine.low %v2489, %v2505
    %v2514 = vcombine.high %v2489, %v2505
    %v2515 = vcombine.low %v2496, %v2512
    %v2516 = vcombine.high %v2496, %v2512
    %v2517 = vcombine.low %v2421, %v2428
    %v2519 = vunpack.c.l.s4 1983009808
    %v2520 = vunpack.c.0.s8 %v2519
    %v2521 = vlaneseq
    %v2522 = vshrl.u32 %v2521, 7
    %v2523 = vsub.s32 %v2520, %v2522
    %v2524 = vrot.slane %v2517, %v2523
    %v2525 = vcombine.low %v2445, %v2446
    %v2527 = vunpack.c.l.s4 1983009808
    %v2528 = vunpack.c.0.s8 %v2527
    %v2529 = vlaneseq
    %v2530 = vshrl.u32 %v2529, 7
    %v2531 = vsub.s32 %v2528, %v2530
    %v2532 = vrot.slane %v2525, %v2531
    %v2533 = vcombine.low %v2437, %v2444
    %v2535 = vunpack.c.l.s4 1983009808
    %v2536 = vunpack.c.0.s8 %v2535
    %v2537 = vlaneseq
    %v2538 = vshrl.u32 %v2537, 7
    %v2539 = vsub.s32 %v2536, %v2538
    %v2540 = vrot.slane %v2533, %v2539
    %v2541 = vcombine.low %v2447, %v2448
    %v2543 = vunpack.c.l.s4 1983009808
    %v2544 = vunpack.c.0.s8 %v2543
    %v2545 = vlaneseq
    %v2546 = vshrl.u32 %v2545, 7
    %v2547 = vsub.s32 %v2544, %v2546
    %v2548 = vrot.slane %v2541, %v2547
    %v2549 = vcombine.low %v2524, %v2532
    %v2550 = vcombine.high %v2524, %v2532
    %v2552 = vunpack.c.l.s4 1934713408
    %v2553 = vunpack.c.0.s8 %v2552
    %v2554 = vlaneseq
    %v2555 = vshrl.u32 %v2554, 7
    %v2556 = vsub.s32 %v2553, %v2555
    %v2557 = vrot.slane %v2549, %v2556
    %v2559 = vunpack.c.l.s4 1934713408
    %v2560 = vunpack.c.0.s8 %v2559
    %v2561 = vlaneseq
    %v2562 = vshrl.u32 %v2561, 7
    %v2563 = vsub.s32 %v2560, %v2562
    %v2564 = vrot.slane %v2550, %v2563
    %v2565 = vcombine.low %v2540, %v2548
    %v2566 = vcombine.high %v2540, %v2548
    %v2568 = vunpack.c.l.s4 1934713408
    %v2569 = vunpack.c.0.s8 %v2568
    %v2570 = vlaneseq
    %v2571 = vshrl.u32 %v2570, 7
    %v2572 = vsub.s32 %v2569, %v2571
    %v2573 = vrot.slane %v2565, %v2572
    %v2575 = vunpack.c.l.s4 1934713408
    %v2576 = vunpack.c.0.s8 %v2575
    %v2577 = vlaneseq
    %v2578 = vshrl.u32 %v2577, 7
    %v2579 = vsub.s32 %v2576, %v2578
    %v2580 = vrot.slane %v2566, %v2579
    %v2581 = vcombine.low %v2557, %v2573
    %v2582 = vcombine.high %v2557, %v2573
    %v2583 = vcombine.low %v2564, %v2580
    %v2584 = vcombine.high %v2564, %v2580
    %2587 = vrot.lane.b32.xlu0 %v2514, 8
    %v2588 = vpop.permute.xlu0 %2587
    %2589 = vrot.lane.b32.xlu0 %v2582, 8
    %v2590 = vpop.permute.xlu0 %2589
    %2595 = vrot.lane.b32.xlu0 %v2515, 16
    %v2596 = vpop.permute.xlu0 %2595
    %2597 = vrot.lane.b32.xlu0 %v2583, 16
    %v2598 = vpop.permute.xlu0 %2597
    %2603 = vrot.lane.b32.xlu0 %v2516, 24
    %v2604 = vpop.permute.xlu0 %2603
    %2605 = vrot.lane.b32.xlu0 %v2584, 24
    %v2606 = vpop.permute.xlu0 %2605
    %v2609 = vsel %vm1032, %v2513, %v2588
    %v2610 = vsel %vm1032, %v2581, %v2590
    %vm2611 = vcmask 130048
    %v2612 = vsel %vm2611, %v2609, %v2596
    %v2613 = vsel %vm2611, %v2610, %v2598
    %vm2614 = vcmask 195584
    %v2615 = vsel %vm2614, %v2612, %v2604
    %v2616 = vsel %vm2614, %v2613, %v2606
    %v2617 = vlaneseq
    %v2618 = vshrl.u32 %v2617, 7
    %v2619 = vsub.s32 1, %v2618
    %v2620 = vrot.slane %v34, %v2619
    %v2622 = vsel %vm46, %v2615, 0
    %v2625 = vsel %vm46, %v2616, 0
    %2627 = vmatprep.subr.mxu0 0.0
    %2628 = vmatpush1.msra.mxu0 %v144
    %2629 = vmatprep.subr.mxu0 0.0
    %2630 = vmatpush1.msra.mxu0 %v145
    %2631 = vmatprep.subr.mxu0 0.0
    %2632 = vmatpush1.msra.mxu0 %v146
    %2633 = vmatprep.subr.mxu0 0.0
    %2634 = vmatpush1.msra.mxu0 %v147
    %2635 = vmatprep.subr.mxu0 0.0
    %2636 = vmatpush1.msra.mxu0 0.0
    %2637 = vmatprep.subr.mxu0 0.0
    %2638 = vmatpush1.msra.mxu0 0.0
    %2639 = vmatprep.subr.mxu0 0.0
    %2640 = vmatpush1.msra.mxu0 0.0
    %2641 = vmatprep.subr.mxu0 0.0
    %2642 = vmatpush1.msra.mxu0 0.0
    %2643 = vmatprep.subr.mxu0 0.0
    %2644 = vmatpush1.msra.mxu0 0.0
    %2645 = vmatprep.subr.mxu0 0.0
    %2646 = vmatpush1.msra.mxu0 0.0
    %2647 = vmatprep.subr.mxu0 0.0
    %2648 = vmatpush1.msra.mxu0 0.0
    %2649 = vmatprep.subr.mxu0 0.0
    %2650 = vmatpush1.msra.mxu0 0.0
    %2651 = vmatprep.subr.mxu0 0.0
    %2652 = vmatpush1.msra.mxu0 0.0
    %2653 = vmatprep.subr.mxu0 0.0
    %2654 = vmatpush1.msra.mxu0 0.0
    %2655 = vmatprep.subr.mxu0 0.0
    %2656 = vmatpush1.msra.mxu0 0.0
    %2657 = vmatprep.subr.mxu0 0.0
    %2658 = vmatpush1.msra.mxu0 0.0
    %2659 = vmatprep.subr.mxu0 0.0
    %2660 = vmatpush1.msra.mxu0 0.0
    %2661 = vmatprep.subr.mxu0 0.0
    %2662 = vmatpush1.msra.mxu0 0.0
    %2663 = vmatprep.subr.mxu0 0.0
    %2664 = vmatpush1.msra.mxu0 0.0
    %2665 = vmatprep.subr.mxu0 0.0
    %2666 = vmatpush1.msra.mxu0 0.0
    %2667 = vmatprep.subr.mxu0 0.0
    %2668 = vmatpush1.msra.mxu0 0.0
    %2669 = vmatprep.subr.mxu0 0.0
    %2670 = vmatpush1.msra.mxu0 0.0
    %2671 = vmatprep.subr.mxu0 0.0
    %2672 = vmatpush1.msra.mxu0 0.0
    %2673 = vmatprep.subr.mxu0 0.0
    %2674 = vmatpush1.msra.mxu0 0.0
    %2675 = vmatprep.subr.mxu0 0.0
    %2676 = vmatpush1.msra.mxu0 0.0
    %2677 = vmatprep.subr.mxu0 0.0
    %2678 = vmatpush1.msra.mxu0 0.0
    %2679 = vmatprep.subr.mxu0 0.0
    %2680 = vmatpush1.msra.mxu0 0.0
    %2681 = vmatprep.subr.mxu0 0.0
    %2682 = vmatpush1.msra.mxu0 0.0
    %2683 = vmatprep.subr.mxu0 0.0
    %2684 = vmatpush1.msra.mxu0 0.0
    %2685 = vmatprep.subr.mxu0 0.0
    %2686 = vmatpush1.msra.mxu0 0.0
    %2687 = vmatprep.subr.mxu0 0.0
    %2688 = vmatpush1.msra.mxu0 0.0
    %2689 = vmatprep.subr.mxu0 0.0
    %2690 = vmatpush1.msra.mxu0 0.0
    %2691 = vmatprep.mubr.f32.mxu0 0.0
    %2692 = vmatmul.mubr.f32.gmra.mrb[0].mxu0 %v2622
    %v2693 = vpop.f32.mrb[0].mxu0
    %v2694 = vadd.f32 %v2620, %v2693
    %v2695 = vpop.f32.mrb[0].mxu0
    %2696 = vmatprep.mubr.f32.mxu0 0.0
    %2697 = vmatmul.mubr.f32.gmra.mrb[0].mxu0 %v2625
    %v2698 = vpop.f32.mrb[0].mxu0
    %v2699 = vadd.f32 %v2620, %v2698
    %v2700 = vpop.f32.mrb[0].mxu0
    %2701 = vdwg.mxu0
    %v2702 = vadd.f32 %v28, %v2694
    %v2703 = vadd.f32 %v29, %v2699
    %v2704 = vsel %vm46, %v2702, 0.0
    %2705 = vadd.xlane.f32.xlu0 %v2704
    %v2706 = vpop.xlane.xlu0 %2705
    %v2707 = vsel %vm46, %v2703, 0.0
    %2708 = vadd.xlane.f32.xlu0 %v2707
    %v2709 = vpop.xlane.xlu0 %2708
    %v2710 = vrcp.pop 32.0
    %v2711 = vmul.f32 %v2706, %v2710
    %v2712 = vmul.f32 %v2709, %v2710
    %v2713 = vsub.f32 %v2702, %v2711
    %v2714 = vsub.f32 %v2703, %v2712
    %v2715 = vmul.f32 %v2713, %v2713
    %v2716 = vmul.f32 %v2714, %v2714
    %v2717 = vsel %vm46, %v2715, 0.0
    %2718 = vadd.xlane.f32.xlu0 %v2717
    %v2719 = vpop.xlane.xlu0 %2718
    %v2720 = vsel %vm46, %v2716, 0.0
    %2721 = vadd.xlane.f32.xlu0 %v2720
    %v2722 = vpop.xlane.xlu0 %2721
    %v2723 = vmul.f32 %v2719, %v2710
    %v2724 = vmul.f32 %v2722, %v2710
    %v2725 = vadd.f32 %v2723, 1e-05
    %v2726 = vadd.f32 %v2724, 1e-05
    %v2727 = vrsqrt.pop %v2725
    %v2728 = vrsqrt.pop %v2726
    %v2729 = vmul.f32 %v2713, %v2727
    %v2730 = vmul.f32 %v2714, %v2728
    %v2731 = vlaneseq
    %v2732 = vshrl.u32 %v2731, 7
    %v2733 = vsub.s32 7, %v2732
    %v2734 = vrot.slane %v34, %v2733
    %v2735 = vmul.f32 %v2729, %v2734
    %v2736 = vmul.f32 %v2730, %v2734
    %v2737 = vlaneseq
    %v2738 = vshrl.u32 %v2737, 7
    %v2739 = vsub.s32 0, %v2738
    %v2740 = vrot.slane %v35, %v2739
    %v2741 = vadd.f32 %v2735, %v2740
    %v2742 = vadd.f32 %v2736, %v2740
    %s2743 = scalar_lea.vmem [#allocation2], 128
    %v2744 = vld [vmem:[%s2743] sm:$0xff]
    %v2745 = vld [vmem:[%s2743 + $0x8] sm:$0xff]
    %v2746 = vld [vmem:[%s2743 + $0x10] sm:$0xff]
    %v2747 = vld [vmem:[%s2743 + $0x18] sm:$0xff]
    %v2748 = vlaneseq
    %v2749 = vshrl.u32 %v2748, 7
    %v2750 = vsub.s32 2, %v2749
    %v2751 = vrot.slane %v34, %v2750
    %v2753 = vsel %vm46, %v2741, 0
    %v2756 = vsel %vm46, %v2742, 0
    %2758 = vmatprep.subr.mxu0 0.0
    %2759 = vmatpush1.msra.mxu0 %v2744
    %2760 = vmatprep.subr.mxu0 0.0
    %2761 = vmatpush1.msra.mxu0 %v2745
    %2762 = vmatprep.subr.mxu0 0.0
    %2763 = vmatpush1.msra.mxu0 %v2746
    %2764 = vmatprep.subr.mxu0 0.0
    %2765 = vmatpush1.msra.mxu0 %v2747
    %2766 = vmatprep.subr.mxu0 0.0
    %2767 = vmatpush1.msra.mxu0 0.0
    %2768 = vmatprep.subr.mxu0 0.0
    %2769 = vmatpush1.msra.mxu0 0.0
    %2770 = vmatprep.subr.mxu0 0.0
    %2771 = vmatpush1.msra.mxu0 0.0
    %2772 = vmatprep.subr.mxu0 0.0
    %2773 = vmatpush1.msra.mxu0 0.0
    %2774 = vmatprep.subr.mxu0 0.0
    %2775 = vmatpush1.msra.mxu0 0.0
    %2776 = vmatprep.subr.mxu0 0.0
    %2777 = vmatpush1.msra.mxu0 0.0
    %2778 = vmatprep.subr.mxu0 0.0
    %2779 = vmatpush1.msra.mxu0 0.0
    %2780 = vmatprep.subr.mxu0 0.0
    %2781 = vmatpush1.msra.mxu0 0.0
    %2782 = vmatprep.subr.mxu0 0.0
    %2783 = vmatpush1.msra.mxu0 0.0
    %2784 = vmatprep.subr.mxu0 0.0
    %2785 = vmatpush1.msra.mxu0 0.0
    %2786 = vmatprep.subr.mxu0 0.0
    %2787 = vmatpush1.msra.mxu0 0.0
    %2788 = vmatprep.subr.mxu0 0.0
    %2789 = vmatpush1.msra.mxu0 0.0
    %2790 = vmatprep.subr.mxu0 0.0
    %2791 = vmatpush1.msra.mxu0 0.0
    %2792 = vmatprep.subr.mxu0 0.0
    %2793 = vmatpush1.msra.mxu0 0.0
    %2794 = vmatprep.subr.mxu0 0.0
    %2795 = vmatpush1.msra.mxu0 0.0
    %2796 = vmatprep.subr.mxu0 0.0
    %2797 = vmatpush1.msra.mxu0 0.0
    %2798 = vmatprep.subr.mxu0 0.0
    %2799 = vmatpush1.msra.mxu0 0.0
    %2800 = vmatprep.subr.mxu0 0.0
    %2801 = vmatpush1.msra.mxu0 0.0
    %2802 = vmatprep.subr.mxu0 0.0
    %2803 = vmatpush1.msra.mxu0 0.0
    %2804 = vmatprep.subr.mxu0 0.0
    %2805 = vmatpush1.msra.mxu0 0.0
    %2806 = vmatprep.subr.mxu0 0.0
    %2807 = vmatpush1.msra.mxu0 0.0
    %2808 = vmatprep.subr.mxu0 0.0
    %2809 = vmatpush1.msra.mxu0 0.0
    %2810 = vmatprep.subr.mxu0 0.0
    %2811 = vmatpush1.msra.mxu0 0.0
    %2812 = vmatprep.subr.mxu0 0.0
    %2813 = vmatpush1.msra.mxu0 0.0
    %2814 = vmatprep.subr.mxu0 0.0
    %2815 = vmatpush1.msra.mxu0 0.0
    %2816 = vmatprep.subr.mxu0 0.0
    %2817 = vmatpush1.msra.mxu0 0.0
    %2818 = vmatprep.subr.mxu0 0.0
    %2819 = vmatpush1.msra.mxu0 0.0
    %2820 = vmatprep.subr.mxu0 0.0
    %2821 = vmatpush1.msra.mxu0 0.0
    %2822 = vmatprep.mubr.f32.mxu0 0.0
    %2823 = vmatmul.mubr.f32.gmra.mrb[0].mxu0 %v2753
    %v2824 = vpop.f32.mrb[0].mxu0
    %v2825 = vadd.f32 %v2751, %v2824
    %v2826 = vpop.f32.mrb[0].mxu0
    %2827 = vmatprep.mubr.f32.mxu0 0.0
    %2828 = vmatmul.mubr.f32.gmra.mrb[0].mxu0 %v2756
    %v2829 = vpop.f32.mrb[0].mxu0
    %v2830 = vadd.f32 %v2751, %v2829
    %v2831 = vpop.f32.mrb[0].mxu0
    %2832 = vdwg.mxu0
    %s2833 = scalar_lea.vmem [#allocation2], 192
    %v2834 = vld [vmem:[%s2833] sm:$0xff]
    %v2835 = vld [vmem:[%s2833 + $0x8] sm:$0xff]
    %v2836 = vld [vmem:[%s2833 + $0x10] sm:$0xff]
    %v2837 = vld [vmem:[%s2833 + $0x18] sm:$0xff]
    %v2838 = vlaneseq
    %v2839 = vshrl.u32 %v2838, 7
    %v2840 = vsub.s32 3, %v2839
    %v2841 = vrot.slane %v34, %v2840
    %v2843 = vsel %vm46, %v32, 0
    %v2846 = vsel %vm46, %v33, 0
    %2848 = vmatprep.subr.mxu0 0.0
    %2849 = vmatpush1.msra.mxu0 %v2834
    %2850 = vmatprep.subr.mxu0 0.0
    %2851 = vmatpush1.msra.mxu0 %v2835
    %2852 = vmatprep.subr.mxu0 0.0
    %2853 = vmatpush1.msra.mxu0 %v2836
    %2854 = vmatprep.subr.mxu0 0.0
    %2855 = vmatpush1.msra.mxu0 %v2837
    %2856 = vmatprep.subr.mxu0 0.0
    %2857 = vmatpush1.msra.mxu0 0.0
    %2858 = vmatprep.subr.mxu0 0.0
    %2859 = vmatpush1.msra.mxu0 0.0
    %2860 = vmatprep.subr.mxu0 0.0
    %2861 = vmatpush1.msra.mxu0 0.0
    %2862 = vmatprep.subr.mxu0 0.0
    %2863 = vmatpush1.msra.mxu0 0.0
    %2864 = vmatprep.subr.mxu0 0.0
    %2865 = vmatpush1.msra.mxu0 0.0
    %2866 = vmatprep.subr.mxu0 0.0
    %2867 = vmatpush1.msra.mxu0 0.0
    %2868 = vmatprep.subr.mxu0 0.0
    %2869 = vmatpush1.msra.mxu0 0.0
    %2870 = vmatprep.subr.mxu0 0.0
    %2871 = vmatpush1.msra.mxu0 0.0
    %2872 = vmatprep.subr.mxu0 0.0
    %2873 = vmatpush1.msra.mxu0 0.0
    %2874 = vmatprep.subr.mxu0 0.0
    %2875 = vmatpush1.msra.mxu0 0.0
    %2876 = vmatprep.subr.mxu0 0.0
    %2877 = vmatpush1.msra.mxu0 0.0
    %2878 = vmatprep.subr.mxu0 0.0
    %2879 = vmatpush1.msra.mxu0 0.0
    %2880 = vmatprep.subr.mxu0 0.0
    %2881 = vmatpush1.msra.mxu0 0.0
    %2882 = vmatprep.subr.mxu0 0.0
    %2883 = vmatpush1.msra.mxu0 0.0
    %2884 = vmatprep.subr.mxu0 0.0
    %2885 = vmatpush1.msra.mxu0 0.0
    %2886 = vmatprep.subr.mxu0 0.0
    %2887 = vmatpush1.msra.mxu0 0.0
    %2888 = vmatprep.subr.mxu0 0.0
    %2889 = vmatpush1.msra.mxu0 0.0
    %2890 = vmatprep.subr.mxu0 0.0
    %2891 = vmatpush1.msra.mxu0 0.0
    %2892 = vmatprep.subr.mxu0 0.0
    %2893 = vmatpush1.msra.mxu0 0.0
    %2894 = vmatprep.subr.mxu0 0.0
    %2895 = vmatpush1.msra.mxu0 0.0
    %2896 = vmatprep.subr.mxu0 0.0
    %2897 = vmatpush1.msra.mxu0 0.0
    %2898 = vmatprep.subr.mxu0 0.0
    %2899 = vmatpush1.msra.mxu0 0.0
    %2900 = vmatprep.subr.mxu0 0.0
    %2901 = vmatpush1.msra.mxu0 0.0
    %2902 = vmatprep.subr.mxu0 0.0
    %2903 = vmatpush1.msra.mxu0 0.0
    %2904 = vmatprep.subr.mxu0 0.0
    %2905 = vmatpush1.msra.mxu0 0.0
    %2906 = vmatprep.subr.mxu0 0.0
    %2907 = vmatpush1.msra.mxu0 0.0
    %2908 = vmatprep.subr.mxu0 0.0
    %2909 = vmatpush1.msra.mxu0 0.0
    %2910 = vmatprep.subr.mxu0 0.0
    %2911 = vmatpush1.msra.mxu0 0.0
    %2912 = vmatprep.mubr.f32.mxu0 0.0
    %2913 = vmatmul.mubr.f32.gmra.mrb[0].mxu0 %v2843
    %v2914 = vpop.f32.mrb[0].mxu0
    %v2915 = vadd.f32 %v2841, %v2914
    %v2916 = vpop.f32.mrb[0].mxu0
    %2917 = vmatprep.mubr.f32.mxu0 0.0
    %2918 = vmatmul.mubr.f32.gmra.mrb[0].mxu0 %v2846
    %v2919 = vpop.f32.mrb[0].mxu0
    %v2920 = vadd.f32 %v2841, %v2919
    %v2921 = vpop.f32.mrb[0].mxu0
    %2922 = vdwg.mxu0
    %s2923 = scalar_lea.vmem [#allocation2], 256
    %v2924 = vld [vmem:[%s2923] sm:$0xff]
    %v2925 = vld [vmem:[%s2923 + $0x8] sm:$0xff]
    %v2926 = vld [vmem:[%s2923 + $0x10] sm:$0xff]
    %v2927 = vld [vmem:[%s2923 + $0x18] sm:$0xff]
    %2930 = vrot.lane.b32.xlu0 %v2825, 120
    %v2931 = vpop.permute.xlu0 %2930
    %2932 = vrot.lane.b32.xlu0 %v2830, 120
    %v2933 = vpop.permute.xlu0 %2932
    %2936 = vrot.lane.b32.xlu0 %v2825, 112
    %v2937 = vpop.permute.xlu0 %2936
    %2938 = vrot.lane.b32.xlu0 %v2830, 112
    %v2939 = vpop.permute.xlu0 %2938
    %2942 = vrot.lane.b32.xlu0 %v2825, 104
    %v2943 = vpop.permute.xlu0 %2942
    %2944 = vrot.lane.b32.xlu0 %v2830, 104
    %v2945 = vpop.permute.xlu0 %2944
    %v2948 = vcombine.low %v2825, %v2937
    %v2949 = vcombine.high %v2825, %v2937
    %v2951 = vunpack.c.l.s4 1983009808
    %v2952 = vunpack.c.0.s8 %v2951
    %v2953 = vlaneseq
    %v2954 = vshrl.u32 %v2953, 7
    %v2955 = vsub.s32 %v2952, %v2954
    %v2956 = vrot.slane %v2948, %v2955
    %v2958 = vunpack.c.l.s4 1983009808
    %v2959 = vunpack.c.0.s8 %v2958
    %v2960 = vlaneseq
    %v2961 = vshrl.u32 %v2960, 7
    %v2962 = vsub.s32 %v2959, %v2961
    %v2963 = vrot.slane %v2949, %v2962
    %v2964 = vcombine.low %v2931, %v2943
    %v2965 = vcombine.high %v2931, %v2943
    %v2967 = vunpack.c.l.s4 1983009808
    %v2968 = vunpack.c.0.s8 %v2967
    %v2969 = vlaneseq
    %v2970 = vshrl.u32 %v2969, 7
    %v2971 = vsub.s32 %v2968, %v2970
    %v2972 = vrot.slane %v2964, %v2971
    %v2974 = vunpack.c.l.s4 1983009808
    %v2975 = vunpack.c.0.s8 %v2974
    %v2976 = vlaneseq
    %v2977 = vshrl.u32 %v2976, 7
    %v2978 = vsub.s32 %v2975, %v2977
    %v2979 = vrot.slane %v2965, %v2978
    %v2980 = vcombine.low %v2956, %v2972
    %v2981 = vcombine.high %v2956, %v2972
    %v2983 = vunpack.c.l.s4 1934713408
    %v2984 = vunpack.c.0.s8 %v2983
    %v2985 = vlaneseq
    %v2986 = vshrl.u32 %v2985, 7
    %v2987 = vsub.s32 %v2984, %v2986
    %v2988 = vrot.slane %v2980, %v2987
    %v2990 = vunpack.c.l.s4 1934713408
    %v2991 = vunpack.c.0.s8 %v2990
    %v2992 = vlaneseq
    %v2993 = vshrl.u32 %v2992, 7
    %v2994 = vsub.s32 %v2991, %v2993
    %v2995 = vrot.slane %v2981, %v2994
    %v2996 = vcombine.low %v2963, %v2979
    %v2997 = vcombine.high %v2963, %v2979
    %v2999 = vunpack.c.l.s4 1934713408
    %v3000 = vunpack.c.0.s8 %v2999
    %v3001 = vlaneseq
    %v3002 = vshrl.u32 %v3001, 7
    %v3003 = vsub.s32 %v3000, %v3002
    %v3004 = vrot.slane %v2996, %v3003
    %v3006 = vunpack.c.l.s4 1934713408
    %v3007 = vunpack.c.0.s8 %v3006
    %v3008 = vlaneseq
    %v3009 = vshrl.u32 %v3008, 7
    %v3010 = vsub.s32 %v3007, %v3009
    %v3011 = vrot.slane %v2997, %v3010
    %v3012 = vcombine.high %v2988, 0.0
    %v3013 = vcombine.high %v2995, 0.0
    %v3014 = vcombine.high %v3004, 0.0
    %v3015 = vcombine.high %v3011, 0.0
    %v3016 = vcombine.low %v2830, %v2939
    %v3017 = vcombine.high %v2830, %v2939
    %v3019 = vunpack.c.l.s4 1983009808
    %v3020 = vunpack.c.0.s8 %v3019
    %v3021 = vlaneseq
    %v3022 = vshrl.u32 %v3021, 7
    %v3023 = vsub.s32 %v3020, %v3022
    %v3024 = vrot.slane %v3016, %v3023
    %v3026 = vunpack.c.l.s4 1983009808
    %v3027 = vunpack.c.0.s8 %v3026
    %v3028 = vlaneseq
    %v3029 = vshrl.u32 %v3028, 7
    %v3030 = vsub.s32 %v3027, %v3029
    %v3031 = vrot.slane %v3017, %v3030
    %v3032 = vcombine.low %v2933, %v2945
    %v3033 = vcombine.high %v2933, %v2945
    %v3035 = vunpack.c.l.s4 1983009808
    %v3036 = vunpack.c.0.s8 %v3035
    %v3037 = vlaneseq
    %v3038 = vshrl.u32 %v3037, 7
    %v3039 = vsub.s32 %v3036, %v3038
    %v3040 = vrot.slane %v3032, %v3039
    %v3042 = vunpack.c.l.s4 1983009808
    %v3043 = vunpack.c.0.s8 %v3042
    %v3044 = vlaneseq
    %v3045 = vshrl.u32 %v3044, 7
    %v3046 = vsub.s32 %v3043, %v3045
    %v3047 = vrot.slane %v3033, %v3046
    %v3048 = vcombine.low %v3024, %v3040
    %v3049 = vcombine.high %v3024, %v3040
    %v3051 = vunpack.c.l.s4 1934713408
    %v3052 = vunpack.c.0.s8 %v3051
    %v3053 = vlaneseq
    %v3054 = vshrl.u32 %v3053, 7
    %v3055 = vsub.s32 %v3052, %v3054
    %v3056 = vrot.slane %v3048, %v3055
    %v3058 = vunpack.c.l.s4 1934713408
    %v3059 = vunpack.c.0.s8 %v3058
    %v3060 = vlaneseq
    %v3061 = vshrl.u32 %v3060, 7
    %v3062 = vsub.s32 %v3059, %v3061
    %v3063 = vrot.slane %v3049, %v3062
    %v3064 = vcombine.low %v3031, %v3047
    %v3065 = vcombine.high %v3031, %v3047
    %v3067 = vunpack.c.l.s4 1934713408
    %v3068 = vunpack.c.0.s8 %v3067
    %v3069 = vlaneseq
    %v3070 = vshrl.u32 %v3069, 7
    %v3071 = vsub.s32 %v3068, %v3070
    %v3072 = vrot.slane %v3064, %v3071
    %v3074 = vunpack.c.l.s4 1934713408
    %v3075 = vunpack.c.0.s8 %v3074
    %v3076 = vlaneseq
    %v3077 = vshrl.u32 %v3076, 7
    %v3078 = vsub.s32 %v3075, %v3077
    %v3079 = vrot.slane %v3065, %v3078
    %v3080 = vcombine.high %v3056, 0.0
    %v3081 = vcombine.high %v3063, 0.0
    %v3082 = vcombine.high %v3072, 0.0
    %v3083 = vcombine.high %v3079, 0.0
    %v3084 = vcombine.low %v2988, %v2995
    %v3086 = vunpack.c.l.s4 1983009808
    %v3087 = vunpack.c.0.s8 %v3086
    %v3088 = vlaneseq
    %v3089 = vshrl.u32 %v3088, 7
    %v3090 = vsub.s32 %v3087, %v3089
    %v3091 = vrot.slane %v3084, %v3090
    %v3092 = vcombine.low %v3012, %v3013
    %v3094 = vunpack.c.l.s4 1983009808
    %v3095 = vunpack.c.0.s8 %v3094
    %v3096 = vlaneseq
    %v3097 = vshrl.u32 %v3096, 7
    %v3098 = vsub.s32 %v3095, %v3097
    %v3099 = vrot.slane %v3092, %v3098
    %v3100 = vcombine.low %v3004, %v3011
    %v3102 = vunpack.c.l.s4 1983009808
    %v3103 = vunpack.c.0.s8 %v3102
    %v3104 = vlaneseq
    %v3105 = vshrl.u32 %v3104, 7
    %v3106 = vsub.s32 %v3103, %v3105
    %v3107 = vrot.slane %v3100, %v3106
    %v3108 = vcombine.low %v3014, %v3015
    %v3110 = vunpack.c.l.s4 1983009808
    %v3111 = vunpack.c.0.s8 %v3110
    %v3112 = vlaneseq
    %v3113 = vshrl.u32 %v3112, 7
    %v3114 = vsub.s32 %v3111, %v3113
    %v3115 = vrot.slane %v3108, %v3114
    %v3116 = vcombine.low %v3091, %v3099
    %v3117 = vcombine.high %v3091, %v3099
    %v3119 = vunpack.c.l.s4 1934713408
    %v3120 = vunpack.c.0.s8 %v3119
    %v3121 = vlaneseq
    %v3122 = vshrl.u32 %v3121, 7
    %v3123 = vsub.s32 %v3120, %v3122
    %v3124 = vrot.slane %v3116, %v3123
    %v3126 = vunpack.c.l.s4 1934713408
    %v3127 = vunpack.c.0.s8 %v3126
    %v3128 = vlaneseq
    %v3129 = vshrl.u32 %v3128, 7
    %v3130 = vsub.s32 %v3127, %v3129
    %v3131 = vrot.slane %v3117, %v3130
    %v3132 = vcombine.low %v3107, %v3115
    %v3133 = vcombine.high %v3107, %v3115
    %v3135 = vunpack.c.l.s4 1934713408
    %v3136 = vunpack.c.0.s8 %v3135
    %v3137 = vlaneseq
    %v3138 = vshrl.u32 %v3137, 7
    %v3139 = vsub.s32 %v3136, %v3138
    %v3140 = vrot.slane %v3132, %v3139
    %v3142 = vunpack.c.l.s4 1934713408
    %v3143 = vunpack.c.0.s8 %v3142
    %v3144 = vlaneseq
    %v3145 = vshrl.u32 %v3144, 7
    %v3146 = vsub.s32 %v3143, %v3145
    %v3147 = vrot.slane %v3133, %v3146
    %v3148 = vcombine.low %v3124, %v3140
    %v3149 = vcombine.high %v3124, %v3140
    %v3150 = vcombine.low %v3131, %v3147
    %v3151 = vcombine.high %v3131, %v3147
    %v3152 = vcombine.low %v3056, %v3063
    %v3154 = vunpack.c.l.s4 1983009808
    %v3155 = vunpack.c.0.s8 %v3154
    %v3156 = vlaneseq
    %v3157 = vshrl.u32 %v3156, 7
    %v3158 = vsub.s32 %v3155, %v3157
    %v3159 = vrot.slane %v3152, %v3158
    %v3160 = vcombine.low %v3080, %v3081
    %v3162 = vunpack.c.l.s4 1983009808
    %v3163 = vunpack.c.0.s8 %v3162
    %v3164 = vlaneseq
    %v3165 = vshrl.u32 %v3164, 7
    %v3166 = vsub.s32 %v3163, %v3165
    %v3167 = vrot.slane %v3160, %v3166
    %v3168 = vcombine.low %v3072, %v3079
    %v3170 = vunpack.c.l.s4 1983009808
    %v3171 = vunpack.c.0.s8 %v3170
    %v3172 = vlaneseq
    %v3173 = vshrl.u32 %v3172, 7
    %v3174 = vsub.s32 %v3171, %v3173
    %v3175 = vrot.slane %v3168, %v3174
    %v3176 = vcombine.low %v3082, %v3083
    %v3178 = vunpack.c.l.s4 1983009808
    %v3179 = vunpack.c.0.s8 %v3178
    %v3180 = vlaneseq
    %v3181 = vshrl.u32 %v3180, 7
    %v3182 = vsub.s32 %v3179, %v3181
    %v3183 = vrot.slane %v3176, %v3182
    %v3184 = vcombine.low %v3159, %v3167
    %v3185 = vcombine.high %v3159, %v3167
    %v3187 = vunpack.c.l.s4 1934713408
    %v3188 = vunpack.c.0.s8 %v3187
    %v3189 = vlaneseq
    %v3190 = vshrl.u32 %v3189, 7
    %v3191 = vsub.s32 %v3188, %v3190
    %v3192 = vrot.slane %v3184, %v3191
    %v3194 = vunpack.c.l.s4 1934713408
    %v3195 = vunpack.c.0.s8 %v3194
    %v3196 = vlaneseq
    %v3197 = vshrl.u32 %v3196, 7
    %v3198 = vsub.s32 %v3195, %v3197
    %v3199 = vrot.slane %v3185, %v3198
    %v3200 = vcombine.low %v3175, %v3183
    %v3201 = vcombine.high %v3175, %v3183
    %v3203 = vunpack.c.l.s4 1934713408
    %v3204 = vunpack.c.0.s8 %v3203
    %v3205 = vlaneseq
    %v3206 = vshrl.u32 %v3205, 7
    %v3207 = vsub.s32 %v3204, %v3206
    %v3208 = vrot.slane %v3200, %v3207
    %v3210 = vunpack.c.l.s4 1934713408
    %v3211 = vunpack.c.0.s8 %v3210
    %v3212 = vlaneseq
    %v3213 = vshrl.u32 %v3212, 7
    %v3214 = vsub.s32 %v3211, %v3213
    %v3215 = vrot.slane %v3201, %v3214
    %v3216 = vcombine.low %v3192, %v3208
    %v3217 = vcombine.high %v3192, %v3208
    %v3218 = vcombine.low %v3199, %v3215
    %v3219 = vcombine.high %v3199, %v3215
    %3222 = vrot.lane.b32.xlu0 %v2915, 120
    %v3223 = vpop.permute.xlu0 %3222
    %3224 = vrot.lane.b32.xlu0 %v2920, 120
    %v3225 = vpop.permute.xlu0 %3224
    %3228 = vrot.lane.b32.xlu0 %v2915, 112
    %v3229 = vpop.permute.xlu0 %3228
    %3230 = vrot.lane.b32.xlu0 %v2920, 112
    %v3231 = vpop.permute.xlu0 %3230
    %3234 = vrot.lane.b32.xlu0 %v2915, 104
    %v3235 = vpop.permute.xlu0 %3234
    %3236 = vrot.lane.b32.xlu0 %v2920, 104
    %v3237 = vpop.permute.xlu0 %3236
    %v3240 = vcombine.low %v2915, %v3229
    %v3241 = vcombine.high %v2915, %v3229
    %v3243 = vunpack.c.l.s4 1983009808
    %v3244 = vunpack.c.0.s8 %v3243
    %v3245 = vlaneseq
    %v3246 = vshrl.u32 %v3245, 7
    %v3247 = vsub.s32 %v3244, %v3246
    %v3248 = vrot.slane %v3240, %v3247
    %v3250 = vunpack.c.l.s4 1983009808
    %v3251 = vunpack.c.0.s8 %v3250
    %v3252 = vlaneseq
    %v3253 = vshrl.u32 %v3252, 7
    %v3254 = vsub.s32 %v3251, %v3253
    %v3255 = vrot.slane %v3241, %v3254
    %v3256 = vcombine.low %v3223, %v3235
    %v3257 = vcombine.high %v3223, %v3235
    %v3259 = vunpack.c.l.s4 1983009808
    %v3260 = vunpack.c.0.s8 %v3259
    %v3261 = vlaneseq
    %v3262 = vshrl.u32 %v3261, 7
    %v3263 = vsub.s32 %v3260, %v3262
    %v3264 = vrot.slane %v3256, %v3263
    %v3266 = vunpack.c.l.s4 1983009808
    %v3267 = vunpack.c.0.s8 %v3266
    %v3268 = vlaneseq
    %v3269 = vshrl.u32 %v3268, 7
    %v3270 = vsub.s32 %v3267, %v3269
    %v3271 = vrot.slane %v3257, %v3270
    %v3272 = vcombine.low %v3248, %v3264
    %v3273 = vcombine.high %v3248, %v3264
    %v3275 = vunpack.c.l.s4 1934713408
    %v3276 = vunpack.c.0.s8 %v3275
    %v3277 = vlaneseq
    %v3278 = vshrl.u32 %v3277, 7
    %v3279 = vsub.s32 %v3276, %v3278
    %v3280 = vrot.slane %v3272, %v3279
    %v3282 = vunpack.c.l.s4 1934713408
    %v3283 = vunpack.c.0.s8 %v3282
    %v3284 = vlaneseq
    %v3285 = vshrl.u32 %v3284, 7
    %v3286 = vsub.s32 %v3283, %v3285
    %v3287 = vrot.slane %v3273, %v3286
    %v3288 = vcombine.low %v3255, %v3271
    %v3289 = vcombine.high %v3255, %v3271
    %v3291 = vunpack.c.l.s4 1934713408
    %v3292 = vunpack.c.0.s8 %v3291
    %v3293 = vlaneseq
    %v3294 = vshrl.u32 %v3293, 7
    %v3295 = vsub.s32 %v3292, %v3294
    %v3296 = vrot.slane %v3288, %v3295
    %v3298 = vunpack.c.l.s4 1934713408
    %v3299 = vunpack.c.0.s8 %v3298
    %v3300 = vlaneseq
    %v3301 = vshrl.u32 %v3300, 7
    %v3302 = vsub.s32 %v3299, %v3301
    %v3303 = vrot.slane %v3289, %v3302
    %v3304 = vcombine.high %v3280, 0.0
    %v3305 = vcombine.high %v3287, 0.0
    %v3306 = vcombine.high %v3296, 0.0
    %v3307 = vcombine.high %v3303, 0.0
    %v3308 = vcombine.low %v2920, %v3231
    %v3309 = vcombine.high %v2920, %v3231
    %v3311 = vunpack.c.l.s4 1983009808
    %v3312 = vunpack.c.0.s8 %v3311
    %v3313 = vlaneseq
    %v3314 = vshrl.u32 %v3313, 7
    %v3315 = vsub.s32 %v3312, %v3314
    %v3316 = vrot.slane %v3308, %v3315
    %v3318 = vunpack.c.l.s4 1983009808
    %v3319 = vunpack.c.0.s8 %v3318
    %v3320 = vlaneseq
    %v3321 = vshrl.u32 %v3320, 7
    %v3322 = vsub.s32 %v3319, %v3321
    %v3323 = vrot.slane %v3309, %v3322
    %v3324 = vcombine.low %v3225, %v3237
    %v3325 = vcombine.high %v3225, %v3237
    %v3327 = vunpack.c.l.s4 1983009808
    %v3328 = vunpack.c.0.s8 %v3327
    %v3329 = vlaneseq
    %v3330 = vshrl.u32 %v3329, 7
    %v3331 = vsub.s32 %v3328, %v3330
    %v3332 = vrot.slane %v3324, %v3331
    %v3334 = vunpack.c.l.s4 1983009808
    %v3335 = vunpack.c.0.s8 %v3334
    %v3336 = vlaneseq
    %v3337 = vshrl.u32 %v3336, 7
    %v3338 = vsub.s32 %v3335, %v3337
    %v3339 = vrot.slane %v3325, %v3338
    %v3340 = vcombine.low %v3316, %v3332
    %v3341 = vcombine.high %v3316, %v3332
    %v3343 = vunpack.c.l.s4 1934713408
    %v3344 = vunpack.c.0.s8 %v3343
    %v3345 = vlaneseq
    %v3346 = vshrl.u32 %v3345, 7
    %v3347 = vsub.s32 %v3344, %v3346
    %v3348 = vrot.slane %v3340, %v3347
    %v3350 = vunpack.c.l.s4 1934713408
    %v3351 = vunpack.c.0.s8 %v3350
    %v3352 = vlaneseq
    %v3353 = vshrl.u32 %v3352, 7
    %v3354 = vsub.s32 %v3351, %v3353
    %v3355 = vrot.slane %v3341, %v3354
    %v3356 = vcombine.low %v3323, %v3339
    %v3357 = vcombine.high %v3323, %v3339
    %v3359 = vunpack.c.l.s4 1934713408
    %v3360 = vunpack.c.0.s8 %v3359
    %v3361 = vlaneseq
    %v3362 = vshrl.u32 %v3361, 7
    %v3363 = vsub.s32 %v3360, %v3362
    %v3364 = vrot.slane %v3356, %v3363
    %v3366 = vunpack.c.l.s4 1934713408
    %v3367 = vunpack.c.0.s8 %v3366
    %v3368 = vlaneseq
    %v3369 = vshrl.u32 %v3368, 7
    %v3370 = vsub.s32 %v3367, %v3369
    %v3371 = vrot.slane %v3357, %v3370
    %v3372 = vcombine.high %v3348, 0.0
    %v3373 = vcombine.high %v3355, 0.0
    %v3374 = vcombine.high %v3364, 0.0
    %v3375 = vcombine.high %v3371, 0.0
    %v3376 = vcombine.low %v3280, %v3287
    %v3378 = vunpack.c.l.s4 1983009808
    %v3379 = vunpack.c.0.s8 %v3378
    %v3380 = vlaneseq
    %v3381 = vshrl.u32 %v3380, 7
    %v3382 = vsub.s32 %v3379, %v3381
    %v3383 = vrot.slane %v3376, %v3382
    %v3384 = vcombine.low %v3304, %v3305
    %v3386 = vunpack.c.l.s4 1983009808
    %v3387 = vunpack.c.0.s8 %v3386
    %v3388 = vlaneseq
    %v3389 = vshrl.u32 %v3388, 7
    %v3390 = vsub.s32 %v3387, %v3389
    %v3391 = vrot.slane %v3384, %v3390
    %v3392 = vcombine.low %v3296, %v3303
    %v3394 = vunpack.c.l.s4 1983009808
    %v3395 = vunpack.c.0.s8 %v3394
    %v3396 = vlaneseq
    %v3397 = vshrl.u32 %v3396, 7
    %v3398 = vsub.s32 %v3395, %v3397
    %v3399 = vrot.slane %v3392, %v3398
    %v3400 = vcombine.low %v3306, %v3307
    %v3402 = vunpack.c.l.s4 1983009808
    %v3403 = vunpack.c.0.s8 %v3402
    %v3404 = vlaneseq
    %v3405 = vshrl.u32 %v3404, 7
    %v3406 = vsub.s32 %v3403, %v3405
    %v3407 = vrot.slane %v3400, %v3406
    %v3408 = vcombine.low %v3383, %v3391
    %v3409 = vcombine.high %v3383, %v3391
    %v3411 = vunpack.c.l.s4 1934713408
    %v3412 = vunpack.c.0.s8 %v3411
    %v3413 = vlaneseq
    %v3414 = vshrl.u32 %v3413, 7
    %v3415 = vsub.s32 %v3412, %v3414
    %v3416 = vrot.slane %v3408, %v3415
    %v3418 = vunpack.c.l.s4 1934713408
    %v3419 = vunpack.c.0.s8 %v3418
    %v3420 = vlaneseq
    %v3421 = vshrl.u32 %v3420, 7
    %v3422 = vsub.s32 %v3419, %v3421
    %v3423 = vrot.slane %v3409, %v3422
    %v3424 = vcombine.low %v3399, %v3407
    %v3425 = vcombine.high %v3399, %v3407
    %v3427 = vunpack.c.l.s4 1934713408
    %v3428 = vunpack.c.0.s8 %v3427
    %v3429 = vlaneseq
    %v3430 = vshrl.u32 %v3429, 7
    %v3431 = vsub.s32 %v3428, %v3430
    %v3432 = vrot.slane %v3424, %v3431
    %v3434 = vunpack.c.l.s4 1934713408
    %v3435 = vunpack.c.0.s8 %v3434
    %v3436 = vlaneseq
    %v3437 = vshrl.u32 %v3436, 7
    %v3438 = vsub.s32 %v3435, %v3437
    %v3439 = vrot.slane %v3425, %v3438
    %v3440 = vcombine.low %v3416, %v3432
    %v3441 = vcombine.high %v3416, %v3432
    %v3442 = vcombine.low %v3423, %v3439
    %v3443 = vcombine.high %v3423, %v3439
    %v3444 = vcombine.low %v3348, %v3355
    %v3446 = vunpack.c.l.s4 1983009808
    %v3447 = vunpack.c.0.s8 %v3446
    %v3448 = vlaneseq
    %v3449 = vshrl.u32 %v3448, 7
    %v3450 = vsub.s32 %v3447, %v3449
    %v3451 = vrot.slane %v3444, %v3450
    %v3452 = vcombine.low %v3372, %v3373
    %v3454 = vunpack.c.l.s4 1983009808
    %v3455 = vunpack.c.0.s8 %v3454
    %v3456 = vlaneseq
    %v3457 = vshrl.u32 %v3456, 7
    %v3458 = vsub.s32 %v3455, %v3457
    %v3459 = vrot.slane %v3452, %v3458
    %v3460 = vcombine.low %v3364, %v3371
    %v3462 = vunpack.c.l.s4 1983009808
    %v3463 = vunpack.c.0.s8 %v3462
    %v3464 = vlaneseq
    %v3465 = vshrl.u32 %v3464, 7
    %v3466 = vsub.s32 %v3463, %v3465
    %v3467 = vrot.slane %v3460, %v3466
    %v3468 = vcombine.low %v3374, %v3375
    %v3470 = vunpack.c.l.s4 1983009808
    %v3471 = vunpack.c.0.s8 %v3470
    %v3472 = vlaneseq
    %v3473 = vshrl.u32 %v3472, 7
    %v3474 = vsub.s32 %v3471, %v3473
    %v3475 = vrot.slane %v3468, %v3474
    %v3476 = vcombine.low %v3451, %v3459
    %v3477 = vcombine.high %v3451, %v3459
    %v3479 = vunpack.c.l.s4 1934713408
    %v3480 = vunpack.c.0.s8 %v3479
    %v3481 = vlaneseq
    %v3482 = vshrl.u32 %v3481, 7
    %v3483 = vsub.s32 %v3480, %v3482
    %v3484 = vrot.slane %v3476, %v3483
    %v3486 = vunpack.c.l.s4 1934713408
    %v3487 = vunpack.c.0.s8 %v3486
    %v3488 = vlaneseq
    %v3489 = vshrl.u32 %v3488, 7
    %v3490 = vsub.s32 %v3487, %v3489
    %v3491 = vrot.slane %v3477, %v3490
    %v3492 = vcombine.low %v3467, %v3475
    %v3493 = vcombine.high %v3467, %v3475
    %v3495 = vunpack.c.l.s4 1934713408
    %v3496 = vunpack.c.0.s8 %v3495
    %v3497 = vlaneseq
    %v3498 = vshrl.u32 %v3497, 7
    %v3499 = vsub.s32 %v3496, %v3498
    %v3500 = vrot.slane %v3492, %v3499
    %v3502 = vunpack.c.l.s4 1934713408
    %v3503 = vunpack.c.0.s8 %v3502
    %v3504 = vlaneseq
    %v3505 = vshrl.u32 %v3504, 7
    %v3506 = vsub.s32 %v3503, %v3505
    %v3507 = vrot.slane %v3493, %v3506
    %v3508 = vcombine.low %v3484, %v3500
    %v3509 = vcombine.high %v3484, %v3500
    %v3510 = vcombine.low %v3491, %v3507
    %v3511 = vcombine.high %v3491, %v3507
    %3512 = vrot.lane.b32.xlu0 %v2915, 96
    %v3513 = vpop.permute.xlu0 %3512
    %3514 = vrot.lane.b32.xlu0 %v2920, 96
    %v3515 = vpop.permute.xlu0 %3514
    %3516 = vrot.lane.b32.xlu0 %v3223, 96
    %v3517 = vpop.permute.xlu0 %3516
    %3518 = vrot.lane.b32.xlu0 %v3225, 96
    %v3519 = vpop.permute.xlu0 %3518
    %3520 = vrot.lane.b32.xlu0 %v3229, 96
    %v3521 = vpop.permute.xlu0 %3520
    %3522 = vrot.lane.b32.xlu0 %v3231, 96
    %v3523 = vpop.permute.xlu0 %3522
    %3524 = vrot.lane.b32.xlu0 %v3235, 96
    %v3525 = vpop.permute.xlu0 %3524
    %3526 = vrot.lane.b32.xlu0 %v3237, 96
    %v3527 = vpop.permute.xlu0 %3526
    %v3536 = vcombine.low %v3513, %v3521
    %v3537 = vcombine.high %v3513, %v3521
    %v3539 = vunpack.c.l.s4 1983009808
    %v3540 = vunpack.c.0.s8 %v3539
    %v3541 = vlaneseq
    %v3542 = vshrl.u32 %v3541, 7
    %v3543 = vsub.s32 %v3540, %v3542
    %v3544 = vrot.slane %v3536, %v3543
    %v3546 = vunpack.c.l.s4 1983009808
    %v3547 = vunpack.c.0.s8 %v3546
    %v3548 = vlaneseq
    %v3549 = vshrl.u32 %v3548, 7
    %v3550 = vsub.s32 %v3547, %v3549
    %v3551 = vrot.slane %v3537, %v3550
    %v3552 = vcombine.low %v3517, %v3525
    %v3553 = vcombine.high %v3517, %v3525
    %v3555 = vunpack.c.l.s4 1983009808
    %v3556 = vunpack.c.0.s8 %v3555
    %v3557 = vlaneseq
    %v3558 = vshrl.u32 %v3557, 7
    %v3559 = vsub.s32 %v3556, %v3558
    %v3560 = vrot.slane %v3552, %v3559
    %v3562 = vunpack.c.l.s4 1983009808
    %v3563 = vunpack.c.0.s8 %v3562
    %v3564 = vlaneseq
    %v3565 = vshrl.u32 %v3564, 7
    %v3566 = vsub.s32 %v3563, %v3565
    %v3567 = vrot.slane %v3553, %v3566
    %v3568 = vcombine.low %v3544, %v3560
    %v3569 = vcombine.high %v3544, %v3560
    %v3571 = vunpack.c.l.s4 1934713408
    %v3572 = vunpack.c.0.s8 %v3571
    %v3573 = vlaneseq
    %v3574 = vshrl.u32 %v3573, 7
    %v3575 = vsub.s32 %v3572, %v3574
    %v3576 = vrot.slane %v3568, %v3575
    %v3578 = vunpack.c.l.s4 1934713408
    %v3579 = vunpack.c.0.s8 %v3578
    %v3580 = vlaneseq
    %v3581 = vshrl.u32 %v3580, 7
    %v3582 = vsub.s32 %v3579, %v3581
    %v3583 = vrot.slane %v3569, %v3582
    %v3584 = vcombine.low %v3551, %v3567
    %v3585 = vcombine.high %v3551, %v3567
    %v3587 = vunpack.c.l.s4 1934713408
    %v3588 = vunpack.c.0.s8 %v3587
    %v3589 = vlaneseq
    %v3590 = vshrl.u32 %v3589, 7
    %v3591 = vsub.s32 %v3588, %v3590
    %v3592 = vrot.slane %v3584, %v3591
    %v3594 = vunpack.c.l.s4 1934713408
    %v3595 = vunpack.c.0.s8 %v3594
    %v3596 = vlaneseq
    %v3597 = vshrl.u32 %v3596, 7
    %v3598 = vsub.s32 %v3595, %v3597
    %v3599 = vrot.slane %v3585, %v3598
    %v3600 = vcombine.high %v3576, 0.0
    %v3601 = vcombine.high %v3583, 0.0
    %v3602 = vcombine.high %v3592, 0.0
    %v3603 = vcombine.high %v3599, 0.0
    %v3604 = vcombine.low %v3515, %v3523
    %v3605 = vcombine.high %v3515, %v3523
    %v3607 = vunpack.c.l.s4 1983009808
    %v3608 = vunpack.c.0.s8 %v3607
    %v3609 = vlaneseq
    %v3610 = vshrl.u32 %v3609, 7
    %v3611 = vsub.s32 %v3608, %v3610
    %v3612 = vrot.slane %v3604, %v3611
    %v3614 = vunpack.c.l.s4 1983009808
    %v3615 = vunpack.c.0.s8 %v3614
    %v3616 = vlaneseq
    %v3617 = vshrl.u32 %v3616, 7
    %v3618 = vsub.s32 %v3615, %v3617
    %v3619 = vrot.slane %v3605, %v3618
    %v3620 = vcombine.low %v3519, %v3527
    %v3621 = vcombine.high %v3519, %v3527
    %v3623 = vunpack.c.l.s4 1983009808
    %v3624 = vunpack.c.0.s8 %v3623
    %v3625 = vlaneseq
    %v3626 = vshrl.u32 %v3625, 7
    %v3627 = vsub.s32 %v3624, %v3626
    %v3628 = vrot.slane %v3620, %v3627
    %v3630 = vunpack.c.l.s4 1983009808
    %v3631 = vunpack.c.0.s8 %v3630
    %v3632 = vlaneseq
    %v3633 = vshrl.u32 %v3632, 7
    %v3634 = vsub.s32 %v3631, %v3633
    %v3635 = vrot.slane %v3621, %v3634
    %v3636 = vcombine.low %v3612, %v3628
    %v3637 = vcombine.high %v3612, %v3628
    %v3639 = vunpack.c.l.s4 1934713408
    %v3640 = vunpack.c.0.s8 %v3639
    %v3641 = vlaneseq
    %v3642 = vshrl.u32 %v3641, 7
    %v3643 = vsub.s32 %v3640, %v3642
    %v3644 = vrot.slane %v3636, %v3643
    %v3646 = vunpack.c.l.s4 1934713408
    %v3647 = vunpack.c.0.s8 %v3646
    %v3648 = vlaneseq
    %v3649 = vshrl.u32 %v3648, 7
    %v3650 = vsub.s32 %v3647, %v3649
    %v3651 = vrot.slane %v3637, %v3650
    %v3652 = vcombine.low %v3619, %v3635
    %v3653 = vcombine.high %v3619, %v3635
    %v3655 = vunpack.c.l.s4 1934713408
    %v3656 = vunpack.c.0.s8 %v3655
    %v3657 = vlaneseq
    %v3658 = vshrl.u32 %v3657, 7
    %v3659 = vsub.s32 %v3656, %v3658
    %v3660 = vrot.slane %v3652, %v3659
    %v3662 = vunpack.c.l.s4 1934713408
    %v3663 = vunpack.c.0.s8 %v3662
    %v3664 = vlaneseq
    %v3665 = vshrl.u32 %v3664, 7
    %v3666 = vsub.s32 %v3663, %v3665
    %v3667 = vrot.slane %v3653, %v3666
    %v3668 = vcombine.high %v3644, 0.0
    %v3669 = vcombine.high %v3651, 0.0
    %v3670 = vcombine.high %v3660, 0.0
    %v3671 = vcombine.high %v3667, 0.0
    %v3672 = vcombine.low %v3576, %v3583
    %v3674 = vunpack.c.l.s4 1983009808
    %v3675 = vunpack.c.0.s8 %v3674
    %v3676 = vlaneseq
    %v3677 = vshrl.u32 %v3676, 7
    %v3678 = vsub.s32 %v3675, %v3677
    %v3679 = vrot.slane %v3672, %v3678
    %v3680 = vcombine.low %v3600, %v3601
    %v3682 = vunpack.c.l.s4 1983009808
    %v3683 = vunpack.c.0.s8 %v3682
    %v3684 = vlaneseq
    %v3685 = vshrl.u32 %v3684, 7
    %v3686 = vsub.s32 %v3683, %v3685
    %v3687 = vrot.slane %v3680, %v3686
    %v3688 = vcombine.low %v3592, %v3599
    %v3690 = vunpack.c.l.s4 1983009808
    %v3691 = vunpack.c.0.s8 %v3690
    %v3692 = vlaneseq
    %v3693 = vshrl.u32 %v3692, 7
    %v3694 = vsub.s32 %v3691, %v3693
    %v3695 = vrot.slane %v3688, %v3694
    %v3696 = vcombine.low %v3602, %v3603
    %v3698 = vunpack.c.l.s4 1983009808
    %v3699 = vunpack.c.0.s8 %v3698
    %v3700 = vlaneseq
    %v3701 = vshrl.u32 %v3700, 7
    %v3702 = vsub.s32 %v3699, %v3701
    %v3703 = vrot.slane %v3696, %v3702
    %v3704 = vcombine.low %v3679, %v3687
    %v3705 = vcombine.high %v3679, %v3687
    %v3707 = vunpack.c.l.s4 1934713408
    %v3708 = vunpack.c.0.s8 %v3707
    %v3709 = vlaneseq
    %v3710 = vshrl.u32 %v3709, 7
    %v3711 = vsub.s32 %v3708, %v3710
    %v3712 = vrot.slane %v3704, %v3711
    %v3714 = vunpack.c.l.s4 1934713408
    %v3715 = vunpack.c.0.s8 %v3714
    %v3716 = vlaneseq
    %v3717 = vshrl.u32 %v3716, 7
    %v3718 = vsub.s32 %v3715, %v3717
    %v3719 = vrot.slane %v3705, %v3718
    %v3720 = vcombine.low %v3695, %v3703
    %v3721 = vcombine.high %v3695, %v3703
    %v3723 = vunpack.c.l.s4 1934713408
    %v3724 = vunpack.c.0.s8 %v3723
    %v3725 = vlaneseq
    %v3726 = vshrl.u32 %v3725, 7
    %v3727 = vsub.s32 %v3724, %v3726
    %v3728 = vrot.slane %v3720, %v3727
    %v3730 = vunpack.c.l.s4 1934713408
    %v3731 = vunpack.c.0.s8 %v3730
    %v3732 = vlaneseq
    %v3733 = vshrl.u32 %v3732, 7
    %v3734 = vsub.s32 %v3731, %v3733
    %v3735 = vrot.slane %v3721, %v3734
    %v3736 = vcombine.low %v3712, %v3728
    %v3737 = vcombine.high %v3712, %v3728
    %v3738 = vcombine.low %v3719, %v3735
    %v3739 = vcombine.high %v3719, %v3735
    %v3740 = vcombine.low %v3644, %v3651
    %v3742 = vunpack.c.l.s4 1983009808
    %v3743 = vunpack.c.0.s8 %v3742
    %v3744 = vlaneseq
    %v3745 = vshrl.u32 %v3744, 7
    %v3746 = vsub.s32 %v3743, %v3745
    %v3747 = vrot.slane %v3740, %v3746
    %v3748 = vcombine.low %v3668, %v3669
    %v3750 = vunpack.c.l.s4 1983009808
    %v3751 = vunpack.c.0.s8 %v3750
    %v3752 = vlaneseq
    %v3753 = vshrl.u32 %v3752, 7
    %v3754 = vsub.s32 %v3751, %v3753
    %v3755 = vrot.slane %v3748, %v3754
    %v3756 = vcombine.low %v3660, %v3667
    %v3758 = vunpack.c.l.s4 1983009808
    %v3759 = vunpack.c.0.s8 %v3758
    %v3760 = vlaneseq
    %v3761 = vshrl.u32 %v3760, 7
    %v3762 = vsub.s32 %v3759, %v3761
    %v3763 = vrot.slane %v3756, %v3762
    %v3764 = vcombine.low %v3670, %v3671
    %v3766 = vunpack.c.l.s4 1983009808
    %v3767 = vunpack.c.0.s8 %v3766
    %v3768 = vlaneseq
    %v3769 = vshrl.u32 %v3768, 7
    %v3770 = vsub.s32 %v3767, %v3769
    %v3771 = vrot.slane %v3764, %v3770
    %v3772 = vcombine.low %v3747, %v3755
    %v3773 = vcombine.high %v3747, %v3755
    %v3775 = vunpack.c.l.s4 1934713408
    %v3776 = vunpack.c.0.s8 %v3775
    %v3777 = vlaneseq
    %v3778 = vshrl.u32 %v3777, 7
    %v3779 = vsub.s32 %v3776, %v3778
    %v3780 = vrot.slane %v3772, %v3779
    %v3782 = vunpack.c.l.s4 1934713408
    %v3783 = vunpack.c.0.s8 %v3782
    %v3784 = vlaneseq
    %v3785 = vshrl.u32 %v3784, 7
    %v3786 = vsub.s32 %v3783, %v3785
    %v3787 = vrot.slane %v3773, %v3786
    %v3788 = vcombine.low %v3763, %v3771
    %v3789 = vcombine.high %v3763, %v3771
    %v3791 = vunpack.c.l.s4 1934713408
    %v3792 = vunpack.c.0.s8 %v3791
    %v3793 = vlaneseq
    %v3794 = vshrl.u32 %v3793, 7
    %v3795 = vsub.s32 %v3792, %v3794
    %v3796 = vrot.slane %v3788, %v3795
    %v3798 = vunpack.c.l.s4 1934713408
    %v3799 = vunpack.c.0.s8 %v3798
    %v3800 = vlaneseq
    %v3801 = vshrl.u32 %v3800, 7
    %v3802 = vsub.s32 %v3799, %v3801
    %v3803 = vrot.slane %v3789, %v3802
    %v3804 = vcombine.low %v3780, %v3796
    %v3805 = vcombine.high %v3780, %v3796
    %v3806 = vcombine.low %v3787, %v3803
    %v3807 = vcombine.high %v3787, %v3803
    %v3809 = vsel %vm1032, %v3148, 0
    %v3812 = vsel %vm1032, %v3440, 0
    %3814 = vmatprep.subr.mxu0 0.0
    %3815 = vmatpush1.xpose.msra.mxu0 %v3812
    %3816 = vmatprep.subr.mxu0 0.0
    %3817 = vmatpush1.xpose.msra.mxu0 0.0
    %3818 = vmatprep.subr.mxu0 0.0
    %3819 = vmatpush1.xpose.msra.mxu0 0.0
    %3820 = vmatprep.subr.mxu0 0.0
    %3821 = vmatpush1.xpose.msra.mxu0 0.0
    %3822 = vmatprep.subr.mxu0 0.0
    %3823 = vmatpush1.xpose.msra.mxu0 0.0
    %3824 = vmatprep.subr.mxu0 0.0
    %3825 = vmatpush1.xpose.msra.mxu0 0.0
    %3826 = vmatprep.subr.mxu0 0.0
    %3827 = vmatpush1.xpose.msra.mxu0 0.0
    %3828 = vmatprep.subr.mxu0 0.0
    %3829 = vmatpush1.xpose.msra.mxu0 0.0
    %3830 = vmatprep.subr.mxu0 0.0
    %3831 = vmatpush1.xpose.msra.mxu0 0.0
    %3832 = vmatprep.subr.mxu0 0.0
    %3833 = vmatpush1.xpose.msra.mxu0 0.0
    %3834 = vmatprep.subr.mxu0 0.0
    %3835 = vmatpush1.xpose.msra.mxu0 0.0
    %3836 = vmatprep.subr.mxu0 0.0
    %3837 = vmatpush1.xpose.msra.mxu0 0.0
    %3838 = vmatprep.subr.mxu0 0.0
    %3839 = vmatpush1.xpose.msra.mxu0 0.0
    %3840 = vmatprep.subr.mxu0 0.0
    %3841 = vmatpush1.xpose.msra.mxu0 0.0
    %3842 = vmatprep.subr.mxu0 0.0
    %3843 = vmatpush1.xpose.msra.mxu0 0.0
    %3844 = vmatprep.subr.mxu0 0.0
    %3845 = vmatpush1.xpose.msra.mxu0 0.0
    %3846 = vmatprep.subr.mxu0 0.0
    %3847 = vmatpush1.xpose.msra.mxu0 0.0
    %3848 = vmatprep.subr.mxu0 0.0
    %3849 = vmatpush1.xpose.msra.mxu0 0.0
    %3850 = vmatprep.subr.mxu0 0.0
    %3851 = vmatpush1.xpose.msra.mxu0 0.0
    %3852 = vmatprep.subr.mxu0 0.0
    %3853 = vmatpush1.xpose.msra.mxu0 0.0
    %3854 = vmatprep.subr.mxu0 0.0
    %3855 = vmatpush1.xpose.msra.mxu0 0.0
    %3856 = vmatprep.subr.mxu0 0.0
    %3857 = vmatpush1.xpose.msra.mxu0 0.0
    %3858 = vmatprep.subr.mxu0 0.0
    %3859 = vmatpush1.xpose.msra.mxu0 0.0
    %3860 = vmatprep.subr.mxu0 0.0
    %3861 = vmatpush1.xpose.msra.mxu0 0.0
    %3862 = vmatprep.subr.mxu0 0.0
    %3863 = vmatpush1.xpose.msra.mxu0 0.0
    %3864 = vmatprep.subr.mxu0 0.0
    %3865 = vmatpush1.xpose.msra.mxu0 0.0
    %3866 = vmatprep.subr.mxu0 0.0
    %3867 = vmatpush1.xpose.msra.mxu0 0.0
    %3868 = vmatprep.subr.mxu0 0.0
    %3869 = vmatpush1.xpose.msra.mxu0 0.0
    %3870 = vmatprep.subr.mxu0 0.0
    %3871 = vmatpush1.xpose.msra.mxu0 0.0
    %3872 = vmatprep.subr.mxu0 0.0
    %3873 = vmatpush1.xpose.msra.mxu0 0.0
    %3874 = vmatprep.subr.mxu0 0.0
    %3875 = vmatpush1.xpose.msra.mxu0 0.0
    %3876 = vmatprep.subr.mxu0 0.0
    %3877 = vmatpush1.xpose.msra.mxu0 0.0
    %3878 = vmatprep.mubr.f32.mxu0 0.0
    %3879 = vmatmul.mubr.f32.gmra.mrb[0].mxu0 %v3809
    %v3880 = vpop.f32.mrb[0].mxu0
    %v3881 = vadd.f32 0.0, %v3880
    %v3882 = vpop.f32.mrb[0].mxu0
    %3883 = vdwg.mxu0
    %v3885 = vsel %vm1032, %v3216, 0
    %v3888 = vsel %vm1032, %v3508, 0
    %3890 = vmatprep.subr.mxu0 0.0
    %3891 = vmatpush1.xpose.msra.mxu0 %v3888
    %3892 = vmatprep.subr.mxu0 0.0
    %3893 = vmatpush1.xpose.msra.mxu0 0.0
    %3894 = vmatprep.subr.mxu0 0.0
    %3895 = vmatpush1.xpose.msra.mxu0 0.0
    %3896 = vmatprep.subr.mxu0 0.0
    %3897 = vmatpush1.xpose.msra.mxu0 0.0
    %3898 = vmatprep.subr.mxu0 0.0
    %3899 = vmatpush1.xpose.msra.mxu0 0.0
    %3900 = vmatprep.subr.mxu0 0.0
    %3901 = vmatpush1.xpose.msra.mxu0 0.0
    %3902 = vmatprep.subr.mxu0 0.0
    %3903 = vmatpush1.xpose.msra.mxu0 0.0
    %3904 = vmatprep.subr.mxu0 0.0
    %3905 = vmatpush1.xpose.msra.mxu0 0.0
    %3906 = vmatprep.subr.mxu0 0.0
    %3907 = vmatpush1.xpose.msra.mxu0 0.0
    %3908 = vmatprep.subr.mxu0 0.0
    %3909 = vmatpush1.xpose.msra.mxu0 0.0
    %3910 = vmatprep.subr.mxu0 0.0
    %3911 = vmatpush1.xpose.msra.mxu0 0.0
    %3912 = vmatprep.subr.mxu0 0.0
    %3913 = vmatpush1.xpose.msra.mxu0 0.0
    %3914 = vmatprep.subr.mxu0 0.0
    %3915 = vmatpush1.xpose.msra.mxu0 0.0
    %3916 = vmatprep.subr.mxu0 0.0
    %3917 = vmatpush1.xpose.msra.mxu0 0.0
    %3918 = vmatprep.subr.mxu0 0.0
    %3919 = vmatpush1.xpose.msra.mxu0 0.0
    %3920 = vmatprep.subr.mxu0 0.0
    %3921 = vmatpush1.xpose.msra.mxu0 0.0
    %3922 = vmatprep.subr.mxu0 0.0
    %3923 = vmatpush1.xpose.msra.mxu0 0.0
    %3924 = vmatprep.subr.mxu0 0.0
    %3925 = vmatpush1.xpose.msra.mxu0 0.0
    %3926 = vmatprep.subr.mxu0 0.0
    %3927 = vmatpush1.xpose.msra.mxu0 0.0
    %3928 = vmatprep.subr.mxu0 0.0
    %3929 = vmatpush1.xpose.msra.mxu0 0.0
    %3930 = vmatprep.subr.mxu0 0.0
    %3931 = vmatpush1.xpose.msra.mxu0 0.0
    %3932 = vmatprep.subr.mxu0 0.0
    %3933 = vmatpush1.xpose.msra.mxu0 0.0
    %3934 = vmatprep.subr.mxu0 0.0
    %3935 = vmatpush1.xpose.msra.mxu0 0.0
    %3936 = vmatprep.subr.mxu0 0.0
    %3937 = vmatpush1.xpose.msra.mxu0 0.0
    %3938 = vmatprep.subr.mxu0 0.0
    %3939 = vmatpush1.xpose.msra.mxu0 0.0
    %3940 = vmatprep.subr.mxu0 0.0
    %3941 = vmatpush1.xpose.msra.mxu0 0.0
    %3942 = vmatprep.subr.mxu0 0.0
    %3943 = vmatpush1.xpose.msra.mxu0 0.0
    %3944 = vmatprep.subr.mxu0 0.0
    %3945 = vmatpush1.xpose.msra.mxu0 0.0
    %3946 = vmatprep.subr.mxu0 0.0
    %3947 = vmatpush1.xpose.msra.mxu0 0.0
    %3948 = vmatprep.subr.mxu0 0.0
    %3949 = vmatpush1.xpose.msra.mxu0 0.0
    %3950 = vmatprep.subr.mxu0 0.0
    %3951 = vmatpush1.xpose.msra.mxu0 0.0
    %3952 = vmatprep.subr.mxu0 0.0
    %3953 = vmatpush1.xpose.msra.mxu0 0.0
    %3954 = vmatprep.mubr.f32.mxu0 0.0
    %3955 = vmatmul.mubr.f32.gmra.mrb[0].mxu0 %v3885
    %v3956 = vpop.f32.mrb[0].mxu0
    %v3957 = vadd.f32 0.0, %v3956
    %v3958 = vpop.f32.mrb[0].mxu0
    %3959 = vdwg.mxu0
    %v3961 = vsel %vm1032, %v3149, 0
    %v3964 = vsel %vm1032, %v3441, 0
    %3966 = vmatprep.subr.mxu0 0.0
    %3967 = vmatpush1.xpose.msra.mxu0 %v3964
    %3968 = vmatprep.subr.mxu0 0.0
    %3969 = vmatpush1.xpose.msra.mxu0 0.0
    %3970 = vmatprep.subr.mxu0 0.0
    %3971 = vmatpush1.xpose.msra.mxu0 0.0
    %3972 = vmatprep.subr.mxu0 0.0
    %3973 = vmatpush1.xpose.msra.mxu0 0.0
    %3974 = vmatprep.subr.mxu0 0.0
    %3975 = vmatpush1.xpose.msra.mxu0 0.0
    %3976 = vmatprep.subr.mxu0 0.0
    %3977 = vmatpush1.xpose.msra.mxu0 0.0
    %3978 = vmatprep.subr.mxu0 0.0
    %3979 = vmatpush1.xpose.msra.mxu0 0.0
    %3980 = vmatprep.subr.mxu0 0.0
    %3981 = vmatpush1.xpose.msra.mxu0 0.0
    %3982 = vmatprep.subr.mxu0 0.0
    %3983 = vmatpush1.xpose.msra.mxu0 0.0
    %3984 = vmatprep.subr.mxu0 0.0
    %3985 = vmatpush1.xpose.msra.mxu0 0.0
    %3986 = vmatprep.subr.mxu0 0.0
    %3987 = vmatpush1.xpose.msra.mxu0 0.0
    %3988 = vmatprep.subr.mxu0 0.0
    %3989 = vmatpush1.xpose.msra.mxu0 0.0
    %3990 = vmatprep.subr.mxu0 0.0
    %3991 = vmatpush1.xpose.msra.mxu0 0.0
    %3992 = vmatprep.subr.mxu0 0.0
    %3993 = vmatpush1.xpose.msra.mxu0 0.0
    %3994 = vmatprep.subr.mxu0 0.0
    %3995 = vmatpush1.xpose.msra.mxu0 0.0
    %3996 = vmatprep.subr.mxu0 0.0
    %3997 = vmatpush1.xpose.msra.mxu0 0.0
    %3998 = vmatprep.subr.mxu0 0.0
    %3999 = vmatpush1.xpose.msra.mxu0 0.0
    %4000 = vmatprep.subr.mxu0 0.0
    %4001 = vmatpush1.xpose.msra.mxu0 0.0
    %4002 = vmatprep.subr.mxu0 0.0
    %4003 = vmatpush1.xpose.msra.mxu0 0.0
    %4004 = vmatprep.subr.mxu0 0.0
    %4005 = vmatpush1.xpose.msra.mxu0 0.0
    %4006 = vmatprep.subr.mxu0 0.0
    %4007 = vmatpush1.xpose.msra.mxu0 0.0
    %4008 = vmatprep.subr.mxu0 0.0
    %4009 = vmatpush1.xpose.msra.mxu0 0.0
    %4010 = vmatprep.subr.mxu0 0.0
    %4011 = vmatpush1.xpose.msra.mxu0 0.0
    %4012 = vmatprep.subr.mxu0 0.0
    %4013 = vmatpush1.xpose.msra.mxu0 0.0
    %4014 = vmatprep.subr.mxu0 0.0
    %4015 = vmatpush1.xpose.msra.mxu0 0.0
    %4016 = vmatprep.subr.mxu0 0.0
    %4017 = vmatpush1.xpose.msra.mxu0 0.0
    %4018 = vmatprep.subr.mxu0 0.0
    %4019 = vmatpush1.xpose.msra.mxu0 0.0
    %4020 = vmatprep.subr.mxu0 0.0
    %4021 = vmatpush1.xpose.msra.mxu0 0.0
    %4022 = vmatprep.subr.mxu0 0.0
    %4023 = vmatpush1.xpose.msra.mxu0 0.0
    %4024 = vmatprep.subr.mxu0 0.0
    %4025 = vmatpush1.xpose.msra.mxu0 0.0
    %4026 = vmatprep.subr.mxu0 0.0
    %4027 = vmatpush1.xpose.msra.mxu0 0.0
    %4028 = vmatprep.subr.mxu0 0.0
    %4029 = vmatpush1.xpose.msra.mxu0 0.0
    %4030 = vmatprep.mubr.f32.mxu0 0.0
    %4031 = vmatmul.mubr.f32.gmra.mrb[0].mxu0 %v3961
    %v4032 = vpop.f32.mrb[0].mxu0
    %v4033 = vadd.f32 0.0, %v4032
    %v4034 = vpop.f32.mrb[0].mxu0
    %4035 = vdwg.mxu0
    %v4037 = vsel %vm1032, %v3217, 0
    %v4040 = vsel %vm1032, %v3509, 0
    %4042 = vmatprep.subr.mxu0 0.0
    %4043 = vmatpush1.xpose.msra.mxu0 %v4040
    %4044 = vmatprep.subr.mxu0 0.0
    %4045 = vmatpush1.xpose.msra.mxu0 0.0
    %4046 = vmatprep.subr.mxu0 0.0
    %4047 = vmatpush1.xpose.msra.mxu0 0.0
    %4048 = vmatprep.subr.mxu0 0.0
    %4049 = vmatpush1.xpose.msra.mxu0 0.0
    %4050 = vmatprep.subr.mxu0 0.0
    %4051 = vmatpush1.xpose.msra.mxu0 0.0
    %4052 = vmatprep.subr.mxu0 0.0
    %4053 = vmatpush1.xpose.msra.mxu0 0.0
    %4054 = vmatprep.subr.mxu0 0.0
    %4055 = vmatpush1.xpose.msra.mxu0 0.0
    %4056 = vmatprep.subr.mxu0 0.0
    %4057 = vmatpush1.xpose.msra.mxu0 0.0
    %4058 = vmatprep.subr.mxu0 0.0
    %4059 = vmatpush1.xpose.msra.mxu0 0.0
    %4060 = vmatprep.subr.mxu0 0.0
    %4061 = vmatpush1.xpose.msra.mxu0 0.0
    %4062 = vmatprep.subr.mxu0 0.0
    %4063 = vmatpush1.xpose.msra.mxu0 0.0
    %4064 = vmatprep.subr.mxu0 0.0
    %4065 = vmatpush1.xpose.msra.mxu0 0.0
    %4066 = vmatprep.subr.mxu0 0.0
    %4067 = vmatpush1.xpose.msra.mxu0 0.0
    %4068 = vmatprep.subr.mxu0 0.0
    %4069 = vmatpush1.xpose.msra.mxu0 0.0
    %4070 = vmatprep.subr.mxu0 0.0
    %4071 = vmatpush1.xpose.msra.mxu0 0.0
    %4072 = vmatprep.subr.mxu0 0.0
    %4073 = vmatpush1.xpose.msra.mxu0 0.0
    %4074 = vmatprep.subr.mxu0 0.0
    %4075 = vmatpush1.xpose.msra.mxu0 0.0
    %4076 = vmatprep.subr.mxu0 0.0
    %4077 = vmatpush1.xpose.msra.mxu0 0.0
    %4078 = vmatprep.subr.mxu0 0.0
    %4079 = vmatpush1.xpose.msra.mxu0 0.0
    %4080 = vmatprep.subr.mxu0 0.0
    %4081 = vmatpush1.xpose.msra.mxu0 0.0
    %4082 = vmatprep.subr.mxu0 0.0
    %4083 = vmatpush1.xpose.msra.mxu0 0.0
    %4084 = vmatprep.subr.mxu0 0.0
    %4085 = vmatpush1.xpose.msra.mxu0 0.0
    %4086 = vmatprep.subr.mxu0 0.0
    %4087 = vmatpush1.xpose.msra.mxu0 0.0
    %4088 = vmatprep.subr.mxu0 0.0
    %4089 = vmatpush1.xpose.msra.mxu0 0.0
    %4090 = vmatprep.subr.mxu0 0.0
    %4091 = vmatpush1.xpose.msra.mxu0 0.0
    %4092 = vmatprep.subr.mxu0 0.0
    %4093 = vmatpush1.xpose.msra.mxu0 0.0
    %4094 = vmatprep.subr.mxu0 0.0
    %4095 = vmatpush1.xpose.msra.mxu0 0.0
    %4096 = vmatprep.subr.mxu0 0.0
    %4097 = vmatpush1.xpose.msra.mxu0 0.0
    %4098 = vmatprep.subr.mxu0 0.0
    %4099 = vmatpush1.xpose.msra.mxu0 0.0
    %4100 = vmatprep.subr.mxu0 0.0
    %4101 = vmatpush1.xpose.msra.mxu0 0.0
    %4102 = vmatprep.subr.mxu0 0.0
    %4103 = vmatpush1.xpose.msra.mxu0 0.0
    %4104 = vmatprep.subr.mxu0 0.0
    %4105 = vmatpush1.xpose.msra.mxu0 0.0
    %4106 = vmatprep.mubr.f32.mxu0 0.0
    %4107 = vmatmul.mubr.f32.gmra.mrb[0].mxu0 %v4037
    %v4108 = vpop.f32.mrb[0].mxu0
    %v4109 = vadd.f32 0.0, %v4108
    %v4110 = vpop.f32.mrb[0].mxu0
    %4111 = vdwg.mxu0
    %v4113 = vsel %vm1032, %v3150, 0
    %v4116 = vsel %vm1032, %v3442, 0
    %4118 = vmatprep.subr.mxu0 0.0
    %4119 = vmatpush1.xpose.msra.mxu0 %v4116
    %4120 = vmatprep.subr.mxu0 0.0
    %4121 = vmatpush1.xpose.msra.mxu0 0.0
    %4122 = vmatprep.subr.mxu0 0.0
    %4123 = vmatpush1.xpose.msra.mxu0 0.0
    %4124 = vmatprep.subr.mxu0 0.0
    %4125 = vmatpush1.xpose.msra.mxu0 0.0
    %4126 = vmatprep.subr.mxu0 0.0
    %4127 = vmatpush1.xpose.msra.mxu0 0.0
    %4128 = vmatprep.subr.mxu0 0.0
    %4129 = vmatpush1.xpose.msra.mxu0 0.0
    %4130 = vmatprep.subr.mxu0 0.0
    %4131 = vmatpush1.xpose.msra.mxu0 0.0
    %4132 = vmatprep.subr.mxu0 0.0
    %4133 = vmatpush1.xpose.msra.mxu0 0.0
    %4134 = vmatprep.subr.mxu0 0.0
    %4135 = vmatpush1.xpose.msra.mxu0 0.0
    %4136 = vmatprep.subr.mxu0 0.0
    %4137 = vmatpush1.xpose.msra.mxu0 0.0
    %4138 = vmatprep.subr.mxu0 0.0
    %4139 = vmatpush1.xpose.msra.mxu0 0.0
    %4140 = vmatprep.subr.mxu0 0.0
    %4141 = vmatpush1.xpose.msra.mxu0 0.0
    %4142 = vmatprep.subr.mxu0 0.0
    %4143 = vmatpush1.xpose.msra.mxu0 0.0
    %4144 = vmatprep.subr.mxu0 0.0
    %4145 = vmatpush1.xpose.msra.mxu0 0.0
    %4146 = vmatprep.subr.mxu0 0.0
    %4147 = vmatpush1.xpose.msra.mxu0 0.0
    %4148 = vmatprep.subr.mxu0 0.0
    %4149 = vmatpush1.xpose.msra.mxu0 0.0
    %4150 = vmatprep.subr.mxu0 0.0
    %4151 = vmatpush1.xpose.msra.mxu0 0.0
    %4152 = vmatprep.subr.mxu0 0.0
    %4153 = vmatpush1.xpose.msra.mxu0 0.0
    %4154 = vmatprep.subr.mxu0 0.0
    %4155 = vmatpush1.xpose.msra.mxu0 0.0
    %4156 = vmatprep.subr.mxu0 0.0
    %4157 = vmatpush1.xpose.msra.mxu0 0.0
    %4158 = vmatprep.subr.mxu0 0.0
    %4159 = vmatpush1.xpose.msra.mxu0 0.0
    %4160 = vmatprep.subr.mxu0 0.0
    %4161 = vmatpush1.xpose.msra.mxu0 0.0
    %4162 = vmatprep.subr.mxu0 0.0
    %4163 = vmatpush1.xpose.msra.mxu0 0.0
    %4164 = vmatprep.subr.mxu0 0.0
    %4165 = vmatpush1.xpose.msra.mxu0 0.0
    %4166 = vmatprep.subr.mxu0 0.0
    %4167 = vmatpush1.xpose.msra.mxu0 0.0
    %4168 = vmatprep.subr.mxu0 0.0
    %4169 = vmatpush1.xpose.msra.mxu0 0.0
    %4170 = vmatprep.subr.mxu0 0.0
    %4171 = vmatpush1.xpose.msra.mxu0 0.0
    %4172 = vmatprep.subr.mxu0 0.0
    %4173 = vmatpush1.xpose.msra.mxu0 0.0
    %4174 = vmatprep.subr.mxu0 0.0
    %4175 = vmatpush1.xpose.msra.mxu0 0.0
    %4176 = vmatprep.subr.mxu0 0.0
    %4177 = vmatpush1.xpose.msra.mxu0 0.0
    %4178 = vmatprep.subr.mxu0 0.0
    %4179 = vmatpush1.xpose.msra.mxu0 0.0
    %4180 = vmatprep.subr.mxu0 0.0
    %4181 = vmatpush1.xpose.msra.mxu0 0.0
    %4182 = vmatprep.mubr.f32.mxu0 0.0
    %4183 = vmatmul.mubr.f32.gmra.mrb[0].mxu0 %v4113
    %v4184 = vpop.f32.mrb[0].mxu0
    %v4185 = vadd.f32 0.0, %v4184
    %v4186 = vpop.f32.mrb[0].mxu0
    %4187 = vdwg.mxu0
    %v4189 = vsel %vm1032, %v3218, 0
    %v4192 = vsel %vm1032, %v3510, 0
    %4194 = vmatprep.subr.mxu0 0.0
    %4195 = vmatpush1.xpose.msra.mxu0 %v4192
    %4196 = vmatprep.subr.mxu0 0.0
    %4197 = vmatpush1.xpose.msra.mxu0 0.0
    %4198 = vmatprep.subr.mxu0 0.0
    %4199 = vmatpush1.xpose.msra.mxu0 0.0
    %4200 = vmatprep.subr.mxu0 0.0
    %4201 = vmatpush1.xpose.msra.mxu0 0.0
    %4202 = vmatprep.subr.mxu0 0.0
    %4203 = vmatpush1.xpose.msra.mxu0 0.0
    %4204 = vmatprep.subr.mxu0 0.0
    %4205 = vmatpush1.xpose.msra.mxu0 0.0
    %4206 = vmatprep.subr.mxu0 0.0
    %4207 = vmatpush1.xpose.msra.mxu0 0.0
    %4208 = vmatprep.subr.mxu0 0.0
    %4209 = vmatpush1.xpose.msra.mxu0 0.0
    %4210 = vmatprep.subr.mxu0 0.0
    %4211 = vmatpush1.xpose.msra.mxu0 0.0
    %4212 = vmatprep.subr.mxu0 0.0
    %4213 = vmatpush1.xpose.msra.mxu0 0.0
    %4214 = vmatprep.subr.mxu0 0.0
    %4215 = vmatpush1.xpose.msra.mxu0 0.0
    %4216 = vmatprep.subr.mxu0 0.0
    %4217 = vmatpush1.xpose.msra.mxu0 0.0
    %4218 = vmatprep.subr.mxu0 0.0
    %4219 = vmatpush1.xpose.msra.mxu0 0.0
    %4220 = vmatprep.subr.mxu0 0.0
    %4221 = vmatpush1.xpose.msra.mxu0 0.0
    %4222 = vmatprep.subr.mxu0 0.0
    %4223 = vmatpush1.xpose.msra.mxu0 0.0
    %4224 = vmatprep.subr.mxu0 0.0
    %4225 = vmatpush1.xpose.msra.mxu0 0.0
    %4226 = vmatprep.subr.mxu0 0.0
    %4227 = vmatpush1.xpose.msra.mxu0 0.0
    %4228 = vmatprep.subr.mxu0 0.0
    %4229 = vmatpush1.xpose.msra.mxu0 0.0
    %4230 = vmatprep.subr.mxu0 0.0
    %4231 = vmatpush1.xpose.msra.mxu0 0.0
    %4232 = vmatprep.subr.mxu0 0.0
    %4233 = vmatpush1.xpose.msra.mxu0 0.0
    %4234 = vmatprep.subr.mxu0 0.0
    %4235 = vmatpush1.xpose.msra.mxu0 0.0
    %4236 = vmatprep.subr.mxu0 0.0
    %4237 = vmatpush1.xpose.msra.mxu0 0.0
    %4238 = vmatprep.subr.mxu0 0.0
    %4239 = vmatpush1.xpose.msra.mxu0 0.0
    %4240 = vmatprep.subr.mxu0 0.0
    %4241 = vmatpush1.xpose.msra.mxu0 0.0
    %4242 = vmatprep.subr.mxu0 0.0
    %4243 = vmatpush1.xpose.msra.mxu0 0.0
    %4244 = vmatprep.subr.mxu0 0.0
    %4245 = vmatpush1.xpose.msra.mxu0 0.0
    %4246 = vmatprep.subr.mxu0 0.0
    %4247 = vmatpush1.xpose.msra.mxu0 0.0
    %4248 = vmatprep.subr.mxu0 0.0
    %4249 = vmatpush1.xpose.msra.mxu0 0.0
    %4250 = vmatprep.subr.mxu0 0.0
    %4251 = vmatpush1.xpose.msra.mxu0 0.0
    %4252 = vmatprep.subr.mxu0 0.0
    %4253 = vmatpush1.xpose.msra.mxu0 0.0
    %4254 = vmatprep.subr.mxu0 0.0
    %4255 = vmatpush1.xpose.msra.mxu0 0.0
    %4256 = vmatprep.subr.mxu0 0.0
    %4257 = vmatpush1.xpose.msra.mxu0 0.0
    %4258 = vmatprep.mubr.f32.mxu0 0.0
    %4259 = vmatmul.mubr.f32.gmra.mrb[0].mxu0 %v4189
    %v4260 = vpop.f32.mrb[0].mxu0
    %v4261 = vadd.f32 0.0, %v4260
    %v4262 = vpop.f32.mrb[0].mxu0
    %4263 = vdwg.mxu0
    %v4265 = vsel %vm1032, %v3151, 0
    %v4268 = vsel %vm1032, %v3443, 0
    %4270 = vmatprep.subr.mxu0 0.0
    %4271 = vmatpush1.xpose.msra.mxu0 %v4268
    %4272 = vmatprep.subr.mxu0 0.0
    %4273 = vmatpush1.xpose.msra.mxu0 0.0
    %4274 = vmatprep.subr.mxu0 0.0
    %4275 = vmatpush1.xpose.msra.mxu0 0.0
    %4276 = vmatprep.subr.mxu0 0.0
    %4277 = vmatpush1.xpose.msra.mxu0 0.0
    %4278 = vmatprep.subr.mxu0 0.0
    %4279 = vmatpush1.xpose.msra.mxu0 0.0
    %4280 = vmatprep.subr.mxu0 0.0
    %4281 = vmatpush1.xpose.msra.mxu0 0.0
    %4282 = vmatprep.subr.mxu0 0.0
    %4283 = vmatpush1.xpose.msra.mxu0 0.0
    %4284 = vmatprep.subr.mxu0 0.0
    %4285 = vmatpush1.xpose.msra.mxu0 0.0
    %4286 = vmatprep.subr.mxu0 0.0
    %4287 = vmatpush1.xpose.msra.mxu0 0.0
    %4288 = vmatprep.subr.mxu0 0.0
    %4289 = vmatpush1.xpose.msra.mxu0 0.0
    %4290 = vmatprep.subr.mxu0 0.0
    %4291 = vmatpush1.xpose.msra.mxu0 0.0
    %4292 = vmatprep.subr.mxu0 0.0
    %4293 = vmatpush1.xpose.msra.mxu0 0.0
    %4294 = vmatprep.subr.mxu0 0.0
    %4295 = vmatpush1.xpose.msra.mxu0 0.0
    %4296 = vmatprep.subr.mxu0 0.0
    %4297 = vmatpush1.xpose.msra.mxu0 0.0
    %4298 = vmatprep.subr.mxu0 0.0
    %4299 = vmatpush1.xpose.msra.mxu0 0.0
    %4300 = vmatprep.subr.mxu0 0.0
    %4301 = vmatpush1.xpose.msra.mxu0 0.0
    %4302 = vmatprep.subr.mxu0 0.0
    %4303 = vmatpush1.xpose.msra.mxu0 0.0
    %4304 = vmatprep.subr.mxu0 0.0
    %4305 = vmatpush1.xpose.msra.mxu0 0.0
    %4306 = vmatprep.subr.mxu0 0.0
    %4307 = vmatpush1.xpose.msra.mxu0 0.0
    %4308 = vmatprep.subr.mxu0 0.0
    %4309 = vmatpush1.xpose.msra.mxu0 0.0
    %4310 = vmatprep.subr.mxu0 0.0
    %4311 = vmatpush1.xpose.msra.mxu0 0.0
    %4312 = vmatprep.subr.mxu0 0.0
    %4313 = vmatpush1.xpose.msra.mxu0 0.0
    %4314 = vmatprep.subr.mxu0 0.0
    %4315 = vmatpush1.xpose.msra.mxu0 0.0
    %4316 = vmatprep.subr.mxu0 0.0
    %4317 = vmatpush1.xpose.msra.mxu0 0.0
    %4318 = vmatprep.subr.mxu0 0.0
    %4319 = vmatpush1.xpose.msra.mxu0 0.0
    %4320 = vmatprep.subr.mxu0 0.0
    %4321 = vmatpush1.xpose.msra.mxu0 0.0
    %4322 = vmatprep.subr.mxu0 0.0
    %4323 = vmatpush1.xpose.msra.mxu0 0.0
    %4324 = vmatprep.subr.mxu0 0.0
    %4325 = vmatpush1.xpose.msra.mxu0 0.0
    %4326 = vmatprep.subr.mxu0 0.0
    %4327 = vmatpush1.xpose.msra.mxu0 0.0
    %4328 = vmatprep.subr.mxu0 0.0
    %4329 = vmatpush1.xpose.msra.mxu0 0.0
    %4330 = vmatprep.subr.mxu0 0.0
    %4331 = vmatpush1.xpose.msra.mxu0 0.0
    %4332 = vmatprep.subr.mxu0 0.0
    %4333 = vmatpush1.xpose.msra.mxu0 0.0
    %4334 = vmatprep.mubr.f32.mxu0 0.0
    %4335 = vmatmul.mubr.f32.gmra.mrb[0].mxu0 %v4265
    %v4336 = vpop.f32.mrb[0].mxu0
    %v4337 = vadd.f32 0.0, %v4336
    %v4338 = vpop.f32.mrb[0].mxu0
    %4339 = vdwg.mxu0
    %v4341 = vsel %vm1032, %v3219, 0
    %v4344 = vsel %vm1032, %v3511, 0
    %4346 = vmatprep.subr.mxu0 0.0
    %4347 = vmatpush1.xpose.msra.mxu0 %v4344
    %4348 = vmatprep.subr.mxu0 0.0
    %4349 = vmatpush1.xpose.msra.mxu0 0.0
    %4350 = vmatprep.subr.mxu0 0.0
    %4351 = vmatpush1.xpose.msra.mxu0 0.0
    %4352 = vmatprep.subr.mxu0 0.0
    %4353 = vmatpush1.xpose.msra.mxu0 0.0
    %4354 = vmatprep.subr.mxu0 0.0
    %4355 = vmatpush1.xpose.msra.mxu0 0.0
    %4356 = vmatprep.subr.mxu0 0.0
    %4357 = vmatpush1.xpose.msra.mxu0 0.0
    %4358 = vmatprep.subr.mxu0 0.0
    %4359 = vmatpush1.xpose.msra.mxu0 0.0
    %4360 = vmatprep.subr.mxu0 0.0
    %4361 = vmatpush1.xpose.msra.mxu0 0.0
    %4362 = vmatprep.subr.mxu0 0.0
    %4363 = vmatpush1.xpose.msra.mxu0 0.0
    %4364 = vmatprep.subr.mxu0 0.0
    %4365 = vmatpush1.xpose.msra.mxu0 0.0
    %4366 = vmatprep.subr.mxu0 0.0
    %4367 = vmatpush1.xpose.msra.mxu0 0.0
    %4368 = vmatprep.subr.mxu0 0.0
    %4369 = vmatpush1.xpose.msra.mxu0 0.0
    %4370 = vmatprep.subr.mxu0 0.0
    %4371 = vmatpush1.xpose.msra.mxu0 0.0
    %4372 = vmatprep.subr.mxu0 0.0
    %4373 = vmatpush1.xpose.msra.mxu0 0.0
    %4374 = vmatprep.subr.mxu0 0.0
    %4375 = vmatpush1.xpose.msra.mxu0 0.0
    %4376 = vmatprep.subr.mxu0 0.0
    %4377 = vmatpush1.xpose.msra.mxu0 0.0
    %4378 = vmatprep.subr.mxu0 0.0
    %4379 = vmatpush1.xpose.msra.mxu0 0.0
    %4380 = vmatprep.subr.mxu0 0.0
    %4381 = vmatpush1.xpose.msra.mxu0 0.0
    %4382 = vmatprep.subr.mxu0 0.0
    %4383 = vmatpush1.xpose.msra.mxu0 0.0
    %4384 = vmatprep.subr.mxu0 0.0
    %4385 = vmatpush1.xpose.msra.mxu0 0.0
    %4386 = vmatprep.subr.mxu0 0.0
    %4387 = vmatpush1.xpose.msra.mxu0 0.0
    %4388 = vmatprep.subr.mxu0 0.0
    %4389 = vmatpush1.xpose.msra.mxu0 0.0
    %4390 = vmatprep.subr.mxu0 0.0
    %4391 = vmatpush1.xpose.msra.mxu0 0.0
    %4392 = vmatprep.subr.mxu0 0.0
    %4393 = vmatpush1.xpose.msra.mxu0 0.0
    %4394 = vmatprep.subr.mxu0 0.0
    %4395 = vmatpush1.xpose.msra.mxu0 0.0
    %4396 = vmatprep.subr.mxu0 0.0
    %4397 = vmatpush1.xpose.msra.mxu0 0.0
    %4398 = vmatprep.subr.mxu0 0.0
    %4399 = vmatpush1.xpose.msra.mxu0 0.0
    %4400 = vmatprep.subr.mxu0 0.0
    %4401 = vmatpush1.xpose.msra.mxu0 0.0
    %4402 = vmatprep.subr.mxu0 0.0
    %4403 = vmatpush1.xpose.msra.mxu0 0.0
    %4404 = vmatprep.subr.mxu0 0.0
    %4405 = vmatpush1.xpose.msra.mxu0 0.0
    %4406 = vmatprep.subr.mxu0 0.0
    %4407 = vmatpush1.xpose.msra.mxu0 0.0
    %4408 = vmatprep.subr.mxu0 0.0
    %4409 = vmatpush1.xpose.msra.mxu0 0.0
    %4410 = vmatprep.mubr.f32.mxu0 0.0
    %4411 = vmatmul.mubr.f32.gmra.mrb[0].mxu0 %v4341
    %v4412 = vpop.f32.mrb[0].mxu0
    %v4413 = vadd.f32 0.0, %v4412
    %v4414 = vpop.f32.mrb[0].mxu0
    %4415 = vdwg.mxu0
    %v4416 = vsel %vm1032, %v3881, -inf
    %4417 = vmax.xlane.f32.xlu0 %v4416
    %v4418 = vpop.xlane.xlu0 %4417
    %v4419 = vsel %vm1032, %v3957, -inf
    %4420 = vmax.xlane.f32.xlu0 %v4419
    %v4421 = vpop.xlane.xlu0 %4420
    %v4422 = vsel %vm1032, %v4033, -inf
    %4423 = vmax.xlane.f32.xlu0 %v4422
    %v4424 = vpop.xlane.xlu0 %4423
    %v4425 = vsel %vm1032, %v4109, -inf
    %4426 = vmax.xlane.f32.xlu0 %v4425
    %v4427 = vpop.xlane.xlu0 %4426
    %v4428 = vsel %vm1032, %v4185, -inf
    %4429 = vmax.xlane.f32.xlu0 %v4428
    %v4430 = vpop.xlane.xlu0 %4429
    %v4431 = vsel %vm1032, %v4261, -inf
    %4432 = vmax.xlane.f32.xlu0 %v4431
    %v4433 = vpop.xlane.xlu0 %4432
    %v4434 = vsel %vm1032, %v4337, -inf
    %4435 = vmax.xlane.f32.xlu0 %v4434
    %v4436 = vpop.xlane.xlu0 %4435
    %v4437 = vsel %vm1032, %v4413, -inf
    %4438 = vmax.xlane.f32.xlu0 %v4437
    %v4439 = vpop.xlane.xlu0 %4438
    %v4440 = vsub.f32 %v3881, %v4418
    %v4441 = vsub.f32 %v3957, %v4421
    %v4442 = vsub.f32 %v4033, %v4424
    %v4443 = vsub.f32 %v4109, %v4427
    %v4444 = vsub.f32 %v4185, %v4430
    %v4445 = vsub.f32 %v4261, %v4433
    %v4446 = vsub.f32 %v4337, %v4436
    %v4447 = vsub.f32 %v4413, %v4439
    %v4448 = vmul.f32 %v4440, 1.442695
    %v4449 = vpow.pop %v4448
    %v4450 = vmul.f32 %v4441, 1.442695
    %v4451 = vpow.pop %v4450
    %v4452 = vmul.f32 %v4442, 1.442695
    %v4453 = vpow.pop %v4452
    %v4454 = vmul.f32 %v4443, 1.442695
    %v4455 = vpow.pop %v4454
    %v4456 = vmul.f32 %v4444, 1.442695
    %v4457 = vpow.pop %v4456
    %v4458 = vmul.f32 %v4445, 1.442695
    %v4459 = vpow.pop %v4458
    %v4460 = vmul.f32 %v4446, 1.442695
    %v4461 = vpow.pop %v4460
    %v4462 = vmul.f32 %v4447, 1.442695
    %v4463 = vpow.pop %v4462
    %v4464 = vsel %vm1032, %v4449, 0.0
    %4465 = vadd.xlane.f32.xlu0 %v4464
    %v4466 = vpop.xlane.xlu0 %4465
    %v4467 = vsel %vm1032, %v4451, 0.0
    %4468 = vadd.xlane.f32.xlu0 %v4467
    %v4469 = vpop.xlane.xlu0 %4468
    %v4470 = vsel %vm1032, %v4453, 0.0
    %4471 = vadd.xlane.f32.xlu0 %v4470
    %v4472 = vpop.xlane.xlu0 %4471
    %v4473 = vsel %vm1032, %v4455, 0.0
    %4474 = vadd.xlane.f32.xlu0 %v4473
    %v4475 = vpop.xlane.xlu0 %4474
    %v4476 = vsel %vm1032, %v4457, 0.0
    %4477 = vadd.xlane.f32.xlu0 %v4476
    %v4478 = vpop.xlane.xlu0 %4477
    %v4479 = vsel %vm1032, %v4459, 0.0
    %4480 = vadd.xlane.f32.xlu0 %v4479
    %v4481 = vpop.xlane.xlu0 %4480
    %v4482 = vsel %vm1032, %v4461, 0.0
    %4483 = vadd.xlane.f32.xlu0 %v4482
    %v4484 = vpop.xlane.xlu0 %4483
    %v4485 = vsel %vm1032, %v4463, 0.0
    %4486 = vadd.xlane.f32.xlu0 %v4485
    %v4487 = vpop.xlane.xlu0 %4486
    %v4488 = vrcp.pop %v4466
    %v4489 = vrcp.pop %v4469
    %v4490 = vrcp.pop %v4472
    %v4491 = vrcp.pop %v4475
    %v4492 = vrcp.pop %v4478
    %v4493 = vrcp.pop %v4481
    %v4494 = vrcp.pop %v4484
    %v4495 = vrcp.pop %v4487
    %v4496 = vmul.f32 %v4449, %v4488
    %v4497 = vmul.f32 %v4451, %v4489
    %v4498 = vmul.f32 %v4453, %v4490
    %v4499 = vmul.f32 %v4455, %v4491
    %v4500 = vmul.f32 %v4457, %v4492
    %v4501 = vmul.f32 %v4459, %v4493
    %v4502 = vmul.f32 %v4461, %v4494
    %v4503 = vmul.f32 %v4463, %v4495
    %v4505 = vsel %vm1032, %v4496, 0
    %4507 = vmatprep.subr.mxu0 0.0
    %4508 = vmatpush1.msra.mxu0 %v3736
    %4509 = vmatprep.subr.mxu0 0.0
    %4510 = vmatpush1.msra.mxu0 0.0
    %4511 = vmatprep.subr.mxu0 0.0
    %4512 = vmatpush1.msra.mxu0 0.0
    %4513 = vmatprep.subr.mxu0 0.0
    %4514 = vmatpush1.msra.mxu0 0.0
    %4515 = vmatprep.subr.mxu0 0.0
    %4516 = vmatpush1.msra.mxu0 0.0
    %4517 = vmatprep.subr.mxu0 0.0
    %4518 = vmatpush1.msra.mxu0 0.0
    %4519 = vmatprep.subr.mxu0 0.0
    %4520 = vmatpush1.msra.mxu0 0.0
    %4521 = vmatprep.subr.mxu0 0.0
    %4522 = vmatpush1.msra.mxu0 0.0
    %4523 = vmatprep.subr.mxu0 0.0
    %4524 = vmatpush1.msra.mxu0 0.0
    %4525 = vmatprep.subr.mxu0 0.0
    %4526 = vmatpush1.msra.mxu0 0.0
    %4527 = vmatprep.subr.mxu0 0.0
    %4528 = vmatpush1.msra.mxu0 0.0
    %4529 = vmatprep.subr.mxu0 0.0
    %4530 = vmatpush1.msra.mxu0 0.0
    %4531 = vmatprep.subr.mxu0 0.0
    %4532 = vmatpush1.msra.mxu0 0.0
    %4533 = vmatprep.subr.mxu0 0.0
    %4534 = vmatpush1.msra.mxu0 0.0
    %4535 = vmatprep.subr.mxu0 0.0
    %4536 = vmatpush1.msra.mxu0 0.0
    %4537 = vmatprep.subr.mxu0 0.0
    %4538 = vmatpush1.msra.mxu0 0.0
    %4539 = vmatprep.subr.mxu0 0.0
    %4540 = vmatpush1.msra.mxu0 0.0
    %4541 = vmatprep.subr.mxu0 0.0
    %4542 = vmatpush1.msra.mxu0 0.0
    %4543 = vmatprep.subr.mxu0 0.0
    %4544 = vmatpush1.msra.mxu0 0.0
    %4545 = vmatprep.subr.mxu0 0.0
    %4546 = vmatpush1.msra.mxu0 0.0
    %4547 = vmatprep.subr.mxu0 0.0
    %4548 = vmatpush1.msra.mxu0 0.0
    %4549 = vmatprep.subr.mxu0 0.0
    %4550 = vmatpush1.msra.mxu0 0.0
    %4551 = vmatprep.subr.mxu0 0.0
    %4552 = vmatpush1.msra.mxu0 0.0
    %4553 = vmatprep.subr.mxu0 0.0
    %4554 = vmatpush1.msra.mxu0 0.0
    %4555 = vmatprep.subr.mxu0 0.0
    %4556 = vmatpush1.msra.mxu0 0.0
    %4557 = vmatprep.subr.mxu0 0.0
    %4558 = vmatpush1.msra.mxu0 0.0
    %4559 = vmatprep.subr.mxu0 0.0
    %4560 = vmatpush1.msra.mxu0 0.0
    %4561 = vmatprep.subr.mxu0 0.0
    %4562 = vmatpush1.msra.mxu0 0.0
    %4563 = vmatprep.subr.mxu0 0.0
    %4564 = vmatpush1.msra.mxu0 0.0
    %4565 = vmatprep.subr.mxu0 0.0
    %4566 = vmatpush1.msra.mxu0 0.0
    %4567 = vmatprep.subr.mxu0 0.0
    %4568 = vmatpush1.msra.mxu0 0.0
    %4569 = vmatprep.subr.mxu0 0.0
    %4570 = vmatpush1.msra.mxu0 0.0
    %4571 = vmatprep.mubr.f32.mxu0 0.0
    %4572 = vmatmul.mubr.f32.gmra.mrb[0].mxu0 %v4505
    %v4573 = vpop.f32.mrb[0].mxu0
    %v4574 = vadd.f32 0.0, %v4573
    %v4575 = vpop.f32.mrb[0].mxu0
    %4576 = vdwg.mxu0
    %v4578 = vsel %vm1032, %v4497, 0
    %4580 = vmatprep.subr.mxu0 0.0
    %4581 = vmatpush1.msra.mxu0 %v3804
    %4582 = vmatprep.subr.mxu0 0.0
    %4583 = vmatpush1.msra.mxu0 0.0
    %4584 = vmatprep.subr.mxu0 0.0
    %4585 = vmatpush1.msra.mxu0 0.0
    %4586 = vmatprep.subr.mxu0 0.0
    %4587 = vmatpush1.msra.mxu0 0.0
    %4588 = vmatprep.subr.mxu0 0.0
    %4589 = vmatpush1.msra.mxu0 0.0
    %4590 = vmatprep.subr.mxu0 0.0
    %4591 = vmatpush1.msra.mxu0 0.0
    %4592 = vmatprep.subr.mxu0 0.0
    %4593 = vmatpush1.msra.mxu0 0.0
    %4594 = vmatprep.subr.mxu0 0.0
    %4595 = vmatpush1.msra.mxu0 0.0
    %4596 = vmatprep.subr.mxu0 0.0
    %4597 = vmatpush1.msra.mxu0 0.0
    %4598 = vmatprep.subr.mxu0 0.0
    %4599 = vmatpush1.msra.mxu0 0.0
    %4600 = vmatprep.subr.mxu0 0.0
    %4601 = vmatpush1.msra.mxu0 0.0
    %4602 = vmatprep.subr.mxu0 0.0
    %4603 = vmatpush1.msra.mxu0 0.0
    %4604 = vmatprep.subr.mxu0 0.0
    %4605 = vmatpush1.msra.mxu0 0.0
    %4606 = vmatprep.subr.mxu0 0.0
    %4607 = vmatpush1.msra.mxu0 0.0
    %4608 = vmatprep.subr.mxu0 0.0
    %4609 = vmatpush1.msra.mxu0 0.0
    %4610 = vmatprep.subr.mxu0 0.0
    %4611 = vmatpush1.msra.mxu0 0.0
    %4612 = vmatprep.subr.mxu0 0.0
    %4613 = vmatpush1.msra.mxu0 0.0
    %4614 = vmatprep.subr.mxu0 0.0
    %4615 = vmatpush1.msra.mxu0 0.0
    %4616 = vmatprep.subr.mxu0 0.0
    %4617 = vmatpush1.msra.mxu0 0.0
    %4618 = vmatprep.subr.mxu0 0.0
    %4619 = vmatpush1.msra.mxu0 0.0
    %4620 = vmatprep.subr.mxu0 0.0
    %4621 = vmatpush1.msra.mxu0 0.0
    %4622 = vmatprep.subr.mxu0 0.0
    %4623 = vmatpush1.msra.mxu0 0.0
    %4624 = vmatprep.subr.mxu0 0.0
    %4625 = vmatpush1.msra.mxu0 0.0
    %4626 = vmatprep.subr.mxu0 0.0
    %4627 = vmatpush1.msra.mxu0 0.0
    %4628 = vmatprep.subr.mxu0 0.0
    %4629 = vmatpush1.msra.mxu0 0.0
    %4630 = vmatprep.subr.mxu0 0.0
    %4631 = vmatpush1.msra.mxu0 0.0
    %4632 = vmatprep.subr.mxu0 0.0
    %4633 = vmatpush1.msra.mxu0 0.0
    %4634 = vmatprep.subr.mxu0 0.0
    %4635 = vmatpush1.msra.mxu0 0.0
    %4636 = vmatprep.subr.mxu0 0.0
    %4637 = vmatpush1.msra.mxu0 0.0
    %4638 = vmatprep.subr.mxu0 0.0
    %4639 = vmatpush1.msra.mxu0 0.0
    %4640 = vmatprep.subr.mxu0 0.0
    %4641 = vmatpush1.msra.mxu0 0.0
    %4642 = vmatprep.subr.mxu0 0.0
    %4643 = vmatpush1.msra.mxu0 0.0
    %4644 = vmatprep.mubr.f32.mxu0 0.0
    %4645 = vmatmul.mubr.f32.gmra.mrb[0].mxu0 %v4578
    %v4646 = vpop.f32.mrb[0].mxu0
    %v4647 = vadd.f32 0.0, %v4646
    %v4648 = vpop.f32.mrb[0].mxu0
    %4649 = vdwg.mxu0
    %v4651 = vsel %vm1032, %v4498, 0
    %4653 = vmatprep.subr.mxu0 0.0
    %4654 = vmatpush1.msra.mxu0 %v3737
    %4655 = vmatprep.subr.mxu0 0.0
    %4656 = vmatpush1.msra.mxu0 0.0
    %4657 = vmatprep.subr.mxu0 0.0
    %4658 = vmatpush1.msra.mxu0 0.0
    %4659 = vmatprep.subr.mxu0 0.0
    %4660 = vmatpush1.msra.mxu0 0.0
    %4661 = vmatprep.subr.mxu0 0.0
    %4662 = vmatpush1.msra.mxu0 0.0
    %4663 = vmatprep.subr.mxu0 0.0
    %4664 = vmatpush1.msra.mxu0 0.0
    %4665 = vmatprep.subr.mxu0 0.0
    %4666 = vmatpush1.msra.mxu0 0.0
    %4667 = vmatprep.subr.mxu0 0.0
    %4668 = vmatpush1.msra.mxu0 0.0
    %4669 = vmatprep.subr.mxu0 0.0
    %4670 = vmatpush1.msra.mxu0 0.0
    %4671 = vmatprep.subr.mxu0 0.0
    %4672 = vmatpush1.msra.mxu0 0.0
    %4673 = vmatprep.subr.mxu0 0.0
    %4674 = vmatpush1.msra.mxu0 0.0
    %4675 = vmatprep.subr.mxu0 0.0
    %4676 = vmatpush1.msra.mxu0 0.0
    %4677 = vmatprep.subr.mxu0 0.0
    %4678 = vmatpush1.msra.mxu0 0.0
    %4679 = vmatprep.subr.mxu0 0.0
    %4680 = vmatpush1.msra.mxu0 0.0
    %4681 = vmatprep.subr.mxu0 0.0
    %4682 = vmatpush1.msra.mxu0 0.0
    %4683 = vmatprep.subr.mxu0 0.0
    %4684 = vmatpush1.msra.mxu0 0.0
    %4685 = vmatprep.subr.mxu0 0.0
    %4686 = vmatpush1.msra.mxu0 0.0
    %4687 = vmatprep.subr.mxu0 0.0
    %4688 = vmatpush1.msra.mxu0 0.0
    %4689 = vmatprep.subr.mxu0 0.0
    %4690 = vmatpush1.msra.mxu0 0.0
    %4691 = vmatprep.subr.mxu0 0.0
    %4692 = vmatpush1.msra.mxu0 0.0
    %4693 = vmatprep.subr.mxu0 0.0
    %4694 = vmatpush1.msra.mxu0 0.0
    %4695 = vmatprep.subr.mxu0 0.0
    %4696 = vmatpush1.msra.mxu0 0.0
    %4697 = vmatprep.subr.mxu0 0.0
    %4698 = vmatpush1.msra.mxu0 0.0
    %4699 = vmatprep.subr.mxu0 0.0
    %4700 = vmatpush1.msra.mxu0 0.0
    %4701 = vmatprep.subr.mxu0 0.0
    %4702 = vmatpush1.msra.mxu0 0.0
    %4703 = vmatprep.subr.mxu0 0.0
    %4704 = vmatpush1.msra.mxu0 0.0
    %4705 = vmatprep.subr.mxu0 0.0
    %4706 = vmatpush1.msra.mxu0 0.0
    %4707 = vmatprep.subr.mxu0 0.0
    %4708 = vmatpush1.msra.mxu0 0.0
    %4709 = vmatprep.subr.mxu0 0.0
    %4710 = vmatpush1.msra.mxu0 0.0
    %4711 = vmatprep.subr.mxu0 0.0
    %4712 = vmatpush1.msra.mxu0 0.0
    %4713 = vmatprep.subr.mxu0 0.0
    %4714 = vmatpush1.msra.mxu0 0.0
    %4715 = vmatprep.subr.mxu0 0.0
    %4716 = vmatpush1.msra.mxu0 0.0
    %4717 = vmatprep.mubr.f32.mxu0 0.0
    %4718 = vmatmul.mubr.f32.gmra.mrb[0].mxu0 %v4651
    %v4719 = vpop.f32.mrb[0].mxu0
    %v4720 = vadd.f32 0.0, %v4719
    %v4721 = vpop.f32.mrb[0].mxu0
    %4722 = vdwg.mxu0
    %v4724 = vsel %vm1032, %v4499, 0
    %4726 = vmatprep.subr.mxu0 0.0
    %4727 = vmatpush1.msra.mxu0 %v3805
    %4728 = vmatprep.subr.mxu0 0.0
    %4729 = vmatpush1.msra.mxu0 0.0
    %4730 = vmatprep.subr.mxu0 0.0
    %4731 = vmatpush1.msra.mxu0 0.0
    %4732 = vmatprep.subr.mxu0 0.0
    %4733 = vmatpush1.msra.mxu0 0.0
    %4734 = vmatprep.subr.mxu0 0.0
    %4735 = vmatpush1.msra.mxu0 0.0
    %4736 = vmatprep.subr.mxu0 0.0
    %4737 = vmatpush1.msra.mxu0 0.0
    %4738 = vmatprep.subr.mxu0 0.0
    %4739 = vmatpush1.msra.mxu0 0.0
    %4740 = vmatprep.subr.mxu0 0.0
    %4741 = vmatpush1.msra.mxu0 0.0
    %4742 = vmatprep.subr.mxu0 0.0
    %4743 = vmatpush1.msra.mxu0 0.0
    %4744 = vmatprep.subr.mxu0 0.0
    %4745 = vmatpush1.msra.mxu0 0.0
    %4746 = vmatprep.subr.mxu0 0.0
    %4747 = vmatpush1.msra.mxu0 0.0
    %4748 = vmatprep.subr.mxu0 0.0
    %4749 = vmatpush1.msra.mxu0 0.0
    %4750 = vmatprep.subr.mxu0 0.0
    %4751 = vmatpush1.msra.mxu0 0.0
    %4752 = vmatprep.subr.mxu0 0.0
    %4753 = vmatpush1.msra.mxu0 0.0
    %4754 = vmatprep.subr.mxu0 0.0
    %4755 = vmatpush1.msra.mxu0 0.0
    %4756 = vmatprep.subr.mxu0 0.0
    %4757 = vmatpush1.msra.mxu0 0.0
    %4758 = vmatprep.subr.mxu0 0.0
    %4759 = vmatpush1.msra.mxu0 0.0
    %4760 = vmatprep.subr.mxu0 0.0
    %4761 = vmatpush1.msra.mxu0 0.0
    %4762 = vmatprep.subr.mxu0 0.0
    %4763 = vmatpush1.msra.mxu0 0.0
    %4764 = vmatprep.subr.mxu0 0.0
    %4765 = vmatpush1.msra.mxu0 0.0
    %4766 = vmatprep.subr.mxu0 0.0
    %4767 = vmatpush1.msra.mxu0 0.0
    %4768 = vmatprep.subr.mxu0 0.0
    %4769 = vmatpush1.msra.mxu0 0.0
    %4770 = vmatprep.subr.mxu0 0.0
    %4771 = vmatpush1.msra.mxu0 0.0
    %4772 = vmatprep.subr.mxu0 0.0
    %4773 = vmatpush1.msra.mxu0 0.0
    %4774 = vmatprep.subr.mxu0 0.0
    %4775 = vmatpush1.msra.mxu0 0.0
    %4776 = vmatprep.subr.mxu0 0.0
    %4777 = vmatpush1.msra.mxu0 0.0
    %4778 = vmatprep.subr.mxu0 0.0
    %4779 = vmatpush1.msra.mxu0 0.0
    %4780 = vmatprep.subr.mxu0 0.0
    %4781 = vmatpush1.msra.mxu0 0.0
    %4782 = vmatprep.subr.mxu0 0.0
    %4783 = vmatpush1.msra.mxu0 0.0
    %4784 = vmatprep.subr.mxu0 0.0
    %4785 = vmatpush1.msra.mxu0 0.0
    %4786 = vmatprep.subr.mxu0 0.0
    %4787 = vmatpush1.msra.mxu0 0.0
    %4788 = vmatprep.subr.mxu0 0.0
    %4789 = vmatpush1.msra.mxu0 0.0
    %4790 = vmatprep.mubr.f32.mxu0 0.0
    %4791 = vmatmul.mubr.f32.gmra.mrb[0].mxu0 %v4724
    %v4792 = vpop.f32.mrb[0].mxu0
    %v4793 = vadd.f32 0.0, %v4792
    %v4794 = vpop.f32.mrb[0].mxu0
    %4795 = vdwg.mxu0
    %v4797 = vsel %vm1032, %v4500, 0
    %4799 = vmatprep.subr.mxu0 0.0
    %4800 = vmatpush1.msra.mxu0 %v3738
    %4801 = vmatprep.subr.mxu0 0.0
    %4802 = vmatpush1.msra.mxu0 0.0
    %4803 = vmatprep.subr.mxu0 0.0
    %4804 = vmatpush1.msra.mxu0 0.0
    %4805 = vmatprep.subr.mxu0 0.0
    %4806 = vmatpush1.msra.mxu0 0.0
    %4807 = vmatprep.subr.mxu0 0.0
    %4808 = vmatpush1.msra.mxu0 0.0
    %4809 = vmatprep.subr.mxu0 0.0
    %4810 = vmatpush1.msra.mxu0 0.0
    %4811 = vmatprep.subr.mxu0 0.0
    %4812 = vmatpush1.msra.mxu0 0.0
    %4813 = vmatprep.subr.mxu0 0.0
    %4814 = vmatpush1.msra.mxu0 0.0
    %4815 = vmatprep.subr.mxu0 0.0
    %4816 = vmatpush1.msra.mxu0 0.0
    %4817 = vmatprep.subr.mxu0 0.0
    %4818 = vmatpush1.msra.mxu0 0.0
    %4819 = vmatprep.subr.mxu0 0.0
    %4820 = vmatpush1.msra.mxu0 0.0
    %4821 = vmatprep.subr.mxu0 0.0
    %4822 = vmatpush1.msra.mxu0 0.0
    %4823 = vmatprep.subr.mxu0 0.0
    %4824 = vmatpush1.msra.mxu0 0.0
    %4825 = vmatprep.subr.mxu0 0.0
    %4826 = vmatpush1.msra.mxu0 0.0
    %4827 = vmatprep.subr.mxu0 0.0
    %4828 = vmatpush1.msra.mxu0 0.0
    %4829 = vmatprep.subr.mxu0 0.0
    %4830 = vmatpush1.msra.mxu0 0.0
    %4831 = vmatprep.subr.mxu0 0.0
    %4832 = vmatpush1.msra.mxu0 0.0
    %4833 = vmatprep.subr.mxu0 0.0
    %4834 = vmatpush1.msra.mxu0 0.0
    %4835 = vmatprep.subr.mxu0 0.0
    %4836 = vmatpush1.msra.mxu0 0.0
    %4837 = vmatprep.subr.mxu0 0.0
    %4838 = vmatpush1.msra.mxu0 0.0
    %4839 = vmatprep.subr.mxu0 0.0
    %4840 = vmatpush1.msra.mxu0 0.0
    %4841 = vmatprep.subr.mxu0 0.0
    %4842 = vmatpush1.msra.mxu0 0.0
    %4843 = vmatprep.subr.mxu0 0.0
    %4844 = vmatpush1.msra.mxu0 0.0
    %4845 = vmatprep.subr.mxu0 0.0
    %4846 = vmatpush1.msra.mxu0 0.0
    %4847 = vmatprep.subr.mxu0 0.0
    %4848 = vmatpush1.msra.mxu0 0.0
    %4849 = vmatprep.subr.mxu0 0.0
    %4850 = vmatpush1.msra.mxu0 0.0
    %4851 = vmatprep.subr.mxu0 0.0
    %4852 = vmatpush1.msra.mxu0 0.0
    %4853 = vmatprep.subr.mxu0 0.0
    %4854 = vmatpush1.msra.mxu0 0.0
    %4855 = vmatprep.subr.mxu0 0.0
    %4856 = vmatpush1.msra.mxu0 0.0
    %4857 = vmatprep.subr.mxu0 0.0
    %4858 = vmatpush1.msra.mxu0 0.0
    %4859 = vmatprep.subr.mxu0 0.0
    %4860 = vmatpush1.msra.mxu0 0.0
    %4861 = vmatprep.subr.mxu0 0.0
    %4862 = vmatpush1.msra.mxu0 0.0
    %4863 = vmatprep.mubr.f32.mxu0 0.0
    %4864 = vmatmul.mubr.f32.gmra.mrb[0].mxu0 %v4797
    %v4865 = vpop.f32.mrb[0].mxu0
    %v4866 = vadd.f32 0.0, %v4865
    %v4867 = vpop.f32.mrb[0].mxu0
    %4868 = vdwg.mxu0
    %v4870 = vsel %vm1032, %v4501, 0
    %4872 = vmatprep.subr.mxu0 0.0
    %4873 = vmatpush1.msra.mxu0 %v3806
    %4874 = vmatprep.subr.mxu0 0.0
    %4875 = vmatpush1.msra.mxu0 0.0
    %4876 = vmatprep.subr.mxu0 0.0
    %4877 = vmatpush1.msra.mxu0 0.0
    %4878 = vmatprep.subr.mxu0 0.0
    %4879 = vmatpush1.msra.mxu0 0.0
    %4880 = vmatprep.subr.mxu0 0.0
    %4881 = vmatpush1.msra.mxu0 0.0
    %4882 = vmatprep.subr.mxu0 0.0
    %4883 = vmatpush1.msra.mxu0 0.0
    %4884 = vmatprep.subr.mxu0 0.0
    %4885 = vmatpush1.msra.mxu0 0.0
    %4886 = vmatprep.subr.mxu0 0.0
    %4887 = vmatpush1.msra.mxu0 0.0
    %4888 = vmatprep.subr.mxu0 0.0
    %4889 = vmatpush1.msra.mxu0 0.0
    %4890 = vmatprep.subr.mxu0 0.0
    %4891 = vmatpush1.msra.mxu0 0.0
    %4892 = vmatprep.subr.mxu0 0.0
    %4893 = vmatpush1.msra.mxu0 0.0
    %4894 = vmatprep.subr.mxu0 0.0
    %4895 = vmatpush1.msra.mxu0 0.0
    %4896 = vmatprep.subr.mxu0 0.0
    %4897 = vmatpush1.msra.mxu0 0.0
    %4898 = vmatprep.subr.mxu0 0.0
    %4899 = vmatpush1.msra.mxu0 0.0
    %4900 = vmatprep.subr.mxu0 0.0
    %4901 = vmatpush1.msra.mxu0 0.0
    %4902 = vmatprep.subr.mxu0 0.0
    %4903 = vmatpush1.msra.mxu0 0.0
    %4904 = vmatprep.subr.mxu0 0.0
    %4905 = vmatpush1.msra.mxu0 0.0
    %4906 = vmatprep.subr.mxu0 0.0
    %4907 = vmatpush1.msra.mxu0 0.0
    %4908 = vmatprep.subr.mxu0 0.0
    %4909 = vmatpush1.msra.mxu0 0.0
    %4910 = vmatprep.subr.mxu0 0.0
    %4911 = vmatpush1.msra.mxu0 0.0
    %4912 = vmatprep.subr.mxu0 0.0
    %4913 = vmatpush1.msra.mxu0 0.0
    %4914 = vmatprep.subr.mxu0 0.0
    %4915 = vmatpush1.msra.mxu0 0.0
    %4916 = vmatprep.subr.mxu0 0.0
    %4917 = vmatpush1.msra.mxu0 0.0
    %4918 = vmatprep.subr.mxu0 0.0
    %4919 = vmatpush1.msra.mxu0 0.0
    %4920 = vmatprep.subr.mxu0 0.0
    %4921 = vmatpush1.msra.mxu0 0.0
    %4922 = vmatprep.subr.mxu0 0.0
    %4923 = vmatpush1.msra.mxu0 0.0
    %4924 = vmatprep.subr.mxu0 0.0
    %4925 = vmatpush1.msra.mxu0 0.0
    %4926 = vmatprep.subr.mxu0 0.0
    %4927 = vmatpush1.msra.mxu0 0.0
    %4928 = vmatprep.subr.mxu0 0.0
    %4929 = vmatpush1.msra.mxu0 0.0
    %4930 = vmatprep.subr.mxu0 0.0
    %4931 = vmatpush1.msra.mxu0 0.0
    %4932 = vmatprep.subr.mxu0 0.0
    %4933 = vmatpush1.msra.mxu0 0.0
    %4934 = vmatprep.subr.mxu0 0.0
    %4935 = vmatpush1.msra.mxu0 0.0
    %4936 = vmatprep.mubr.f32.mxu0 0.0
    %4937 = vmatmul.mubr.f32.gmra.mrb[0].mxu0 %v4870
    %v4938 = vpop.f32.mrb[0].mxu0
    %v4939 = vadd.f32 0.0, %v4938
    %v4940 = vpop.f32.mrb[0].mxu0
    %4941 = vdwg.mxu0
    %v4943 = vsel %vm1032, %v4502, 0
    %4945 = vmatprep.subr.mxu0 0.0
    %4946 = vmatpush1.msra.mxu0 %v3739
    %4947 = vmatprep.subr.mxu0 0.0
    %4948 = vmatpush1.msra.mxu0 0.0
    %4949 = vmatprep.subr.mxu0 0.0
    %4950 = vmatpush1.msra.mxu0 0.0
    %4951 = vmatprep.subr.mxu0 0.0
    %4952 = vmatpush1.msra.mxu0 0.0
    %4953 = vmatprep.subr.mxu0 0.0
    %4954 = vmatpush1.msra.mxu0 0.0
    %4955 = vmatprep.subr.mxu0 0.0
    %4956 = vmatpush1.msra.mxu0 0.0
    %4957 = vmatprep.subr.mxu0 0.0
    %4958 = vmatpush1.msra.mxu0 0.0
    %4959 = vmatprep.subr.mxu0 0.0
    %4960 = vmatpush1.msra.mxu0 0.0
    %4961 = vmatprep.subr.mxu0 0.0
    %4962 = vmatpush1.msra.mxu0 0.0
    %4963 = vmatprep.subr.mxu0 0.0
    %4964 = vmatpush1.msra.mxu0 0.0
    %4965 = vmatprep.subr.mxu0 0.0
    %4966 = vmatpush1.msra.mxu0 0.0
    %4967 = vmatprep.subr.mxu0 0.0
    %4968 = vmatpush1.msra.mxu0 0.0
    %4969 = vmatprep.subr.mxu0 0.0
    %4970 = vmatpush1.msra.mxu0 0.0
    %4971 = vmatprep.subr.mxu0 0.0
    %4972 = vmatpush1.msra.mxu0 0.0
    %4973 = vmatprep.subr.mxu0 0.0
    %4974 = vmatpush1.msra.mxu0 0.0
    %4975 = vmatprep.subr.mxu0 0.0
    %4976 = vmatpush1.msra.mxu0 0.0
    %4977 = vmatprep.subr.mxu0 0.0
    %4978 = vmatpush1.msra.mxu0 0.0
    %4979 = vmatprep.subr.mxu0 0.0
    %4980 = vmatpush1.msra.mxu0 0.0
    %4981 = vmatprep.subr.mxu0 0.0
    %4982 = vmatpush1.msra.mxu0 0.0
    %4983 = vmatprep.subr.mxu0 0.0
    %4984 = vmatpush1.msra.mxu0 0.0
    %4985 = vmatprep.subr.mxu0 0.0
    %4986 = vmatpush1.msra.mxu0 0.0
    %4987 = vmatprep.subr.mxu0 0.0
    %4988 = vmatpush1.msra.mxu0 0.0
    %4989 = vmatprep.subr.mxu0 0.0
    %4990 = vmatpush1.msra.mxu0 0.0
    %4991 = vmatprep.subr.mxu0 0.0
    %4992 = vmatpush1.msra.mxu0 0.0
    %4993 = vmatprep.subr.mxu0 0.0
    %4994 = vmatpush1.msra.mxu0 0.0
    %4995 = vmatprep.subr.mxu0 0.0
    %4996 = vmatpush1.msra.mxu0 0.0
    %4997 = vmatprep.subr.mxu0 0.0
    %4998 = vmatpush1.msra.mxu0 0.0
    %4999 = vmatprep.subr.mxu0 0.0
    %5000 = vmatpush1.msra.mxu0 0.0
    %5001 = vmatprep.subr.mxu0 0.0
    %5002 = vmatpush1.msra.mxu0 0.0
    %5003 = vmatprep.subr.mxu0 0.0
    %5004 = vmatpush1.msra.mxu0 0.0
    %5005 = vmatprep.subr.mxu0 0.0
    %5006 = vmatpush1.msra.mxu0 0.0
    %5007 = vmatprep.subr.mxu0 0.0
    %5008 = vmatpush1.msra.mxu0 0.0
    %5009 = vmatprep.mubr.f32.mxu0 0.0
    %5010 = vmatmul.mubr.f32.gmra.mrb[0].mxu0 %v4943
    %v5011 = vpop.f32.mrb[0].mxu0
    %v5012 = vadd.f32 0.0, %v5011
    %v5013 = vpop.f32.mrb[0].mxu0
    %5014 = vdwg.mxu0
    %v5016 = vsel %vm1032, %v4503, 0
    %5018 = vmatprep.subr.mxu0 0.0
    %5019 = vmatpush1.msra.mxu0 %v3807
    %5020 = vmatprep.subr.mxu0 0.0
    %5021 = vmatpush1.msra.mxu0 0.0
    %5022 = vmatprep.subr.mxu0 0.0
    %5023 = vmatpush1.msra.mxu0 0.0
    %5024 = vmatprep.subr.mxu0 0.0
    %5025 = vmatpush1.msra.mxu0 0.0
    %5026 = vmatprep.subr.mxu0 0.0
    %5027 = vmatpush1.msra.mxu0 0.0
    %5028 = vmatprep.subr.mxu0 0.0
    %5029 = vmatpush1.msra.mxu0 0.0
    %5030 = vmatprep.subr.mxu0 0.0
    %5031 = vmatpush1.msra.mxu0 0.0
    %5032 = vmatprep.subr.mxu0 0.0
    %5033 = vmatpush1.msra.mxu0 0.0
    %5034 = vmatprep.subr.mxu0 0.0
    %5035 = vmatpush1.msra.mxu0 0.0
    %5036 = vmatprep.subr.mxu0 0.0
    %5037 = vmatpush1.msra.mxu0 0.0
    %5038 = vmatprep.subr.mxu0 0.0
    %5039 = vmatpush1.msra.mxu0 0.0
    %5040 = vmatprep.subr.mxu0 0.0
    %5041 = vmatpush1.msra.mxu0 0.0
    %5042 = vmatprep.subr.mxu0 0.0
    %5043 = vmatpush1.msra.mxu0 0.0
    %5044 = vmatprep.subr.mxu0 0.0
    %5045 = vmatpush1.msra.mxu0 0.0
    %5046 = vmatprep.subr.mxu0 0.0
    %5047 = vmatpush1.msra.mxu0 0.0
    %5048 = vmatprep.subr.mxu0 0.0
    %5049 = vmatpush1.msra.mxu0 0.0
    %5050 = vmatprep.subr.mxu0 0.0
    %5051 = vmatpush1.msra.mxu0 0.0
    %5052 = vmatprep.subr.mxu0 0.0
    %5053 = vmatpush1.msra.mxu0 0.0
    %5054 = vmatprep.subr.mxu0 0.0
    %5055 = vmatpush1.msra.mxu0 0.0
    %5056 = vmatprep.subr.mxu0 0.0
    %5057 = vmatpush1.msra.mxu0 0.0
    %5058 = vmatprep.subr.mxu0 0.0
    %5059 = vmatpush1.msra.mxu0 0.0
    %5060 = vmatprep.subr.mxu0 0.0
    %5061 = vmatpush1.msra.mxu0 0.0
    %5062 = vmatprep.subr.mxu0 0.0
    %5063 = vmatpush1.msra.mxu0 0.0
    %5064 = vmatprep.subr.mxu0 0.0
    %5065 = vmatpush1.msra.mxu0 0.0
    %5066 = vmatprep.subr.mxu0 0.0
    %5067 = vmatpush1.msra.mxu0 0.0
    %5068 = vmatprep.subr.mxu0 0.0
    %5069 = vmatpush1.msra.mxu0 0.0
    %5070 = vmatprep.subr.mxu0 0.0
    %5071 = vmatpush1.msra.mxu0 0.0
    %5072 = vmatprep.subr.mxu0 0.0
    %5073 = vmatpush1.msra.mxu0 0.0
    %5074 = vmatprep.subr.mxu0 0.0
    %5075 = vmatpush1.msra.mxu0 0.0
    %5076 = vmatprep.subr.mxu0 0.0
    %5077 = vmatpush1.msra.mxu0 0.0
    %5078 = vmatprep.subr.mxu0 0.0
    %5079 = vmatpush1.msra.mxu0 0.0
    %5080 = vmatprep.subr.mxu0 0.0
    %5081 = vmatpush1.msra.mxu0 0.0
    %5082 = vmatprep.mubr.f32.mxu0 0.0
    %5083 = vmatmul.mubr.f32.gmra.mrb[0].mxu0 %v5016
    %v5084 = vpop.f32.mrb[0].mxu0
    %v5085 = vadd.f32 0.0, %v5084
    %v5086 = vpop.f32.mrb[0].mxu0
    %5087 = vdwg.mxu0
    %v5088 = vcombine.low %v4574, %v4866
    %v5089 = vcombine.high %v4574, %v4866
    %v5091 = vunpack.c.l.s4 1983009808
    %v5092 = vunpack.c.0.s8 %v5091
    %v5093 = vlaneseq
    %v5094 = vshrl.u32 %v5093, 7
    %v5095 = vsub.s32 %v5092, %v5094
    %v5096 = vrot.slane %v5088, %v5095
    %v5098 = vunpack.c.l.s4 1983009808
    %v5099 = vunpack.c.0.s8 %v5098
    %v5100 = vlaneseq
    %v5101 = vshrl.u32 %v5100, 7
    %v5102 = vsub.s32 %v5099, %v5101
    %v5103 = vrot.slane %v5089, %v5102
    %v5104 = vcombine.low %v4720, %v5012
    %v5105 = vcombine.high %v4720, %v5012
    %v5107 = vunpack.c.l.s4 1983009808
    %v5108 = vunpack.c.0.s8 %v5107
    %v5109 = vlaneseq
    %v5110 = vshrl.u32 %v5109, 7
    %v5111 = vsub.s32 %v5108, %v5110
    %v5112 = vrot.slane %v5104, %v5111
    %v5114 = vunpack.c.l.s4 1983009808
    %v5115 = vunpack.c.0.s8 %v5114
    %v5116 = vlaneseq
    %v5117 = vshrl.u32 %v5116, 7
    %v5118 = vsub.s32 %v5115, %v5117
    %v5119 = vrot.slane %v5105, %v5118
    %v5120 = vcombine.low %v5096, %v5112
    %v5121 = vcombine.high %v5096, %v5112
    %v5123 = vunpack.c.l.s4 1934713408
    %v5124 = vunpack.c.0.s8 %v5123
    %v5125 = vlaneseq
    %v5126 = vshrl.u32 %v5125, 7
    %v5127 = vsub.s32 %v5124, %v5126
    %v5128 = vrot.slane %v5120, %v5127
    %v5130 = vunpack.c.l.s4 1934713408
    %v5131 = vunpack.c.0.s8 %v5130
    %v5132 = vlaneseq
    %v5133 = vshrl.u32 %v5132, 7
    %v5134 = vsub.s32 %v5131, %v5133
    %v5135 = vrot.slane %v5121, %v5134
    %v5136 = vcombine.low %v5103, %v5119
    %v5137 = vcombine.high %v5103, %v5119
    %v5139 = vunpack.c.l.s4 1934713408
    %v5140 = vunpack.c.0.s8 %v5139
    %v5141 = vlaneseq
    %v5142 = vshrl.u32 %v5141, 7
    %v5143 = vsub.s32 %v5140, %v5142
    %v5144 = vrot.slane %v5136, %v5143
    %v5146 = vunpack.c.l.s4 1934713408
    %v5147 = vunpack.c.0.s8 %v5146
    %v5148 = vlaneseq
    %v5149 = vshrl.u32 %v5148, 7
    %v5150 = vsub.s32 %v5147, %v5149
    %v5151 = vrot.slane %v5137, %v5150
    %v5152 = vcombine.high %v5128, 0.0
    %v5153 = vcombine.high %v5135, 0.0
    %v5154 = vcombine.high %v5144, 0.0
    %v5155 = vcombine.high %v5151, 0.0
    %v5156 = vcombine.low %v4647, %v4939
    %v5157 = vcombine.high %v4647, %v4939
    %v5159 = vunpack.c.l.s4 1983009808
    %v5160 = vunpack.c.0.s8 %v5159
    %v5161 = vlaneseq
    %v5162 = vshrl.u32 %v5161, 7
    %v5163 = vsub.s32 %v5160, %v5162
    %v5164 = vrot.slane %v5156, %v5163
    %v5166 = vunpack.c.l.s4 1983009808
    %v5167 = vunpack.c.0.s8 %v5166
    %v5168 = vlaneseq
    %v5169 = vshrl.u32 %v5168, 7
    %v5170 = vsub.s32 %v5167, %v5169
    %v5171 = vrot.slane %v5157, %v5170
    %v5172 = vcombine.low %v4793, %v5085
    %v5173 = vcombine.high %v4793, %v5085
    %v5175 = vunpack.c.l.s4 1983009808
    %v5176 = vunpack.c.0.s8 %v5175
    %v5177 = vlaneseq
    %v5178 = vshrl.u32 %v5177, 7
    %v5179 = vsub.s32 %v5176, %v5178
    %v5180 = vrot.slane %v5172, %v5179
    %v5182 = vunpack.c.l.s4 1983009808
    %v5183 = vunpack.c.0.s8 %v5182
    %v5184 = vlaneseq
    %v5185 = vshrl.u32 %v5184, 7
    %v5186 = vsub.s32 %v5183, %v5185
    %v5187 = vrot.slane %v5173, %v5186
    %v5188 = vcombine.low %v5164, %v5180
    %v5189 = vcombine.high %v5164, %v5180
    %v5191 = vunpack.c.l.s4 1934713408
    %v5192 = vunpack.c.0.s8 %v5191
    %v5193 = vlaneseq
    %v5194 = vshrl.u32 %v5193, 7
    %v5195 = vsub.s32 %v5192, %v5194
    %v5196 = vrot.slane %v5188, %v5195
    %v5198 = vunpack.c.l.s4 1934713408
    %v5199 = vunpack.c.0.s8 %v5198
    %v5200 = vlaneseq
    %v5201 = vshrl.u32 %v5200, 7
    %v5202 = vsub.s32 %v5199, %v5201
    %v5203 = vrot.slane %v5189, %v5202
    %v5204 = vcombine.low %v5171, %v5187
    %v5205 = vcombine.high %v5171, %v5187
    %v5207 = vunpack.c.l.s4 1934713408
    %v5208 = vunpack.c.0.s8 %v5207
    %v5209 = vlaneseq
    %v5210 = vshrl.u32 %v5209, 7
    %v5211 = vsub.s32 %v5208, %v5210
    %v5212 = vrot.slane %v5204, %v5211
    %v5214 = vunpack.c.l.s4 1934713408
    %v5215 = vunpack.c.0.s8 %v5214
    %v5216 = vlaneseq
    %v5217 = vshrl.u32 %v5216, 7
    %v5218 = vsub.s32 %v5215, %v5217
    %v5219 = vrot.slane %v5205, %v5218
    %v5220 = vcombine.high %v5196, 0.0
    %v5221 = vcombine.high %v5203, 0.0
    %v5222 = vcombine.high %v5212, 0.0
    %v5223 = vcombine.high %v5219, 0.0
    %v5224 = vcombine.low %v5128, %v5135
    %v5226 = vunpack.c.l.s4 1983009808
    %v5227 = vunpack.c.0.s8 %v5226
    %v5228 = vlaneseq
    %v5229 = vshrl.u32 %v5228, 7
    %v5230 = vsub.s32 %v5227, %v5229
    %v5231 = vrot.slane %v5224, %v5230
    %v5232 = vcombine.low %v5152, %v5153
    %v5234 = vunpack.c.l.s4 1983009808
    %v5235 = vunpack.c.0.s8 %v5234
    %v5236 = vlaneseq
    %v5237 = vshrl.u32 %v5236, 7
    %v5238 = vsub.s32 %v5235, %v5237
    %v5239 = vrot.slane %v5232, %v5238
    %v5240 = vcombine.low %v5144, %v5151
    %v5242 = vunpack.c.l.s4 1983009808
    %v5243 = vunpack.c.0.s8 %v5242
    %v5244 = vlaneseq
    %v5245 = vshrl.u32 %v5244, 7
    %v5246 = vsub.s32 %v5243, %v5245
    %v5247 = vrot.slane %v5240, %v5246
    %v5248 = vcombine.low %v5154, %v5155
    %v5250 = vunpack.c.l.s4 1983009808
    %v5251 = vunpack.c.0.s8 %v5250
    %v5252 = vlaneseq
    %v5253 = vshrl.u32 %v5252, 7
    %v5254 = vsub.s32 %v5251, %v5253
    %v5255 = vrot.slane %v5248, %v5254
    %v5256 = vcombine.low %v5231, %v5239
    %v5257 = vcombine.high %v5231, %v5239
    %v5259 = vunpack.c.l.s4 1934713408
    %v5260 = vunpack.c.0.s8 %v5259
    %v5261 = vlaneseq
    %v5262 = vshrl.u32 %v5261, 7
    %v5263 = vsub.s32 %v5260, %v5262
    %v5264 = vrot.slane %v5256, %v5263
    %v5266 = vunpack.c.l.s4 1934713408
    %v5267 = vunpack.c.0.s8 %v5266
    %v5268 = vlaneseq
    %v5269 = vshrl.u32 %v5268, 7
    %v5270 = vsub.s32 %v5267, %v5269
    %v5271 = vrot.slane %v5257, %v5270
    %v5272 = vcombine.low %v5247, %v5255
    %v5273 = vcombine.high %v5247, %v5255
    %v5275 = vunpack.c.l.s4 1934713408
    %v5276 = vunpack.c.0.s8 %v5275
    %v5277 = vlaneseq
    %v5278 = vshrl.u32 %v5277, 7
    %v5279 = vsub.s32 %v5276, %v5278
    %v5280 = vrot.slane %v5272, %v5279
    %v5282 = vunpack.c.l.s4 1934713408
    %v5283 = vunpack.c.0.s8 %v5282
    %v5284 = vlaneseq
    %v5285 = vshrl.u32 %v5284, 7
    %v5286 = vsub.s32 %v5283, %v5285
    %v5287 = vrot.slane %v5273, %v5286
    %v5288 = vcombine.low %v5264, %v5280
    %v5289 = vcombine.high %v5264, %v5280
    %v5290 = vcombine.low %v5271, %v5287
    %v5291 = vcombine.high %v5271, %v5287
    %v5292 = vcombine.low %v5196, %v5203
    %v5294 = vunpack.c.l.s4 1983009808
    %v5295 = vunpack.c.0.s8 %v5294
    %v5296 = vlaneseq
    %v5297 = vshrl.u32 %v5296, 7
    %v5298 = vsub.s32 %v5295, %v5297
    %v5299 = vrot.slane %v5292, %v5298
    %v5300 = vcombine.low %v5220, %v5221
    %v5302 = vunpack.c.l.s4 1983009808
    %v5303 = vunpack.c.0.s8 %v5302
    %v5304 = vlaneseq
    %v5305 = vshrl.u32 %v5304, 7
    %v5306 = vsub.s32 %v5303, %v5305
    %v5307 = vrot.slane %v5300, %v5306
    %v5308 = vcombine.low %v5212, %v5219
    %v5310 = vunpack.c.l.s4 1983009808
    %v5311 = vunpack.c.0.s8 %v5310
    %v5312 = vlaneseq
    %v5313 = vshrl.u32 %v5312, 7
    %v5314 = vsub.s32 %v5311, %v5313
    %v5315 = vrot.slane %v5308, %v5314
    %v5316 = vcombine.low %v5222, %v5223
    %v5318 = vunpack.c.l.s4 1983009808
    %v5319 = vunpack.c.0.s8 %v5318
    %v5320 = vlaneseq
    %v5321 = vshrl.u32 %v5320, 7
    %v5322 = vsub.s32 %v5319, %v5321
    %v5323 = vrot.slane %v5316, %v5322
    %v5324 = vcombine.low %v5299, %v5307
    %v5325 = vcombine.high %v5299, %v5307
    %v5327 = vunpack.c.l.s4 1934713408
    %v5328 = vunpack.c.0.s8 %v5327
    %v5329 = vlaneseq
    %v5330 = vshrl.u32 %v5329, 7
    %v5331 = vsub.s32 %v5328, %v5330
    %v5332 = vrot.slane %v5324, %v5331
    %v5334 = vunpack.c.l.s4 1934713408
    %v5335 = vunpack.c.0.s8 %v5334
    %v5336 = vlaneseq
    %v5337 = vshrl.u32 %v5336, 7
    %v5338 = vsub.s32 %v5335, %v5337
    %v5339 = vrot.slane %v5325, %v5338
    %v5340 = vcombine.low %v5315, %v5323
    %v5341 = vcombine.high %v5315, %v5323
    %v5343 = vunpack.c.l.s4 1934713408
    %v5344 = vunpack.c.0.s8 %v5343
    %v5345 = vlaneseq
    %v5346 = vshrl.u32 %v5345, 7
    %v5347 = vsub.s32 %v5344, %v5346
    %v5348 = vrot.slane %v5340, %v5347
    %v5350 = vunpack.c.l.s4 1934713408
    %v5351 = vunpack.c.0.s8 %v5350
    %v5352 = vlaneseq
    %v5353 = vshrl.u32 %v5352, 7
    %v5354 = vsub.s32 %v5351, %v5353
    %v5355 = vrot.slane %v5341, %v5354
    %v5356 = vcombine.low %v5332, %v5348
    %v5357 = vcombine.high %v5332, %v5348
    %v5358 = vcombine.low %v5339, %v5355
    %v5359 = vcombine.high %v5339, %v5355
    %5362 = vrot.lane.b32.xlu0 %v5289, 8
    %v5363 = vpop.permute.xlu0 %5362
    %5364 = vrot.lane.b32.xlu0 %v5357, 8
    %v5365 = vpop.permute.xlu0 %5364
    %5370 = vrot.lane.b32.xlu0 %v5290, 16
    %v5371 = vpop.permute.xlu0 %5370
    %5372 = vrot.lane.b32.xlu0 %v5358, 16
    %v5373 = vpop.permute.xlu0 %5372
    %5378 = vrot.lane.b32.xlu0 %v5291, 24
    %v5379 = vpop.permute.xlu0 %5378
    %5380 = vrot.lane.b32.xlu0 %v5359, 24
    %v5381 = vpop.permute.xlu0 %5380
    %v5384 = vsel %vm1032, %v5288, %v5363
    %v5385 = vsel %vm1032, %v5356, %v5365
    %v5386 = vsel %vm2611, %v5384, %v5371
    %v5387 = vsel %vm2611, %v5385, %v5373
    %v5388 = vsel %vm2614, %v5386, %v5379
    %v5389 = vsel %vm2614, %v5387, %v5381
    %v5390 = vlaneseq
    %v5391 = vshrl.u32 %v5390, 7
    %v5392 = vsub.s32 4, %v5391
    %v5393 = vrot.slane %v34, %v5392
    %v5395 = vsel %vm46, %v5388, 0
    %v5398 = vsel %vm46, %v5389, 0
    %5400 = vmatprep.subr.mxu0 0.0
    %5401 = vmatpush1.msra.mxu0 %v2924
    %5402 = vmatprep.subr.mxu0 0.0
    %5403 = vmatpush1.msra.mxu0 %v2925
    %5404 = vmatprep.subr.mxu0 0.0
    %5405 = vmatpush1.msra.mxu0 %v2926
    %5406 = vmatprep.subr.mxu0 0.0
    %5407 = vmatpush1.msra.mxu0 %v2927
    %5408 = vmatprep.subr.mxu0 0.0
    %5409 = vmatpush1.msra.mxu0 0.0
    %5410 = vmatprep.subr.mxu0 0.0
    %5411 = vmatpush1.msra.mxu0 0.0
    %5412 = vmatprep.subr.mxu0 0.0
    %5413 = vmatpush1.msra.mxu0 0.0
    %5414 = vmatprep.subr.mxu0 0.0
    %5415 = vmatpush1.msra.mxu0 0.0
    %5416 = vmatprep.subr.mxu0 0.0
    %5417 = vmatpush1.msra.mxu0 0.0
    %5418 = vmatprep.subr.mxu0 0.0
    %5419 = vmatpush1.msra.mxu0 0.0
    %5420 = vmatprep.subr.mxu0 0.0
    %5421 = vmatpush1.msra.mxu0 0.0
    %5422 = vmatprep.subr.mxu0 0.0
    %5423 = vmatpush1.msra.mxu0 0.0
    %5424 = vmatprep.subr.mxu0 0.0
    %5425 = vmatpush1.msra.mxu0 0.0
    %5426 = vmatprep.subr.mxu0 0.0
    %5427 = vmatpush1.msra.mxu0 0.0
    %5428 = vmatprep.subr.mxu0 0.0
    %5429 = vmatpush1.msra.mxu0 0.0
    %5430 = vmatprep.subr.mxu0 0.0
    %5431 = vmatpush1.msra.mxu0 0.0
    %5432 = vmatprep.subr.mxu0 0.0
    %5433 = vmatpush1.msra.mxu0 0.0
    %5434 = vmatprep.subr.mxu0 0.0
    %5435 = vmatpush1.msra.mxu0 0.0
    %5436 = vmatprep.subr.mxu0 0.0
    %5437 = vmatpush1.msra.mxu0 0.0
    %5438 = vmatprep.subr.mxu0 0.0
    %5439 = vmatpush1.msra.mxu0 0.0
    %5440 = vmatprep.subr.mxu0 0.0
    %5441 = vmatpush1.msra.mxu0 0.0
    %5442 = vmatprep.subr.mxu0 0.0
    %5443 = vmatpush1.msra.mxu0 0.0
    %5444 = vmatprep.subr.mxu0 0.0
    %5445 = vmatpush1.msra.mxu0 0.0
    %5446 = vmatprep.subr.mxu0 0.0
    %5447 = vmatpush1.msra.mxu0 0.0
    %5448 = vmatprep.subr.mxu0 0.0
    %5449 = vmatpush1.msra.mxu0 0.0
    %5450 = vmatprep.subr.mxu0 0.0
    %5451 = vmatpush1.msra.mxu0 0.0
    %5452 = vmatprep.subr.mxu0 0.0
    %5453 = vmatpush1.msra.mxu0 0.0
    %5454 = vmatprep.subr.mxu0 0.0
    %5455 = vmatpush1.msra.mxu0 0.0
    %5456 = vmatprep.subr.mxu0 0.0
    %5457 = vmatpush1.msra.mxu0 0.0
    %5458 = vmatprep.subr.mxu0 0.0
    %5459 = vmatpush1.msra.mxu0 0.0
    %5460 = vmatprep.subr.mxu0 0.0
    %5461 = vmatpush1.msra.mxu0 0.0
    %5462 = vmatprep.subr.mxu0 0.0
    %5463 = vmatpush1.msra.mxu0 0.0
    %5464 = vmatprep.mubr.f32.mxu0 0.0
    %5465 = vmatmul.mubr.f32.gmra.mrb[0].mxu0 %v5395
    %v5466 = vpop.f32.mrb[0].mxu0
    %v5467 = vadd.f32 %v5393, %v5466
    %v5468 = vpop.f32.mrb[0].mxu0
    %5469 = vmatprep.mubr.f32.mxu0 0.0
    %5470 = vmatmul.mubr.f32.gmra.mrb[0].mxu0 %v5398
    %v5471 = vpop.f32.mrb[0].mxu0
    %v5472 = vadd.f32 %v5393, %v5471
    %v5473 = vpop.f32.mrb[0].mxu0
    %5474 = vdwg.mxu0
    %v5475 = vadd.f32 %v2741, %v5467
    %v5476 = vadd.f32 %v2742, %v5472
    %v5477 = vsel %vm46, %v5475, 0.0
    %5478 = vadd.xlane.f32.xlu0 %v5477
    %v5479 = vpop.xlane.xlu0 %5478
    %v5480 = vsel %vm46, %v5476, 0.0
    %5481 = vadd.xlane.f32.xlu0 %v5480
    %v5482 = vpop.xlane.xlu0 %5481
    %v5483 = vmul.f32 %v5479, %v2710
    %v5484 = vmul.f32 %v5482, %v2710
    %v5485 = vsub.f32 %v5475, %v5483
    %v5486 = vsub.f32 %v5476, %v5484
    %v5487 = vmul.f32 %v5485, %v5485
    %v5488 = vmul.f32 %v5486, %v5486
    %v5489 = vsel %vm46, %v5487, 0.0
    %5490 = vadd.xlane.f32.xlu0 %v5489
    %v5491 = vpop.xlane.xlu0 %5490
    %v5492 = vsel %vm46, %v5488, 0.0
    %5493 = vadd.xlane.f32.xlu0 %v5492
    %v5494 = vpop.xlane.xlu0 %5493
    %v5495 = vmul.f32 %v5491, %v2710
    %v5496 = vmul.f32 %v5494, %v2710
    %v5497 = vadd.f32 %v5495, 1e-05
    %v5498 = vadd.f32 %v5496, 1e-05
    %v5499 = vrsqrt.pop %v5497
    %v5500 = vrsqrt.pop %v5498
    %v5501 = vmul.f32 %v5485, %v5499
    %v5502 = vmul.f32 %v5486, %v5500
    %v5503 = vlaneseq
    %v5504 = vshrl.u32 %v5503, 7
    %v5505 = vsub.s32 1, %v5504
    %v5506 = vrot.slane %v35, %v5505
    %v5507 = vmul.f32 %v5501, %v5506
    %v5508 = vmul.f32 %v5502, %v5506
    %v5509 = vlaneseq
    %v5510 = vshrl.u32 %v5509, 7
    %v5511 = vsub.s32 2, %v5510
    %v5512 = vrot.slane %v35, %v5511
    %v5513 = vadd.f32 %v5507, %v5512
    %v5514 = vadd.f32 %v5508, %v5512
    %s5515 = scalar_lea.vmem [#allocation2], 320
    %v5516 = vld [vmem:[%s5515] sm:$0xff]
    %v5517 = vld [vmem:[%s5515 + $0x8] sm:$0xff]
    %v5518 = vld [vmem:[%s5515 + $0x10] sm:$0xff]
    %v5519 = vld [vmem:[%s5515 + $0x18] sm:$0xff]
    %v5520 = vlaneseq
    %v5521 = vshrl.u32 %v5520, 7
    %v5522 = vsub.s32 5, %v5521
    %v5523 = vrot.slane %v34, %v5522
    %v5525 = vsel %vm46, %v5513, 0
    %v5528 = vsel %vm46, %v5514, 0
    %5530 = vmatprep.subr.mxu0 0.0
    %5531 = vmatpush1.msra.mxu0 %v5516
    %5532 = vmatprep.subr.mxu0 0.0
    %5533 = vmatpush1.msra.mxu0 %v5517
    %5534 = vmatprep.subr.mxu0 0.0
    %5535 = vmatpush1.msra.mxu0 %v5518
    %5536 = vmatprep.subr.mxu0 0.0
    %5537 = vmatpush1.msra.mxu0 %v5519
    %5538 = vmatprep.subr.mxu0 0.0
    %5539 = vmatpush1.msra.mxu0 0.0
    %5540 = vmatprep.subr.mxu0 0.0
    %5541 = vmatpush1.msra.mxu0 0.0
    %5542 = vmatprep.subr.mxu0 0.0
    %5543 = vmatpush1.msra.mxu0 0.0
    %5544 = vmatprep.subr.mxu0 0.0
    %5545 = vmatpush1.msra.mxu0 0.0
    %5546 = vmatprep.subr.mxu0 0.0
    %5547 = vmatpush1.msra.mxu0 0.0
    %5548 = vmatprep.subr.mxu0 0.0
    %5549 = vmatpush1.msra.mxu0 0.0
    %5550 = vmatprep.subr.mxu0 0.0
    %5551 = vmatpush1.msra.mxu0 0.0
    %5552 = vmatprep.subr.mxu0 0.0
    %5553 = vmatpush1.msra.mxu0 0.0
    %5554 = vmatprep.subr.mxu0 0.0
    %5555 = vmatpush1.msra.mxu0 0.0
    %5556 = vmatprep.subr.mxu0 0.0
    %5557 = vmatpush1.msra.mxu0 0.0
    %5558 = vmatprep.subr.mxu0 0.0
    %5559 = vmatpush1.msra.mxu0 0.0
    %5560 = vmatprep.subr.mxu0 0.0
    %5561 = vmatpush1.msra.mxu0 0.0
    %5562 = vmatprep.subr.mxu0 0.0
    %5563 = vmatpush1.msra.mxu0 0.0
    %5564 = vmatprep.subr.mxu0 0.0
    %5565 = vmatpush1.msra.mxu0 0.0
    %5566 = vmatprep.subr.mxu0 0.0
    %5567 = vmatpush1.msra.mxu0 0.0
    %5568 = vmatprep.subr.mxu0 0.0
    %5569 = vmatpush1.msra.mxu0 0.0
    %5570 = vmatprep.subr.mxu0 0.0
    %5571 = vmatpush1.msra.mxu0 0.0
    %5572 = vmatprep.subr.mxu0 0.0
    %5573 = vmatpush1.msra.mxu0 0.0
    %5574 = vmatprep.subr.mxu0 0.0
    %5575 = vmatpush1.msra.mxu0 0.0
    %5576 = vmatprep.subr.mxu0 0.0
    %5577 = vmatpush1.msra.mxu0 0.0
    %5578 = vmatprep.subr.mxu0 0.0
    %5579 = vmatpush1.msra.mxu0 0.0
    %5580 = vmatprep.subr.mxu0 0.0
    %5581 = vmatpush1.msra.mxu0 0.0
    %5582 = vmatprep.subr.mxu0 0.0
    %5583 = vmatpush1.msra.mxu0 0.0
    %5584 = vmatprep.subr.mxu0 0.0
    %5585 = vmatpush1.msra.mxu0 0.0
    %5586 = vmatprep.subr.mxu0 0.0
    %5587 = vmatpush1.msra.mxu0 0.0
    %5588 = vmatprep.subr.mxu0 0.0
    %5589 = vmatpush1.msra.mxu0 0.0
    %5590 = vmatprep.subr.mxu0 0.0
    %5591 = vmatpush1.msra.mxu0 0.0
    %5592 = vmatprep.subr.mxu0 0.0
    %5593 = vmatpush1.msra.mxu0 0.0
    %5594 = vmatprep.mubr.f32.mxu0 0.0
    %5595 = vmatmul.mubr.f32.gmra.mrb[0].mxu0 %v5525
    %v5596 = vpop.f32.mrb[0].mxu0
    %v5597 = vadd.f32 %v5523, %v5596
    %v5598 = vpop.f32.mrb[0].mxu0
    %5599 = vmatprep.mubr.f32.mxu0 0.0
    %5600 = vmatmul.mubr.f32.gmra.mrb[0].mxu0 %v5528
    %v5601 = vpop.f32.mrb[0].mxu0
    %v5602 = vadd.f32 %v5523, %v5601
    %v5603 = vpop.f32.mrb[0].mxu0
    %5604 = vdwg.mxu0
    %v5605 = vmax.f32 %v5597, 0.0
    %v5606 = vmax.f32 %v5602, 0.0
    %s5607 = scalar_lea.vmem [#allocation2], 384
    %v5608 = vld [vmem:[%s5607] sm:$0xff]
    %v5609 = vld [vmem:[%s5607 + $0x8] sm:$0xff]
    %v5610 = vld [vmem:[%s5607 + $0x10] sm:$0xff]
    %v5611 = vld [vmem:[%s5607 + $0x18] sm:$0xff]
    %v5612 = vld [vmem:[%s5607 + $0x20] sm:$0xff]
    %v5613 = vld [vmem:[%s5607 + $0x28] sm:$0xff]
    %v5614 = vld [vmem:[%s5607 + $0x30] sm:$0xff]
    %v5615 = vld [vmem:[%s5607 + $0x38] sm:$0xff]
    %v5616 = vlaneseq
    %v5617 = vshrl.u32 %v5616, 7
    %v5618 = vsub.s32 6, %v5617
    %v5619 = vrot.slane %v34, %v5618
    %v5621 = vsel %vm61, %v5605, 0
    %v5624 = vsel %vm61, %v5606, 0
    %5626 = vmatprep.subr.mxu0 0.0
    %5627 = vmatpush1.msra.mxu0 %v5608
    %5628 = vmatprep.subr.mxu0 0.0
    %5629 = vmatpush1.msra.mxu0 %v5609
    %5630 = vmatprep.subr.mxu0 0.0
    %5631 = vmatpush1.msra.mxu0 %v5610
    %5632 = vmatprep.subr.mxu0 0.0
    %5633 = vmatpush1.msra.mxu0 %v5611
    %5634 = vmatprep.subr.mxu0 0.0
    %5635 = vmatpush1.msra.mxu0 %v5612
    %5636 = vmatprep.subr.mxu0 0.0
    %5637 = vmatpush1.msra.mxu0 %v5613
    %5638 = vmatprep.subr.mxu0 0.0
    %5639 = vmatpush1.msra.mxu0 %v5614
    %5640 = vmatprep.subr.mxu0 0.0
    %5641 = vmatpush1.msra.mxu0 %v5615
    %5642 = vmatprep.subr.mxu0 0.0
    %5643 = vmatpush1.msra.mxu0 0.0
    %5644 = vmatprep.subr.mxu0 0.0
    %5645 = vmatpush1.msra.mxu0 0.0
    %5646 = vmatprep.subr.mxu0 0.0
    %5647 = vmatpush1.msra.mxu0 0.0
    %5648 = vmatprep.subr.mxu0 0.0
    %5649 = vmatpush1.msra.mxu0 0.0
    %5650 = vmatprep.subr.mxu0 0.0
    %5651 = vmatpush1.msra.mxu0 0.0
    %5652 = vmatprep.subr.mxu0 0.0
    %5653 = vmatpush1.msra.mxu0 0.0
    %5654 = vmatprep.subr.mxu0 0.0
    %5655 = vmatpush1.msra.mxu0 0.0
    %5656 = vmatprep.subr.mxu0 0.0
    %5657 = vmatpush1.msra.mxu0 0.0
    %5658 = vmatprep.subr.mxu0 0.0
    %5659 = vmatpush1.msra.mxu0 0.0
    %5660 = vmatprep.subr.mxu0 0.0
    %5661 = vmatpush1.msra.mxu0 0.0
    %5662 = vmatprep.subr.mxu0 0.0
    %5663 = vmatpush1.msra.mxu0 0.0
    %5664 = vmatprep.subr.mxu0 0.0
    %5665 = vmatpush1.msra.mxu0 0.0
    %5666 = vmatprep.subr.mxu0 0.0
    %5667 = vmatpush1.msra.mxu0 0.0
    %5668 = vmatprep.subr.mxu0 0.0
    %5669 = vmatpush1.msra.mxu0 0.0
    %5670 = vmatprep.subr.mxu0 0.0
    %5671 = vmatpush1.msra.mxu0 0.0
    %5672 = vmatprep.subr.mxu0 0.0
    %5673 = vmatpush1.msra.mxu0 0.0
    %5674 = vmatprep.subr.mxu0 0.0
    %5675 = vmatpush1.msra.mxu0 0.0
    %5676 = vmatprep.subr.mxu0 0.0
    %5677 = vmatpush1.msra.mxu0 0.0
    %5678 = vmatprep.subr.mxu0 0.0
    %5679 = vmatpush1.msra.mxu0 0.0
    %5680 = vmatprep.subr.mxu0 0.0
    %5681 = vmatpush1.msra.mxu0 0.0
    %5682 = vmatprep.subr.mxu0 0.0
    %5683 = vmatpush1.msra.mxu0 0.0
    %5684 = vmatprep.subr.mxu0 0.0
    %5685 = vmatpush1.msra.mxu0 0.0
    %5686 = vmatprep.subr.mxu0 0.0
    %5687 = vmatpush1.msra.mxu0 0.0
    %5688 = vmatprep.subr.mxu0 0.0
    %5689 = vmatpush1.msra.mxu0 0.0
    %5690 = vmatprep.mubr.f32.mxu0 0.0
    %5691 = vmatmul.mubr.f32.gmra.mrb[0].mxu0 %v5621
    %v5692 = vpop.f32.mrb[0].mxu0
    %v5693 = vadd.f32 %v5619, %v5692
    %v5694 = vpop.f32.mrb[0].mxu0
    %5695 = vmatprep.mubr.f32.mxu0 0.0
    %5696 = vmatmul.mubr.f32.gmra.mrb[0].mxu0 %v5624
    %v5697 = vpop.f32.mrb[0].mxu0
    %v5698 = vadd.f32 %v5619, %v5697
    %v5699 = vpop.f32.mrb[0].mxu0
    %5700 = vdwg.mxu0
    %v5701 = vadd.f32 %v5513, %v5693
    %v5702 = vadd.f32 %v5514, %v5698
    %v5703 = vsel %vm46, %v5701, 0.0
    %5704 = vadd.xlane.f32.xlu0 %v5703
    %v5705 = vpop.xlane.xlu0 %5704
    %v5706 = vsel %vm46, %v5702, 0.0
    %5707 = vadd.xlane.f32.xlu0 %v5706
    %v5708 = vpop.xlane.xlu0 %5707
    %v5709 = vmul.f32 %v5705, %v2710
    %v5710 = vmul.f32 %v5708, %v2710
    %v5711 = vsub.f32 %v5701, %v5709
    %v5712 = vsub.f32 %v5702, %v5710
    %v5713 = vmul.f32 %v5711, %v5711
    %v5714 = vmul.f32 %v5712, %v5712
    %v5715 = vsel %vm46, %v5713, 0.0
    %5716 = vadd.xlane.f32.xlu0 %v5715
    %v5717 = vpop.xlane.xlu0 %5716
    %v5718 = vsel %vm46, %v5714, 0.0
    %5719 = vadd.xlane.f32.xlu0 %v5718
    %v5720 = vpop.xlane.xlu0 %5719
    %v5721 = vmul.f32 %v5717, %v2710
    %v5722 = vmul.f32 %v5720, %v2710
    %v5723 = vadd.f32 %v5721, 1e-05
    %v5724 = vadd.f32 %v5722, 1e-05
    %v5725 = vrsqrt.pop %v5723
    %v5726 = vrsqrt.pop %v5724
    %v5727 = vmul.f32 %v5711, %v5725
    %v5728 = vmul.f32 %v5712, %v5726
    %v5729 = vlaneseq
    %v5730 = vshrl.u32 %v5729, 7
    %v5731 = vsub.s32 3, %v5730
    %v5732 = vrot.slane %v35, %v5731
    %v5733 = vmul.f32 %v5727, %v5732
    %v5734 = vmul.f32 %v5728, %v5732
    %v5735 = vlaneseq
    %v5736 = vshrl.u32 %v5735, 7
    %v5737 = vsub.s32 4, %v5736
    %v5738 = vrot.slane %v35, %v5737
    %v5739 = vadd.f32 %v5733, %v5738
    %v5740 = vadd.f32 %v5734, %v5738
    %5741 = vst.msk [vmem:[%s3] sm:$0xff] %vm46, %v5739
    %5742 = vst.msk [vmem:[%s3 + $0x8] sm:$0xff] %vm46, %v5740
    // Predicated region
    $region18: #{transformer_decoder_layer.1} parent=1 // pred_check
      _
    $region19: #{transformer_decoder_layer.1} parent=1 // pred_check_branch
      %5744 = sbr.rel (0) target = $region21
    $region20: #{transformer_decoder_layer.1} parent=1 // pred_region
      _
    $region21: #{transformer_decoder_layer.1} parent=1 // pred_fallthru
      _
    // Predicated region
    $region22: #{transformer_decoder_layer.1} parent=1 // pred_check
      _
    $region23: #{transformer_decoder_layer.1} parent=1 // pred_check_branch
      %5746 = sbr.rel (0) target = $region25
    $region24: #{transformer_decoder_layer.1} parent=1 // pred_region
      _
    $region25: #{transformer_decoder_layer.1} parent=1 // pred_fallthru
      _
    %5747 = vsyncpa [#allocation3], 1

</llo_original>
